<compile_context>
chip_gen: v7x
topology: tpu7x:2x2x1
jax: 0.10.0
libtpu: 0.0.40
codegen_flags: <defaults>
</compile_context>

<pallas_src>
import functools

import jax
import jax.numpy as jnp
from jax.experimental import pallas as pl
from jax.experimental.pallas import tpu as pltpu


_COMPUTE_DTYPE = jnp.bfloat16          # MXU inputs; accumulation stays f32
_ROW_TILE = 256                        # rows per block for (B*S, D) slabs
_COL_TILE = 512                        # output-column tile (multiple of 128 -> lane dense)
_K_TILE = 512                          # contraction tile (must divide exactly)
_KV_TILE = 512                         # attention key/value tile
_VMEM_LIMIT = 32 * 1024 * 1024         # explicit scoped-VMEM budget (safe on v5e/v6e/v7x)
_NEG_INF = -1e9


def _cparams(*semantics):
    return pltpu.CompilerParams(dimension_semantics=semantics,
                                vmem_limit_bytes=_VMEM_LIMIT)


def _row_tile(n):
    # ragged row blocks are fine (OOB stores are dropped)
    return min(n, _ROW_TILE)


def _col_tile(n):
    # last-dim blocks must be a multiple of 128 or the full dim; ragged cols are fine
    return n if n <= _COL_TILE else _COL_TILE


def _contract_tile(n, tile):
    # contraction tiles must divide exactly (partial blocks would pollute the accumulator)
    if n <= tile or n % tile != 0:
        return n
    return tile


# ----------------------------- Pallas kernels -----------------------------

def _linear_kernel(x_ref, w_ref, b_ref, o_ref, acc_ref):
    k = pl.program_id(2)

    @pl.when(k == 0)
    def _init():
        acc_ref[...] = jnp.zeros_like(acc_ref)

    acc_ref[...] += jnp.dot(x_ref[...], w_ref[...],
                            preferred_element_type=jnp.float32)

    @pl.when(k == pl.num_programs(2) - 1)
    def _finalize():
        o_ref[...] = (acc_ref[...] + b_ref[...]).astype(o_ref.dtype)


def linear(x, w, b, out_dtype=None):
    """x: (N, Din) @ w: (Din, Dout) + b: (Dout,), tiled over rows / cols / K."""
    n, din = x.shape
    dout = w.shape[1]
    out_dtype = out_dtype or _COMPUTE_DTYPE
    tm, tn, tk = _row_tile(n), _col_tile(dout), _contract_tile(din, _K_TILE)
    grid = (pl.cdiv(n, tm), pl.cdiv(dout, tn), din // tk)
    return pl.pallas_call(
        _linear_kernel,
        out_shape=jax.ShapeDtypeStruct((n, dout), out_dtype),
        grid=grid,
        in_specs=[
            pl.BlockSpec((tm, tk), lambda i, j, k: (i, k)),
            pl.BlockSpec((tk, tn), lambda i, j, k: (k, j)),
            pl.BlockSpec((1, tn), lambda i, j, k: (0, j)),
        ],
        out_specs=pl.BlockSpec((tm, tn), lambda i, j, k: (i, j)),
        scratch_shapes=[pltpu.VMEM((tm, tn), jnp.float32)],
        compiler_params=_cparams("parallel", "parallel", "arbitrary"),
    )(x.astype(_COMPUTE_DTYPE), w, b.reshape(1, dout).astype(jnp.float32))


def _ffn_kernel(x_ref, w1_ref, b1_ref, w2_ref, b2_ref, o_ref, acc_ref):
    f = pl.program_id(1)

    @pl.when(f == 0)
    def _init():
        acc_ref[...] = jnp.zeros_like(acc_ref)

    h = jnp.dot(x_ref[...], w1_ref[...],
                preferred_element_type=jnp.float32) + b1_ref[...]
    h = jnp.maximum(h, 0.0)
    acc_ref[...] += jnp.dot(h.astype(w2_ref.dtype), w2_ref[...],
                            preferred_element_type=jnp.float32)

    @pl.when(f == pl.num_programs(1) - 1)
    def _finalize():
        o_ref[...] = (acc_ref[...] + b2_ref[...]).astype(o_ref.dtype)


def ffn(x, w1, b1, w2, b2):
    """relu(x @ w1 + b1) @ w2 + b2, fused; rows and the Dff dim are tiled."""
    n, d = x.shape
    dff = w1.shape[1]
    tm = _row_tile(n)
    tf = _contract_tile(dff, _K_TILE)
    grid = (pl.cdiv(n, tm), dff // tf)
    return pl.pallas_call(
        _ffn_kernel,
        out_shape=jax.ShapeDtypeStruct((n, d), _COMPUTE_DTYPE),
        grid=grid,
        in_specs=[
            pl.BlockSpec((tm, d), lambda i, f: (i, 0)),
            pl.BlockSpec((d, tf), lambda i, f: (0, f)),
            pl.BlockSpec((1, tf), lambda i, f: (0, f)),
            pl.BlockSpec((tf, d), lambda i, f: (f, 0)),
            pl.BlockSpec((1, d), lambda i, f: (0, 0)),
        ],
        out_specs=pl.BlockSpec((tm, d), lambda i, f: (i, 0)),
        scratch_shapes=[pltpu.VMEM((tm, d), jnp.float32)],
        compiler_params=_cparams("parallel", "arbitrary"),
    )(x.astype(_COMPUTE_DTYPE), w1, b1.reshape(1, dff).astype(jnp.float32),
      w2, b2.reshape(1, d).astype(jnp.float32))


def _add_ln_kernel(x_ref, y_ref, g_ref, b_ref, o_ref):
    # residual add fused into the layernorm; statistics computed in f32
    x = x_ref[...].astype(jnp.float32) + y_ref[...].astype(jnp.float32)
    mu = jnp.mean(x, axis=-1, keepdims=True)
    var = jnp.mean(jnp.square(x - mu), axis=-1, keepdims=True)
    inv = jax.lax.rsqrt(var + 1e-5)
    o_ref[...] = ((x - mu) * inv * g_ref[...] + b_ref[...]).astype(o_ref.dtype)


def add_layernorm(x, y, g, b):
    """LayerNorm(x + y) over the last dim, row-tiled."""
    n, d = x.shape
    tm = _row_tile(n)
    return pl.pallas_call(
        _add_ln_kernel,
        out_shape=jax.ShapeDtypeStruct((n, d), _COMPUTE_DTYPE),
        grid=(pl.cdiv(n, tm),),
        in_specs=[
            pl.BlockSpec((tm, d), lambda i: (i, 0)),
            pl.BlockSpec((tm, d), lambda i: (i, 0)),
            pl.BlockSpec((1, d), lambda i: (0, 0)),
            pl.BlockSpec((1, d), lambda i: (0, 0)),
        ],
        out_specs=pl.BlockSpec((tm, d), lambda i: (i, 0)),
        compiler_params=_cparams("parallel"),
    )(x, y, g.reshape(1, d).astype(jnp.float32), b.reshape(1, d).astype(jnp.float32))


def _attn_kernel(q_ref, k_ref, v_ref, kbias_ref, o_ref, m_sc, l_sc, acc_sc,
                 *, num_head, scale, causal):
    kv = pl.program_id(1)
    sq = q_ref.shape[1]
    d = q_ref.shape[2]
    tk = k_ref.shape[1]
    dh = d // num_head

    @pl.when(kv == 0)
    def _init():
        m_sc[...] = jnp.full_like(m_sc, -jnp.inf)
        l_sc[...] = jnp.zeros_like(l_sc)
        acc_sc[...] = jnp.zeros_like(acc_sc)

    q = q_ref[0]                                   # (Sq, D)  bf16, heads fused on lanes
    k = k_ref[0]                                   # (TK, D)
    v = v_ref[0]                                   # (TK, D)
    bias = kbias_ref[0].astype(jnp.float32)        # (1, TK) additive key-padding bias
    if causal:
        row = jax.lax.broadcasted_iota(jnp.int32, (sq, tk), 0)
        col = jax.lax.broadcasted_iota(jnp.int32, (sq, tk), 1) + kv * tk
        bias = bias + jnp.where(col > row, _NEG_INF, 0.0).astype(jnp.float32)

    for h in range(num_head):                      # static unroll; heads stay in VMEM
        qh = q[:, h * dh:(h + 1) * dh]
        kh = k[:, h * dh:(h + 1) * dh]
        vh = v[:, h * dh:(h + 1) * dh]
        # q @ k^T without an explicit transpose: contract the dh axis of both operands
        s = jax.lax.dot_general(qh, kh, (((1,), (1,)), ((), ())),
                                preferred_element_type=jnp.float32) * scale
        s = s + bias
        m_prev = m_sc[h]
        m_new = jnp.maximum(m_prev, jnp.max(s, axis=-1, keepdims=True))
        alpha = jnp.exp(m_prev - m_new)
        p = jnp.exp(s - m_new)                     # unnormalized; normalize at the end
        l_sc[h] = alpha * l_sc[h] + jnp.sum(p, axis=-1, keepdims=True)
        acc_sc[h] = alpha * acc_sc[h] + jnp.dot(p.astype(vh.dtype), vh,
                                                preferred_element_type=jnp.float32)
        m_sc[h] = m_new

    @pl.when(kv == pl.num_programs(1) - 1)
    def _finalize():
        outs = [acc_sc[h] * pl.reciprocal(l_sc[h], approx=True)
                for h in range(num_head)]
        # lane-dense (Sq, D) store with all heads concatenated back along D
        o_ref[0] = jnp.concatenate(outs, axis=-1).astype(o_ref.dtype)


def mha_attention(q, k, v, kbias, num_head, causal):
    """q/k/v: (B, S, D) with heads packed along D; kbias: (B, 1, Sk) additive mask."""
    b, sq, d = q.shape
    sk = k.shape[1]
    dh = d // num_head
    tk = _contract_tile(sk, _KV_TILE)
    grid = (b, sk // tk)
    kern = functools.partial(_attn_kernel, num_head=num_head,
                             scale=float(dh) ** -0.5, causal=causal)
    # TODO(synk): for very long Sq also tile the query axis (Sq is kept whole per block).
    return pl.pallas_call(
        kern,
        out_shape=jax.ShapeDtypeStruct((b, sq, d), q.dtype),
        grid=grid,
        in_specs=[
            pl.BlockSpec((1, sq, d), lambda i, j: (i, 0, 0)),
            pl.BlockSpec((1, tk, d), lambda i, j: (i, j, 0)),
            pl.BlockSpec((1, tk, d), lambda i, j: (i, j, 0)),
            pl.BlockSpec((1, 1, tk), lambda i, j: (i, 0, j)),
        ],
        out_specs=pl.BlockSpec((1, sq, d), lambda i, j: (i, 0, 0)),
        scratch_shapes=[
            pltpu.VMEM((num_head, sq, 1), jnp.float32),   # running max
            pltpu.VMEM((num_head, sq, 1), jnp.float32),   # running sum
            pltpu.VMEM((num_head, sq, dh), jnp.float32),  # running output
        ],
        compiler_params=_cparams("parallel", "arbitrary"),
    )(q, k, v, kbias.astype(jnp.float32))


# --------------------------- model building blocks -------------------------

def self_attention_block(x, kbias, p, num_head, causal):
    b, s, d = x.shape
    qkv = linear(x.reshape(b * s, d), p['w_qkv'], p['b_qkv']).reshape(b, s, 3 * d)
    q, k, v = qkv[..., :d], qkv[..., d:2 * d], qkv[..., 2 * d:]
    o = mha_attention(q, k, v, kbias, num_head, causal)
    return linear(o.reshape(b * s, d), p['wo'], p['bo']).reshape(b, s, d)


def cross_attention_block(x_q, x_kv, kbias, p, num_head):
    b, sq, d = x_q.shape
    sk = x_kv.shape[1]
    q = linear(x_q.reshape(b * sq, d), p['wq'], p['bq']).reshape(b, sq, d)
    kvp = linear(x_kv.reshape(b * sk, d), p['w_kv'], p['b_kv']).reshape(b, sk, 2 * d)
    k, v = kvp[..., :d], kvp[..., d:]
    o = mha_attention(q, k, v, kbias, num_head, causal=False)
    return linear(o.reshape(b * sq, d), p['wo'], p['bo']).reshape(b, sq, d)


def encoder_layer(x, src_kbias, p, num_head):
    b, s, d = x.shape
    a = self_attention_block(x, src_kbias, p['attn'], num_head, causal=False)
    x = add_layernorm(x.reshape(b * s, d), a.reshape(b * s, d),
                      p['ln1_g'], p['ln1_b']).reshape(b, s, d)
    f = ffn(x.reshape(b * s, d), p['ffn_w1'], p['ffn_b1'],
            p['ffn_w2'], p['ffn_b2']).reshape(b, s, d)
    x = add_layernorm(x.reshape(b * s, d), f.reshape(b * s, d),
                      p['ln2_g'], p['ln2_b']).reshape(b, s, d)
    return x


def decoder_layer(y, enc_out, zero_kbias, src_kbias, p, num_head):
    b, t, d = y.shape
    a = self_attention_block(y, zero_kbias, p['self_attn'], num_head, causal=True)
    y = add_layernorm(y.reshape(b * t, d), a.reshape(b * t, d),
                      p['ln1_g'], p['ln1_b']).reshape(b, t, d)
    c = cross_attention_block(y, enc_out, src_kbias, p['cross_attn'], num_head)
    y = add_layernorm(y.reshape(b * t, d), c.reshape(b * t, d),
                      p['ln2_g'], p['ln2_b']).reshape(b, t, d)
    f = ffn(y.reshape(b * t, d), p['ffn_w1'], p['ffn_b1'],
            p['ffn_w2'], p['ffn_b2']).reshape(b, t, d)
    y = add_layernorm(y.reshape(b * t, d), f.reshape(b * t, d),
                      p['ln3_g'], p['ln3_b']).reshape(b, t, d)
    return y


def positional_encoding(max_len, d):
    pos = jnp.arange(max_len, dtype=jnp.float32)[:, None]
    i = jnp.arange(d)[None, :]
    angle = pos / jnp.power(10000.0, (2 * (i // 2)).astype(jnp.float32) / d)
    return jnp.where(i % 2 == 0, jnp.sin(angle), jnp.cos(angle)).astype(jnp.float32)


def transformer_forward(params, src_ids, tgt_ids, num_head):
    """Matches Transformer.forward: padding mask from src==0, causal mask on tgt,
    Encoder(src, src_mask) -> Decoder(tgt, enc_out, src_mask, ahead_mask) -> logits.
    Masks are additive (B, 1, Sk) key vectors consumed in-kernel (the (B,1,Sq,Sk)
    mask is never materialized in HBM; the causal mask is generated from iota)."""
    b, ss = src_ids.shape
    tt = tgt_ids.shape[1]
    d = params['enc_embed'].shape[1]

    src_kbias = jnp.where(src_ids == 0, _NEG_INF, 0.0).astype(jnp.float32).reshape(b, 1, ss)
    tgt_zero_kbias = jnp.zeros((b, 1, tt), jnp.float32)   # decoder self-attn: causal only

    # ---- Encoder ----
    x = jnp.take(params['enc_embed'], src_ids, axis=0) * (float(d) ** 0.5)
    x = (x + params['pos_enc'][:ss][None]).astype(_COMPUTE_DTYPE)
    for lp in params['enc_layers']:
        x = encoder_layer(x, src_kbias, lp, num_head)
    enc_out = x

    # ---- Decoder ----
    y = jnp.take(params['dec_embed'], tgt_ids, axis=0) * (float(d) ** 0.5)
    y = (y + params['pos_enc'][:tt][None]).astype(_COMPUTE_DTYPE)
    for lp in params['dec_layers']:
        y = decoder_layer(y, enc_out, tgt_zero_kbias, src_kbias, lp, num_head)

    logits = linear(y.reshape(b * tt, d), params['out_w'], params['out_b'],
                    out_dtype=jnp.float32)
    return logits.reshape(b, tt, -1)


# ------------------------------ param init ---------------------------------

def init_params(key, src_vocab, tgt_vocab, n_enc, n_dec, d, dff, max_len):
    keys = iter(jax.random.split(key, 512))

    def dense(din, dout):
        w = jax.random.normal(next(keys), (din, dout), jnp.float32) * 0.02
        return w.astype(_COMPUTE_DTYPE), jnp.zeros((dout,), jnp.float32)

    def self_attn_p():
        wq, bq = dense(d, d)
        wk, bk = dense(d, d)
        wv, bv = dense(d, d)
        wo, bo = dense(d, d)
        return {'w_qkv': jnp.concatenate([wq, wk, wv], axis=1),
                'b_qkv': jnp.concatenate([bq, bk, bv]),
                'wo': wo, 'bo': bo}

    def cross_attn_p():
        wq, bq = dense(d, d)
        wk, bk = dense(d, d)
        wv, bv = dense(d, d)
        wo, bo = dense(d, d)
        return {'wq': wq, 'bq': bq,
                'w_kv': jnp.concatenate([wk, wv], axis=1),
                'b_kv': jnp.concatenate([bk, bv]),
                'wo': wo, 'bo': bo}

    def enc_layer_p():
        w1, b1 = dense(d, dff)
        w2, b2 = dense(dff, d)
        return {'attn': self_attn_p(),
                'ln1_g': jnp.ones(d, jnp.float32), 'ln1_b': jnp.zeros(d, jnp.float32),
                'ffn_w1': w1, 'ffn_b1': b1, 'ffn_w2': w2, 'ffn_b2': b2,
                'ln2_g': jnp.ones(d, jnp.float32), 'ln2_b': jnp.zeros(d, jnp.float32)}

    def dec_layer_p():
        w1, b1 = dense(d, dff)
        w2, b2 = dense(dff, d)
        return {'self_attn': self_attn_p(), 'cross_attn': cross_attn_p(),
                'ln1_g': jnp.ones(d, jnp.float32), 'ln1_b': jnp.zeros(d, jnp.float32),
                'ln2_g': jnp.ones(d, jnp.float32), 'ln2_b': jnp.zeros(d, jnp.float32),
                'ffn_w1': w1, 'ffn_b1': b1, 'ffn_w2': w2, 'ffn_b2': b2,
                'ln3_g': jnp.ones(d, jnp.float32), 'ln3_b': jnp.zeros(d, jnp.float32)}

    out_w, out_b = dense(d, tgt_vocab)
    return {
        'enc_embed': jax.random.normal(next(keys), (src_vocab, d), jnp.float32) * 0.02,
        'dec_embed': jax.random.normal(next(keys), (tgt_vocab, d), jnp.float32) * 0.02,
        'pos_enc': positional_encoding(max_len, d),
        'enc_layers': [enc_layer_p() for _ in range(n_enc)],
        'dec_layers': [dec_layer_p() for _ in range(n_dec)],
        'out_w': out_w, 'out_b': out_b,
    }


# --------------------------------- main -------------------------------------

if __name__ == "__main__":
    # small config consistent with the module's constructor signature
    SRC_VOCAB, TGT_VOCAB = 16, 16
    N_ENC, N_DEC = 2, 2
    HIDDEN, FEEDBACK, NUM_HEAD = 32, 64, 4
    B, SRC_SEQ, TGT_SEQ = 2, 8, 8
    # TODO(synk): dropout omitted (inference-mode forward, dropout is a no-op at eval).

    key = jax.random.PRNGKey(0)
    pkey, skey, tkey = jax.random.split(key, 3)
    params = init_params(pkey, SRC_VOCAB, TGT_VOCAB, N_ENC, N_DEC,
                         HIDDEN, FEEDBACK, max_len=64)

    src_ids = jax.random.randint(skey, (B, SRC_SEQ), 0, SRC_VOCAB, dtype=jnp.int32)
    tgt_ids = jax.random.randint(tkey, (B, TGT_SEQ), 0, TGT_VOCAB, dtype=jnp.int32)
    # force some padding (id 0) so the padding mask actually does something
    src_ids = src_ids.at[:, -2:].set(0)

    fwd = jax.jit(functools.partial(transformer_forward, num_head=NUM_HEAD))
    out = fwd(params, src_ids, tgt_ids)
    jax.block_until_ready(out)
    assert out.shape == (B, TGT_SEQ, TGT_VOCAB), out.shape
    assert jnp.all(jnp.isfinite(out))
    print("KERNEL_OK")
</pallas_src>

<mosaic_0001>
module attributes {stable_mosaic.version = 11 : i64} {
  func.func @_linear_kernel(%arg0: i32, %arg1: i32, %arg2: i32, %arg3: memref<16x32xbf16, #tpu.memory_space<vmem>>, %arg4: memref<32x96xbf16, #tpu.memory_space<vmem>>, %arg5: memref<1x96xf32, #tpu.memory_space<vmem>>, %arg6: memref<16x96xbf16, #tpu.memory_space<vmem>>, %arg7: memref<16x96xf32, #tpu.memory_space<vmem>>) attributes {dimension_semantics = [#tpu.dimension_semantics<parallel>, #tpu.dimension_semantics<parallel>, #tpu.dimension_semantics<arbitrary>], iteration_bounds = array<i64: 1, 1, 1>, scalar_prefetch = 0 : i64, scratch_operands = 1 : i64, tpu.core_type = #tpu.core_type<tc>, window_params = [{transform_indices = @transform_0, window_bounds = array<i64: 16, 32>}, {transform_indices = @transform_1, window_bounds = array<i64: 32, 96>}, {transform_indices = @transform_2, window_bounds = array<i64: 1, 96>}, {transform_indices = @transform_3, window_bounds = array<i64: 16, 96>}]} {
    %c0_i32 = arith.constant 0 : i32
    %0 = arith.cmpi eq, %arg2, %c0_i32 : i32
    %1 = arith.extui %0 : i1 to i32
    %c0_i32_0 = arith.constant 0 : i32
    %2 = arith.cmpi ne, %1, %c0_i32_0 : i32
    scf.if %2 {
      %cst_10 = arith.constant 0.000000e+00 : f32
      %12 = vector.broadcast %cst_10 : f32 to vector<16x96xf32>
      %c0_11 = arith.constant 0 : index
      %c0_12 = arith.constant 0 : index
      %13 = vector.load %arg7[%c0_11, %c0_12] : memref<16x96xf32, #tpu.memory_space<vmem>>, vector<16x96xf32>
      tpu.vector_store %arg7[%c0_11, %c0_12], %12 {strides = array<i32>} : memref<16x96xf32, #tpu.memory_space<vmem>>, vector<16x96xf32>,
    } else {
    }
    %c0 = arith.constant 0 : index
    %c0_1 = arith.constant 0 : index
    %3 = vector.load %arg7[%c0, %c0_1] : memref<16x96xf32, #tpu.memory_space<vmem>>, vector<16x96xf32>
    %c0_2 = arith.constant 0 : index
    %c0_3 = arith.constant 0 : index
    %4 = vector.load %arg3[%c0_2, %c0_3] : memref<16x32xbf16, #tpu.memory_space<vmem>>, vector<16x32xbf16>
    %c0_4 = arith.constant 0 : index
    %c0_5 = arith.constant 0 : index
    %5 = vector.load %arg4[%c0_4, %c0_5] : memref<32x96xbf16, #tpu.memory_space<vmem>>, vector<32x96xbf16>
    %cst = arith.constant dense<0.000000e+00> : vector<16x96xf32>
    %6 = tpu.matmul %4, %5, %cst {dimension_numbers = #tpu.dot_dimension_numbers<[1], [0], [0], [1], [0, 0, 1, 1], [], []>} : vector<16x32xbf16>, vector<32x96xbf16>, vector<16x96xf32> -> vector<16x96xf32>
    %7 = arith.addf %3, %6 : vector<16x96xf32>
    %c0_6 = arith.constant 0 : index
    %c0_7 = arith.constant 0 : index
    %8 = vector.load %arg7[%c0_6, %c0_7] : memref<16x96xf32, #tpu.memory_space<vmem>>, vector<16x96xf32>
    tpu.vector_store %arg7[%c0_6, %c0_7], %7 {strides = array<i32>} : memref<16x96xf32, #tpu.memory_space<vmem>>, vector<16x96xf32>,
    %c0_i32_8 = arith.constant 0 : i32
    %9 = arith.cmpi eq, %arg2, %c0_i32_8 : i32
    %10 = arith.extui %9 : i1 to i32
    %c0_i32_9 = arith.constant 0 : i32
    %11 = arith.cmpi ne, %10, %c0_i32_9 : i32
    scf.if %11 {
      %c0_10 = arith.constant 0 : index
      %c0_11 = arith.constant 0 : index
      %12 = vector.load %arg7[%c0_10, %c0_11] : memref<16x96xf32, #tpu.memory_space<vmem>>, vector<16x96xf32>
      %c0_12 = arith.constant 0 : index
      %c0_13 = arith.constant 0 : index
      %13 = vector.load %arg5[%c0_12, %c0_13] : memref<1x96xf32, #tpu.memory_space<vmem>>, vector<1x96xf32>
      %14 = vector.broadcast %13 : vector<1x96xf32> to vector<16x96xf32>
      %15 = arith.addf %12, %14 : vector<16x96xf32>
      %16 = arith.truncf %15 : vector<16x96xf32> to vector<16x96xbf16>
      %c0_14 = arith.constant 0 : index
      %c0_15 = arith.constant 0 : index
      %17 = vector.load %arg6[%c0_14, %c0_15] : memref<16x96xbf16, #tpu.memory_space<vmem>>, vector<16x96xbf16>
      tpu.vector_store %arg6[%c0_14, %c0_15], %16 {strides = array<i32>} : memref<16x96xbf16, #tpu.memory_space<vmem>>, vector<16x96xbf16>,
    } else {
    }
    return
  }
  func.func @transform_0(%arg0: i32, %arg1: i32, %arg2: i32) -> (i32, i32) {
    %c0_i32 = arith.constant 0 : i32
    return %arg0, %arg2 : i32, i32
  }
  func.func @transform_1(%arg0: i32, %arg1: i32, %arg2: i32) -> (i32, i32) {
    %c0_i32 = arith.constant 0 : i32
    return %arg2, %arg1 : i32, i32
  }
  func.func @transform_2(%arg0: i32, %arg1: i32, %arg2: i32) -> (i32, i32) {
    %c0_i32 = arith.constant 0 : i32
    %c0_i32_0 = arith.constant 0 : i32
    return %c0_i32, %arg1 : i32, i32
  }
  func.func @transform_3(%arg0: i32, %arg1: i32, %arg2: i32) -> (i32, i32) {
    %c0_i32 = arith.constant 0 : i32
    return %arg0, %arg1 : i32, i32
  }
}

module attributes {stable_mosaic.version = 11 : i64} {
  func.func @_linear_kernel(%arg0: i32, %arg1: i32, %arg2: i32, %arg3: memref<16x32xbf16, #tpu.memory_space<vmem>>, %arg4: memref<32x32xbf16, #tpu.memory_space<vmem>>, %arg5: memref<1x32xf32, #tpu.memory_space<vmem>>, %arg6: memref<16x32xbf16, #tpu.memory_space<vmem>>, %arg7: memref<16x32xf32, #tpu.memory_space<vmem>>) attributes {dimension_semantics = [#tpu.dimension_semantics<parallel>, #tpu.dimension_semantics<parallel>, #tpu.dimension_semantics<arbitrary>], iteration_bounds = array<i64: 1, 1, 1>, scalar_prefetch = 0 : i64, scratch_operands = 1 : i64, tpu.core_type = #tpu.core_type<tc>, window_params = [{transform_indices = @transform_0, window_bounds = array<i64: 16, 32>}, {transform_indices = @transform_1, window_bounds = array<i64: 32, 32>}, {transform_indices = @transform_2, window_bounds = array<i64: 1, 32>}, {transform_indices = @transform_3, window_bounds = array<i64: 16, 32>}]} {
    %c0_i32 = arith.constant 0 : i32
    %0 = arith.cmpi eq, %arg2, %c0_i32 : i32
    %1 = arith.extui %0 : i1 to i32
    %c0_i32_0 = arith.constant 0 : i32
    %2 = arith.cmpi ne, %1, %c0_i32_0 : i32
    scf.if %2 {
      %cst_10 = arith.constant 0.000000e+00 : f32
      %12 = vector.broadcast %cst_10 : f32 to vector<16x32xf32>
      %c0_11 = arith.constant 0 : index
      %c0_12 = arith.constant 0 : index
      %13 = vector.load %arg7[%c0_11, %c0_12] : memref<16x32xf32, #tpu.memory_space<vmem>>, vector<16x32xf32>
      tpu.vector_store %arg7[%c0_11, %c0_12], %12 {strides = array<i32>} : memref<16x32xf32, #tpu.memory_space<vmem>>, vector<16x32xf32>,
    } else {
    }
    %c0 = arith.constant 0 : index
    %c0_1 = arith.constant 0 : index
    %3 = vector.load %arg7[%c0, %c0_1] : memref<16x32xf32, #tpu.memory_space<vmem>>, vector<16x32xf32>
    %c0_2 = arith.constant 0 : index
    %c0_3 = arith.constant 0 : index
    %4 = vector.load %arg3[%c0_2, %c0_3] : memref<16x32xbf16, #tpu.memory_space<vmem>>, vector<16x32xbf16>
    %c0_4 = arith.constant 0 : index
    %c0_5 = arith.constant 0 : index
    %5 = vector.load %arg4[%c0_4, %c0_5] : memref<32x32xbf16, #tpu.memory_space<vmem>>, vector<32x32xbf16>
    %cst = arith.constant dense<0.000000e+00> : vector<16x32xf32>
    %6 = tpu.matmul %4, %5, %cst {dimension_numbers = #tpu.dot_dimension_numbers<[1], [0], [0], [1], [0, 0, 1, 1], [], []>} : vector<16x32xbf16>, vector<32x32xbf16>, vector<16x32xf32> -> vector<16x32xf32>
    %7 = arith.addf %3, %6 : vector<16x32xf32>
    %c0_6 = arith.constant 0 : index
    %c0_7 = arith.constant 0 : index
    %8 = vector.load %arg7[%c0_6, %c0_7] : memref<16x32xf32, #tpu.memory_space<vmem>>, vector<16x32xf32>
    tpu.vector_store %arg7[%c0_6, %c0_7], %7 {strides = array<i32>} : memref<16x32xf32, #tpu.memory_space<vmem>>, vector<16x32xf32>,
    %c0_i32_8 = arith.constant 0 : i32
    %9 = arith.cmpi eq, %arg2, %c0_i32_8 : i32
    %10 = arith.extui %9 : i1 to i32
    %c0_i32_9 = arith.constant 0 : i32
    %11 = arith.cmpi ne, %10, %c0_i32_9 : i32
    scf.if %11 {
      %c0_10 = arith.constant 0 : index
      %c0_11 = arith.constant 0 : index
      %12 = vector.load %arg7[%c0_10, %c0_11] : memref<16x32xf32, #tpu.memory_space<vmem>>, vector<16x32xf32>
      %c0_12 = arith.constant 0 : index
      %c0_13 = arith.constant 0 : index
      %13 = vector.load %arg5[%c0_12, %c0_13] : memref<1x32xf32, #tpu.memory_space<vmem>>, vector<1x32xf32>
      %14 = vector.broadcast %13 : vector<1x32xf32> to vector<16x32xf32>
      %15 = arith.addf %12, %14 : vector<16x32xf32>
      %16 = arith.truncf %15 : vector<16x32xf32> to vector<16x32xbf16>
      %c0_14 = arith.constant 0 : index
      %c0_15 = arith.constant 0 : index
      %17 = vector.load %arg6[%c0_14, %c0_15] : memref<16x32xbf16, #tpu.memory_space<vmem>>, vector<16x32xbf16>
      tpu.vector_store %arg6[%c0_14, %c0_15], %16 {strides = array<i32>} : memref<16x32xbf16, #tpu.memory_space<vmem>>, vector<16x32xbf16>,
    } else {
    }
    return
  }
  func.func @transform_0(%arg0: i32, %arg1: i32, %arg2: i32) -> (i32, i32) {
    %c0_i32 = arith.constant 0 : i32
    return %arg0, %arg2 : i32, i32
  }
  func.func @transform_1(%arg0: i32, %arg1: i32, %arg2: i32) -> (i32, i32) {
    %c0_i32 = arith.constant 0 : i32
    return %arg2, %arg1 : i32, i32
  }
  func.func @transform_2(%arg0: i32, %arg1: i32, %arg2: i32) -> (i32, i32) {
    %c0_i32 = arith.constant 0 : i32
    %c0_i32_0 = arith.constant 0 : i32
    return %c0_i32, %arg1 : i32, i32
  }
  func.func @transform_3(%arg0: i32, %arg1: i32, %arg2: i32) -> (i32, i32) {
    %c0_i32 = arith.constant 0 : i32
    return %arg0, %arg1 : i32, i32
  }
}

module attributes {stable_mosaic.version = 11 : i64} {
  func.func @_attn_kernel(%arg0: i32, %arg1: i32, %arg2: memref<1x8x32xbf16, #tpu.memory_space<vmem>>, %arg3: memref<1x8x32xbf16, #tpu.memory_space<vmem>>, %arg4: memref<1x8x32xbf16, #tpu.memory_space<vmem>>, %arg5: memref<1x1x8xf32, #tpu.memory_space<vmem>>, %arg6: memref<1x8x32xbf16, #tpu.memory_space<vmem>>, %arg7: memref<4x8x1xf32, #tpu.memory_space<vmem>>, %arg8: memref<4x8x1xf32, #tpu.memory_space<vmem>>, %arg9: memref<4x8x8xf32, #tpu.memory_space<vmem>>) attributes {dimension_semantics = [#tpu.dimension_semantics<parallel>, #tpu.dimension_semantics<arbitrary>], iteration_bounds = array<i64: 2, 1>, scalar_prefetch = 0 : i64, scratch_operands = 3 : i64, tpu.core_type = #tpu.core_type<tc>, window_params = [{transform_indices = @transform_0, window_bounds = array<i64: 1, 8, 32>}, {transform_indices = @transform_1, window_bounds = array<i64: 1, 8, 32>}, {transform_indices = @transform_2, window_bounds = array<i64: 1, 8, 32>}, {transform_indices = @transform_3, window_bounds = array<i64: 1, 1, 8>}, {transform_indices = @transform_4, window_bounds = array<i64: 1, 8, 32>}]} {
    %c0_i32 = arith.constant 0 : i32
    %0 = arith.cmpi eq, %arg1, %c0_i32 : i32
    %1 = arith.extui %0 : i1 to i32
    %c0_i32_0 = arith.constant 0 : i32
    %2 = arith.cmpi ne, %1, %c0_i32_0 : i32
    scf.if %2 {
      %cst_102 = arith.constant 0xFF800000 : f32
      %174 = vector.broadcast %cst_102 : f32 to vector<4x8x1xf32>
      %c0_103 = arith.constant 0 : index
      %c0_104 = arith.constant 0 : index
      %c0_105 = arith.constant 0 : index
      %175 = vector.load %arg7[%c0_103, %c0_104, %c0_105] : memref<4x8x1xf32, #tpu.memory_space<vmem>>, vector<4x8x1xf32>
      tpu.vector_store %arg7[%c0_103, %c0_104, %c0_105], %174 {strides = array<i32>} : memref<4x8x1xf32, #tpu.memory_space<vmem>>, vector<4x8x1xf32>,
      %cst_106 = arith.constant 0.000000e+00 : f32
      %176 = vector.broadcast %cst_106 : f32 to vector<4x8x1xf32>
      %c0_107 = arith.constant 0 : index
      %c0_108 = arith.constant 0 : index
      %c0_109 = arith.constant 0 : index
      %177 = vector.load %arg8[%c0_107, %c0_108, %c0_109] : memref<4x8x1xf32, #tpu.memory_space<vmem>>, vector<4x8x1xf32>
      tpu.vector_store %arg8[%c0_107, %c0_108, %c0_109], %176 {strides = array<i32>} : memref<4x8x1xf32, #tpu.memory_space<vmem>>, vector<4x8x1xf32>,
      %cst_110 = arith.constant 0.000000e+00 : f32
      %178 = vector.broadcast %cst_110 : f32 to vector<4x8x8xf32>
      %c0_111 = arith.constant 0 : index
      %c0_112 = arith.constant 0 : index
      %c0_113 = arith.constant 0 : index
      %179 = vector.load %arg9[%c0_111, %c0_112, %c0_113] : memref<4x8x8xf32, #tpu.memory_space<vmem>>, vector<4x8x8xf32>
      tpu.vector_store %arg9[%c0_111, %c0_112, %c0_113], %178 {strides = array<i32>} : memref<4x8x8xf32, #tpu.memory_space<vmem>>, vector<4x8x8xf32>,
    } else {
    }
    %c0 = arith.constant 0 : index
    %c0_1 = arith.constant 0 : index
    %c0_2 = arith.constant 0 : index
    %3 = vector.load %arg2[%c0, %c0_1, %c0_2] : memref<1x8x32xbf16, #tpu.memory_space<vmem>>, vector<1x8x32xbf16>
    %4 = vector.shape_cast %3 : vector<1x8x32xbf16> to vector<8x32xbf16>
    %c0_3 = arith.constant 0 : index
    %c0_4 = arith.constant 0 : index
    %c0_5 = arith.constant 0 : index
    %5 = vector.load %arg3[%c0_3, %c0_4, %c0_5] : memref<1x8x32xbf16, #tpu.memory_space<vmem>>, vector<1x8x32xbf16>
    %6 = vector.shape_cast %5 : vector<1x8x32xbf16> to vector<8x32xbf16>
    %c0_6 = arith.constant 0 : index
    %c0_7 = arith.constant 0 : index
    %c0_8 = arith.constant 0 : index
    %7 = vector.load %arg4[%c0_6, %c0_7, %c0_8] : memref<1x8x32xbf16, #tpu.memory_space<vmem>>, vector<1x8x32xbf16>
    %8 = vector.shape_cast %7 : vector<1x8x32xbf16> to vector<8x32xbf16>
    %c0_9 = arith.constant 0 : index
    %c0_10 = arith.constant 0 : index
    %c0_11 = arith.constant 0 : index
    %9 = vector.load %arg5[%c0_9, %c0_10, %c0_11] : memref<1x1x8xf32, #tpu.memory_space<vmem>>, vector<1x1x8xf32>
    %10 = vector.shape_cast %9 : vector<1x1x8xf32> to vector<1x8xf32>
    %11 = vector.extract_strided_slice %4 {offsets = [0, 0], sizes = [8, 8], strides = [1, 1]} : vector<8x32xbf16> to vector<8x8xbf16>
    %12 = vector.extract_strided_slice %6 {offsets = [0, 0], sizes = [8, 8], strides = [1, 1]} : vector<8x32xbf16> to vector<8x8xbf16>
    %13 = vector.extract_strided_slice %8 {offsets = [0, 0], sizes = [8, 8], strides = [1, 1]} : vector<8x32xbf16> to vector<8x8xbf16>
    %cst = arith.constant dense<0.000000e+00> : vector<8x8xf32>
    %14 = tpu.matmul %11, %12, %cst {dimension_numbers = #tpu.dot_dimension_numbers<[1], [1], [0], [0], [0, 0, 1, 0], [], []>} : vector<8x8xbf16>, vector<8x8xbf16>, vector<8x8xf32> -> vector<8x8xf32>
    %cst_12 = arith.constant 0.353553385 : f32
    %15 = vector.broadcast %cst_12 : f32 to vector<8x8xf32>
    %16 = arith.mulf %14, %15 : vector<8x8xf32>
    %17 = vector.broadcast %10 : vector<1x8xf32> to vector<8x8xf32>
    %18 = arith.addf %16, %17 : vector<8x8xf32>
    %c0_13 = arith.constant 0 : index
    %c0_14 = arith.constant 0 : index
    %c0_15 = arith.constant 0 : index
    %19 = vector.load %arg7[%c0_13, %c0_14, %c0_15] : memref<4x8x1xf32, #tpu.memory_space<vmem>>, vector<1x8x1xf32>
    %20 = vector.shape_cast %19 : vector<1x8x1xf32> to vector<8x1xf32>
    %cst_16 = arith.constant dense<0xFF800000> : vector<8xf32>
    %21 = vector.multi_reduction <maximumf>, %18, %cst_16 [1] : vector<8x8xf32> to vector<8xf32>
    %22 = vector.shape_cast %21 : vector<8xf32> to vector<8x1xf32>
    %23 = arith.maximumf %20, %22 : vector<8x1xf32>
    %24 = arith.subf %20, %23 : vector<8x1xf32>
    %25 = math.exp %24 : vector<8x1xf32>
    %26 = vector.broadcast %23 : vector<8x1xf32> to vector<8x8xf32>
    %27 = arith.subf %18, %26 : vector<8x8xf32>
    %28 = math.exp %27 : vector<8x8xf32>
    %c0_17 = arith.constant 0 : index
    %c0_18 = arith.constant 0 : index
    %c0_19 = arith.constant 0 : index
    %29 = vector.load %arg8[%c0_17, %c0_18, %c0_19] : memref<4x8x1xf32, #tpu.memory_space<vmem>>, vector<1x8x1xf32>
    %30 = vector.shape_cast %29 : vector<1x8x1xf32> to vector<8x1xf32>
    %31 = arith.mulf %25, %30 : vector<8x1xf32>
    %cst_20 = arith.constant dense<0.000000e+00> : vector<8xf32>
    %32 = vector.multi_reduction <add>, %28, %cst_20 [1] : vector<8x8xf32> to vector<8xf32>
    %33 = vector.shape_cast %32 : vector<8xf32> to vector<8x1xf32>
    %34 = arith.addf %31, %33 : vector<8x1xf32>
    %c0_21 = arith.constant 0 : index
    %c0_22 = arith.constant 0 : index
    %c0_23 = arith.constant 0 : index
    %35 = vector.load %arg8[%c0_21, %c0_22, %c0_23] : memref<4x8x1xf32, #tpu.memory_space<vmem>>, vector<1x8x1xf32>
    %36 = vector.shape_cast %35 : vector<1x8x1xf32> to vector<8x1xf32>
    %37 = vector.shape_cast %34 : vector<8x1xf32> to vector<1x8x1xf32>
    tpu.vector_store %arg8[%c0_21, %c0_22, %c0_23], %37 {strides = array<i32>} : memref<4x8x1xf32, #tpu.memory_space<vmem>>, vector<1x8x1xf32>,
    %c0_24 = arith.constant 0 : index
    %c0_25 = arith.constant 0 : index
    %c0_26 = arith.constant 0 : index
    %38 = vector.load %arg9[%c0_24, %c0_25, %c0_26] : memref<4x8x8xf32, #tpu.memory_space<vmem>>, vector<1x8x8xf32>
    %39 = vector.shape_cast %38 : vector<1x8x8xf32> to vector<8x8xf32>
    %40 = vector.broadcast %25 : vector<8x1xf32> to vector<8x8xf32>
    %41 = arith.mulf %40, %39 : vector<8x8xf32>
    %42 = arith.truncf %28 : vector<8x8xf32> to vector<8x8xbf16>
    %cst_27 = arith.constant dense<0.000000e+00> : vector<8x8xf32>
    %43 = tpu.matmul %42, %13, %cst_27 {dimension_numbers = #tpu.dot_dimension_numbers<[1], [0], [0], [1], [0, 0, 1, 1], [], []>} : vector<8x8xbf16>, vector<8x8xbf16>, vector<8x8xf32> -> vector<8x8xf32>
    %44 = arith.addf %41, %43 : vector<8x8xf32>
    %c0_28 = arith.constant 0 : index
    %c0_29 = arith.constant 0 : index
    %c0_30 = arith.constant 0 : index
    %45 = vector.load %arg9[%c0_28, %c0_29, %c0_30] : memref<4x8x8xf32, #tpu.memory_space<vmem>>, vector<1x8x8xf32>
    %46 = vector.shape_cast %45 : vector<1x8x8xf32> to vector<8x8xf32>
    %47 = vector.shape_cast %44 : vector<8x8xf32> to vector<1x8x8xf32>
    tpu.vector_store %arg9[%c0_28, %c0_29, %c0_30], %47 {strides = array<i32>} : memref<4x8x8xf32, #tpu.memory_space<vmem>>, vector<1x8x8xf32>,
    %c0_31 = arith.constant 0 : index
    %c0_32 = arith.constant 0 : index
    %c0_33 = arith.constant 0 : index
    %48 = vector.load %arg7[%c0_31, %c0_32, %c0_33] : memref<4x8x1xf32, #tpu.memory_space<vmem>>, vector<1x8x1xf32>
    %49 = vector.shape_cast %48 : vector<1x8x1xf32> to vector<8x1xf32>
    %50 = vector.shape_cast %23 : vector<8x1xf32> to vector<1x8x1xf32>
    tpu.vector_store %arg7[%c0_31, %c0_32, %c0_33], %50 {strides = array<i32>} : memref<4x8x1xf32, #tpu.memory_space<vmem>>, vector<1x8x1xf32>,
    %51 = vector.extract_strided_slice %4 {offsets = [0, 8], sizes = [8, 8], strides = [1, 1]} : vector<8x32xbf16> to vector<8x8xbf16>
    %52 = vector.extract_strided_slice %6 {offsets = [0, 8], sizes = [8, 8], strides = [1, 1]} : vector<8x32xbf16> to vector<8x8xbf16>
    %53 = vector.extract_strided_slice %8 {offsets = [0, 8], sizes = [8, 8], strides = [1, 1]} : vector<8x32xbf16> to vector<8x8xbf16>
    %cst_34 = arith.constant dense<0.000000e+00> : vector<8x8xf32>
    %54 = tpu.matmul %51, %52, %cst_34 {dimension_numbers = #tpu.dot_dimension_numbers<[1], [1], [0], [0], [0, 0, 1, 0], [], []>} : vector<8x8xbf16>, vector<8x8xbf16>, vector<8x8xf32> -> vector<8x8xf32>
    %cst_35 = arith.constant 0.353553385 : f32
    %55 = vector.broadcast %cst_35 : f32 to vector<8x8xf32>
    %56 = arith.mulf %54, %55 : vector<8x8xf32>
    %57 = vector.broadcast %10 : vector<1x8xf32> to vector<8x8xf32>
    %58 = arith.addf %56, %57 : vector<8x8xf32>
    %c1 = arith.constant 1 : index
    %c0_36 = arith.constant 0 : index
    %c0_37 = arith.constant 0 : index
    %59 = vector.load %arg7[%c1, %c0_36, %c0_37] : memref<4x8x1xf32, #tpu.memory_space<vmem>>, vector<1x8x1xf32>
    %60 = vector.shape_cast %59 : vector<1x8x1xf32> to vector<8x1xf32>
    %cst_38 = arith.constant dense<0xFF800000> : vector<8xf32>
    %61 = vector.multi_reduction <maximumf>, %58, %cst_38 [1] : vector<8x8xf32> to vector<8xf32>
    %62 = vector.shape_cast %61 : vector<8xf32> to vector<8x1xf32>
    %63 = arith.maximumf %60, %62 : vector<8x1xf32>
    %64 = arith.subf %60, %63 : vector<8x1xf32>
    %65 = math.exp %64 : vector<8x1xf32>
    %66 = vector.broadcast %63 : vector<8x1xf32> to vector<8x8xf32>
    %67 = arith.subf %58, %66 : vector<8x8xf32>
    %68 = math.exp %67 : vector<8x8xf32>
    %c1_39 = arith.constant 1 : index
    %c0_40 = arith.constant 0 : index
    %c0_41 = arith.constant 0 : index
    %69 = vector.load %arg8[%c1_39, %c0_40, %c0_41] : memref<4x8x1xf32, #tpu.memory_space<vmem>>, vector<1x8x1xf32>
    %70 = vector.shape_cast %69 : vector<1x8x1xf32> to vector<8x1xf32>
    %71 = arith.mulf %65, %70 : vector<8x1xf32>
    %cst_42 = arith.constant dense<0.000000e+00> : vector<8xf32>
    %72 = vector.multi_reduction <add>, %68, %cst_42 [1] : vector<8x8xf32> to vector<8xf32>
    %73 = vector.shape_cast %72 : vector<8xf32> to vector<8x1xf32>
    %74 = arith.addf %71, %73 : vector<8x1xf32>
    %c1_43 = arith.constant 1 : index
    %c0_44 = arith.constant 0 : index
    %c0_45 = arith.constant 0 : index
    %75 = vector.load %arg8[%c1_43, %c0_44, %c0_45] : memref<4x8x1xf32, #tpu.memory_space<vmem>>, vector<1x8x1xf32>
    %76 = vector.shape_cast %75 : vector<1x8x1xf32> to vector<8x1xf32>
    %77 = vector.shape_cast %74 : vector<8x1xf32> to vector<1x8x1xf32>
    tpu.vector_store %arg8[%c1_43, %c0_44, %c0_45], %77 {strides = array<i32>} : memref<4x8x1xf32, #tpu.memory_space<vmem>>, vector<1x8x1xf32>,
    %c1_46 = arith.constant 1 : index
    %c0_47 = arith.constant 0 : index
    %c0_48 = arith.constant 0 : index
    %78 = vector.load %arg9[%c1_46, %c0_47, %c0_48] : memref<4x8x8xf32, #tpu.memory_space<vmem>>, vector<1x8x8xf32>
    %79 = vector.shape_cast %78 : vector<1x8x8xf32> to vector<8x8xf32>
    %80 = vector.broadcast %65 : vector<8x1xf32> to vector<8x8xf32>
    %81 = arith.mulf %80, %79 : vector<8x8xf32>
    %82 = arith.truncf %68 : vector<8x8xf32> to vector<8x8xbf16>
    %cst_49 = arith.constant dense<0.000000e+00> : vector<8x8xf32>
    %83 = tpu.matmul %82, %53, %cst_49 {dimension_numbers = #tpu.dot_dimension_numbers<[1], [0], [0], [1], [0, 0, 1, 1], [], []>} : vector<8x8xbf16>, vector<8x8xbf16>, vector<8x8xf32> -> vector<8x8xf32>
    %84 = arith.addf %81, %83 : vector<8x8xf32>
    %c1_50 = arith.constant 1 : index
    %c0_51 = arith.constant 0 : index
    %c0_52 = arith.constant 0 : index
    %85 = vector.load %arg9[%c1_50, %c0_51, %c0_52] : memref<4x8x8xf32, #tpu.memory_space<vmem>>, vector<1x8x8xf32>
    %86 = vector.shape_cast %85 : vector<1x8x8xf32> to vector<8x8xf32>
    %87 = vector.shape_cast %84 : vector<8x8xf32> to vector<1x8x8xf32>
    tpu.vector_store %arg9[%c1_50, %c0_51, %c0_52], %87 {strides = array<i32>} : memref<4x8x8xf32, #tpu.memory_space<vmem>>, vector<1x8x8xf32>,
    %c1_53 = arith.constant 1 : index
    %c0_54 = arith.constant 0 : index
    %c0_55 = arith.constant 0 : index
    %88 = vector.load %arg7[%c1_53, %c0_54, %c0_55] : memref<4x8x1xf32, #tpu.memory_space<vmem>>, vector<1x8x1xf32>
    %89 = vector.shape_cast %88 : vector<1x8x1xf32> to vector<8x1xf32>
    %90 = vector.shape_cast %63 : vector<8x1xf32> to vector<1x8x1xf32>
    tpu.vector_store %arg7[%c1_53, %c0_54, %c0_55], %90 {strides = array<i32>} : memref<4x8x1xf32, #tpu.memory_space<vmem>>, vector<1x8x1xf32>,
    %91 = vector.extract_strided_slice %4 {offsets = [0, 16], sizes = [8, 8], strides = [1, 1]} : vector<8x32xbf16> to vector<8x8xbf16>
    %92 = vector.extract_strided_slice %6 {offsets = [0, 16], sizes = [8, 8], strides = [1, 1]} : vector<8x32xbf16> to vector<8x8xbf16>
    %93 = vector.extract_strided_slice %8 {offsets = [0, 16], sizes = [8, 8], strides = [1, 1]} : vector<8x32xbf16> to vector<8x8xbf16>
    %cst_56 = arith.constant dense<0.000000e+00> : vector<8x8xf32>
    %94 = tpu.matmul %91, %92, %cst_56 {dimension_numbers = #tpu.dot_dimension_numbers<[1], [1], [0], [0], [0, 0, 1, 0], [], []>} : vector<8x8xbf16>, vector<8x8xbf16>, vector<8x8xf32> -> vector<8x8xf32>
    %cst_57 = arith.constant 0.353553385 : f32
    %95 = vector.broadcast %cst_57 : f32 to vector<8x8xf32>
    %96 = arith.mulf %94, %95 : vector<8x8xf32>
    %97 = vector.broadcast %10 : vector<1x8xf32> to vector<8x8xf32>
    %98 = arith.addf %96, %97 : vector<8x8xf32>
    %c2 = arith.constant 2 : index
    %c0_58 = arith.constant 0 : index
    %c0_59 = arith.constant 0 : index
    %99 = vector.load %arg7[%c2, %c0_58, %c0_59] : memref<4x8x1xf32, #tpu.memory_space<vmem>>, vector<1x8x1xf32>
    %100 = vector.shape_cast %99 : vector<1x8x1xf32> to vector<8x1xf32>
    %cst_60 = arith.constant dense<0xFF800000> : vector<8xf32>
    %101 = vector.multi_reduction <maximumf>, %98, %cst_60 [1] : vector<8x8xf32> to vector<8xf32>
    %102 = vector.shape_cast %101 : vector<8xf32> to vector<8x1xf32>
    %103 = arith.maximumf %100, %102 : vector<8x1xf32>
    %104 = arith.subf %100, %103 : vector<8x1xf32>
    %105 = math.exp %104 : vector<8x1xf32>
    %106 = vector.broadcast %103 : vector<8x1xf32> to vector<8x8xf32>
    %107 = arith.subf %98, %106 : vector<8x8xf32>
    %108 = math.exp %107 : vector<8x8xf32>
    %c2_61 = arith.constant 2 : index
    %c0_62 = arith.constant 0 : index
    %c0_63 = arith.constant 0 : index
    %109 = vector.load %arg8[%c2_61, %c0_62, %c0_63] : memref<4x8x1xf32, #tpu.memory_space<vmem>>, vector<1x8x1xf32>
    %110 = vector.shape_cast %109 : vector<1x8x1xf32> to vector<8x1xf32>
    %111 = arith.mulf %105, %110 : vector<8x1xf32>
    %cst_64 = arith.constant dense<0.000000e+00> : vector<8xf32>
    %112 = vector.multi_reduction <add>, %108, %cst_64 [1] : vector<8x8xf32> to vector<8xf32>
    %113 = vector.shape_cast %112 : vector<8xf32> to vector<8x1xf32>
    %114 = arith.addf %111, %113 : vector<8x1xf32>
    %c2_65 = arith.constant 2 : index
    %c0_66 = arith.constant 0 : index
    %c0_67 = arith.constant 0 : index
    %115 = vector.load %arg8[%c2_65, %c0_66, %c0_67] : memref<4x8x1xf32, #tpu.memory_space<vmem>>, vector<1x8x1xf32>
    %116 = vector.shape_cast %115 : vector<1x8x1xf32> to vector<8x1xf32>
    %117 = vector.shape_cast %114 : vector<8x1xf32> to vector<1x8x1xf32>
    tpu.vector_store %arg8[%c2_65, %c0_66, %c0_67], %117 {strides = array<i32>} : memref<4x8x1xf32, #tpu.memory_space<vmem>>, vector<1x8x1xf32>,
    %c2_68 = arith.constant 2 : index
    %c0_69 = arith.constant 0 : index
    %c0_70 = arith.constant 0 : index
    %118 = vector.load %arg9[%c2_68, %c0_69, %c0_70] : memref<4x8x8xf32, #tpu.memory_space<vmem>>, vector<1x8x8xf32>
    %119 = vector.shape_cast %118 : vector<1x8x8xf32> to vector<8x8xf32>
    %120 = vector.broadcast %105 : vector<8x1xf32> to vector<8x8xf32>
    %121 = arith.mulf %120, %119 : vector<8x8xf32>
    %122 = arith.truncf %108 : vector<8x8xf32> to vector<8x8xbf16>
    %cst_71 = arith.constant dense<0.000000e+00> : vector<8x8xf32>
    %123 = tpu.matmul %122, %93, %cst_71 {dimension_numbers = #tpu.dot_dimension_numbers<[1], [0], [0], [1], [0, 0, 1, 1], [], []>} : vector<8x8xbf16>, vector<8x8xbf16>, vector<8x8xf32> -> vector<8x8xf32>
    %124 = arith.addf %121, %123 : vector<8x8xf32>
    %c2_72 = arith.constant 2 : index
    %c0_73 = arith.constant 0 : index
    %c0_74 = arith.constant 0 : index
    %125 = vector.load %arg9[%c2_72, %c0_73, %c0_74] : memref<4x8x8xf32, #tpu.memory_space<vmem>>, vector<1x8x8xf32>
    %126 = vector.shape_cast %125 : vector<1x8x8xf32> to vector<8x8xf32>
    %127 = vector.shape_cast %124 : vector<8x8xf32> to vector<1x8x8xf32>
    tpu.vector_store %arg9[%c2_72, %c0_73, %c0_74], %127 {strides = array<i32>} : memref<4x8x8xf32, #tpu.memory_space<vmem>>, vector<1x8x8xf32>,
    %c2_75 = arith.constant 2 : index
    %c0_76 = arith.constant 0 : index
    %c0_77 = arith.constant 0 : index
    %128 = vector.load %arg7[%c2_75, %c0_76, %c0_77] : memref<4x8x1xf32, #tpu.memory_space<vmem>>, vector<1x8x1xf32>
    %129 = vector.shape_cast %128 : vector<1x8x1xf32> to vector<8x1xf32>
    %130 = vector.shape_cast %103 : vector<8x1xf32> to vector<1x8x1xf32>
    tpu.vector_store %arg7[%c2_75, %c0_76, %c0_77], %130 {strides = array<i32>} : memref<4x8x1xf32, #tpu.memory_space<vmem>>, vector<1x8x1xf32>,
    %131 = vector.extract_strided_slice %4 {offsets = [0, 24], sizes = [8, 8], strides = [1, 1]} : vector<8x32xbf16> to vector<8x8xbf16>
    %132 = vector.extract_strided_slice %6 {offsets = [0, 24], sizes = [8, 8], strides = [1, 1]} : vector<8x32xbf16> to vector<8x8xbf16>
    %133 = vector.extract_strided_slice %8 {offsets = [0, 24], sizes = [8, 8], strides = [1, 1]} : vector<8x32xbf16> to vector<8x8xbf16>
    %cst_78 = arith.constant dense<0.000000e+00> : vector<8x8xf32>
    %134 = tpu.matmul %131, %132, %cst_78 {dimension_numbers = #tpu.dot_dimension_numbers<[1], [1], [0], [0], [0, 0, 1, 0], [], []>} : vector<8x8xbf16>, vector<8x8xbf16>, vector<8x8xf32> -> vector<8x8xf32>
    %cst_79 = arith.constant 0.353553385 : f32
    %135 = vector.broadcast %cst_79 : f32 to vector<8x8xf32>
    %136 = arith.mulf %134, %135 : vector<8x8xf32>
    %137 = vector.broadcast %10 : vector<1x8xf32> to vector<8x8xf32>
    %138 = arith.addf %136, %137 : vector<8x8xf32>
    %c3 = arith.constant 3 : index
    %c0_80 = arith.constant 0 : index
    %c0_81 = arith.constant 0 : index
    %139 = vector.load %arg7[%c3, %c0_80, %c0_81] : memref<4x8x1xf32, #tpu.memory_space<vmem>>, vector<1x8x1xf32>
    %140 = vector.shape_cast %139 : vector<1x8x1xf32> to vector<8x1xf32>
    %cst_82 = arith.constant dense<0xFF800000> : vector<8xf32>
    %141 = vector.multi_reduction <maximumf>, %138, %cst_82 [1] : vector<8x8xf32> to vector<8xf32>
    %142 = vector.shape_cast %141 : vector<8xf32> to vector<8x1xf32>
    %143 = arith.maximumf %140, %142 : vector<8x1xf32>
    %144 = arith.subf %140, %143 : vector<8x1xf32>
    %145 = math.exp %144 : vector<8x1xf32>
    %146 = vector.broadcast %143 : vector<8x1xf32> to vector<8x8xf32>
    %147 = arith.subf %138, %146 : vector<8x8xf32>
    %148 = math.exp %147 : vector<8x8xf32>
    %c3_83 = arith.constant 3 : index
    %c0_84 = arith.constant 0 : index
    %c0_85 = arith.constant 0 : index
    %149 = vector.load %arg8[%c3_83, %c0_84, %c0_85] : memref<4x8x1xf32, #tpu.memory_space<vmem>>, vector<1x8x1xf32>
    %150 = vector.shape_cast %149 : vector<1x8x1xf32> to vector<8x1xf32>
    %151 = arith.mulf %145, %150 : vector<8x1xf32>
    %cst_86 = arith.constant dense<0.000000e+00> : vector<8xf32>
    %152 = vector.multi_reduction <add>, %148, %cst_86 [1] : vector<8x8xf32> to vector<8xf32>
    %153 = vector.shape_cast %152 : vector<8xf32> to vector<8x1xf32>
    %154 = arith.addf %151, %153 : vector<8x1xf32>
    %c3_87 = arith.constant 3 : index
    %c0_88 = arith.constant 0 : index
    %c0_89 = arith.constant 0 : index
    %155 = vector.load %arg8[%c3_87, %c0_88, %c0_89] : memref<4x8x1xf32, #tpu.memory_space<vmem>>, vector<1x8x1xf32>
    %156 = vector.shape_cast %155 : vector<1x8x1xf32> to vector<8x1xf32>
    %157 = vector.shape_cast %154 : vector<8x1xf32> to vector<1x8x1xf32>
    tpu.vector_store %arg8[%c3_87, %c0_88, %c0_89], %157 {strides = array<i32>} : memref<4x8x1xf32, #tpu.memory_space<vmem>>, vector<1x8x1xf32>,
    %c3_90 = arith.constant 3 : index
    %c0_91 = arith.constant 0 : index
    %c0_92 = arith.constant 0 : index
    %158 = vector.load %arg9[%c3_90, %c0_91, %c0_92] : memref<4x8x8xf32, #tpu.memory_space<vmem>>, vector<1x8x8xf32>
    %159 = vector.shape_cast %158 : vector<1x8x8xf32> to vector<8x8xf32>
    %160 = vector.broadcast %145 : vector<8x1xf32> to vector<8x8xf32>
    %161 = arith.mulf %160, %159 : vector<8x8xf32>
    %162 = arith.truncf %148 : vector<8x8xf32> to vector<8x8xbf16>
    %cst_93 = arith.constant dense<0.000000e+00> : vector<8x8xf32>
    %163 = tpu.matmul %162, %133, %cst_93 {dimension_numbers = #tpu.dot_dimension_numbers<[1], [0], [0], [1], [0, 0, 1, 1], [], []>} : vector<8x8xbf16>, vector<8x8xbf16>, vector<8x8xf32> -> vector<8x8xf32>
    %164 = arith.addf %161, %163 : vector<8x8xf32>
    %c3_94 = arith.constant 3 : index
    %c0_95 = arith.constant 0 : index
    %c0_96 = arith.constant 0 : index
    %165 = vector.load %arg9[%c3_94, %c0_95, %c0_96] : memref<4x8x8xf32, #tpu.memory_space<vmem>>, vector<1x8x8xf32>
    %166 = vector.shape_cast %165 : vector<1x8x8xf32> to vector<8x8xf32>
    %167 = vector.shape_cast %164 : vector<8x8xf32> to vector<1x8x8xf32>
    tpu.vector_store %arg9[%c3_94, %c0_95, %c0_96], %167 {strides = array<i32>} : memref<4x8x8xf32, #tpu.memory_space<vmem>>, vector<1x8x8xf32>,
    %c3_97 = arith.constant 3 : index
    %c0_98 = arith.constant 0 : index
    %c0_99 = arith.constant 0 : index
    %168 = vector.load %arg7[%c3_97, %c0_98, %c0_99] : memref<4x8x1xf32, #tpu.memory_space<vmem>>, vector<1x8x1xf32>
    %169 = vector.shape_cast %168 : vector<1x8x1xf32> to vector<8x1xf32>
    %170 = vector.shape_cast %143 : vector<8x1xf32> to vector<1x8x1xf32>
    tpu.vector_store %arg7[%c3_97, %c0_98, %c0_99], %170 {strides = array<i32>} : memref<4x8x1xf32, #tpu.memory_space<vmem>>, vector<1x8x1xf32>,
    %c0_i32_100 = arith.constant 0 : i32
    %171 = arith.cmpi eq, %arg1, %c0_i32_100 : i32
    %172 = arith.extui %171 : i1 to i32
    %c0_i32_101 = arith.constant 0 : i32
    %173 = arith.cmpi ne, %172, %c0_i32_101 : i32
    scf.if %173 {
      %c0_102 = arith.constant 0 : index
      %c0_103 = arith.constant 0 : index
      %c0_104 = arith.constant 0 : index
      %174 = vector.load %arg9[%c0_102, %c0_103, %c0_104] : memref<4x8x8xf32, #tpu.memory_space<vmem>>, vector<1x8x8xf32>
      %175 = vector.shape_cast %174 : vector<1x8x8xf32> to vector<8x8xf32>
      %c0_105 = arith.constant 0 : index
      %c0_106 = arith.constant 0 : index
      %c0_107 = arith.constant 0 : index
      %176 = vector.load %arg8[%c0_105, %c0_106, %c0_107] : memref<4x8x1xf32, #tpu.memory_space<vmem>>, vector<1x8x1xf32>
      %177 = vector.shape_cast %176 : vector<1x8x1xf32> to vector<8x1xf32>
      %178 = tpu.reciprocal %177 {approx = true} : vector<8x1xf32> -> vector<8x1xf32>
      %179 = vector.broadcast %178 : vector<8x1xf32> to vector<8x8xf32>
      %180 = arith.mulf %175, %179 : vector<8x8xf32>
      %c1_108 = arith.constant 1 : index
      %c0_109 = arith.constant 0 : index
      %c0_110 = arith.constant 0 : index
      %181 = vector.load %arg9[%c1_108, %c0_109, %c0_110] : memref<4x8x8xf32, #tpu.memory_space<vmem>>, vector<1x8x8xf32>
      %182 = vector.shape_cast %181 : vector<1x8x8xf32> to vector<8x8xf32>
      %c1_111 = arith.constant 1 : index
      %c0_112 = arith.constant 0 : index
      %c0_113 = arith.constant 0 : index
      %183 = vector.load %arg8[%c1_111, %c0_112, %c0_113] : memref<4x8x1xf32, #tpu.memory_space<vmem>>, vector<1x8x1xf32>
      %184 = vector.shape_cast %183 : vector<1x8x1xf32> to vector<8x1xf32>
      %185 = tpu.reciprocal %184 {approx = true} : vector<8x1xf32> -> vector<8x1xf32>
      %186 = vector.broadcast %185 : vector<8x1xf32> to vector<8x8xf32>
      %187 = arith.mulf %182, %186 : vector<8x8xf32>
      %c2_114 = arith.constant 2 : index
      %c0_115 = arith.constant 0 : index
      %c0_116 = arith.constant 0 : index
      %188 = vector.load %arg9[%c2_114, %c0_115, %c0_116] : memref<4x8x8xf32, #tpu.memory_space<vmem>>, vector<1x8x8xf32>
      %189 = vector.shape_cast %188 : vector<1x8x8xf32> to vector<8x8xf32>
      %c2_117 = arith.constant 2 : index
      %c0_118 = arith.constant 0 : index
      %c0_119 = arith.constant 0 : index
      %190 = vector.load %arg8[%c2_117, %c0_118, %c0_119] : memref<4x8x1xf32, #tpu.memory_space<vmem>>, vector<1x8x1xf32>
      %191 = vector.shape_cast %190 : vector<1x8x1xf32> to vector<8x1xf32>
      %192 = tpu.reciprocal %191 {approx = true} : vector<8x1xf32> -> vector<8x1xf32>
      %193 = vector.broadcast %192 : vector<8x1xf32> to vector<8x8xf32>
      %194 = arith.mulf %189, %193 : vector<8x8xf32>
      %c3_120 = arith.constant 3 : index
      %c0_121 = arith.constant 0 : index
      %c0_122 = arith.constant 0 : index
      %195 = vector.load %arg9[%c3_120, %c0_121, %c0_122] : memref<4x8x8xf32, #tpu.memory_space<vmem>>, vector<1x8x8xf32>
      %196 = vector.shape_cast %195 : vector<1x8x8xf32> to vector<8x8xf32>
      %c3_123 = arith.constant 3 : index
      %c0_124 = arith.constant 0 : index
      %c0_125 = arith.constant 0 : index
      %197 = vector.load %arg8[%c3_123, %c0_124, %c0_125] : memref<4x8x1xf32, #tpu.memory_space<vmem>>, vector<1x8x1xf32>
      %198 = vector.shape_cast %197 : vector<1x8x1xf32> to vector<8x1xf32>
      %199 = tpu.reciprocal %198 {approx = true} : vector<8x1xf32> -> vector<8x1xf32>
      %200 = vector.broadcast %199 : vector<8x1xf32> to vector<8x8xf32>
      %201 = arith.mulf %196, %200 : vector<8x8xf32>
      %202 = tpu.concatenate %180, %187, %194, %201 in 1 : vector<8x8xf32>, vector<8x8xf32>, vector<8x8xf32>, vector<8x8xf32> -> vector<8x32xf32>
      %203 = arith.truncf %202 : vector<8x32xf32> to vector<8x32xbf16>
      %c0_126 = arith.constant 0 : index
      %c0_127 = arith.constant 0 : index
      %c0_128 = arith.constant 0 : index
      %204 = vector.load %arg6[%c0_126, %c0_127, %c0_128] : memref<1x8x32xbf16, #tpu.memory_space<vmem>>, vector<1x8x32xbf16>
      %205 = vector.shape_cast %204 : vector<1x8x32xbf16> to vector<8x32xbf16>
      %206 = vector.shape_cast %203 : vector<8x32xbf16> to vector<1x8x32xbf16>
      tpu.vector_store %arg6[%c0_126, %c0_127, %c0_128], %206 {strides = array<i32>} : memref<1x8x32xbf16, #tpu.memory_space<vmem>>, vector<1x8x32xbf16>,
    } else {
    }
    return
  }
  func.func @transform_0(%arg0: i32, %arg1: i32) -> (i32, i32, i32) {
    %c0_i32 = arith.constant 0 : i32
    %c0_i32_0 = arith.constant 0 : i32
    %c0_i32_1 = arith.constant 0 : i32
    return %arg0, %c0_i32, %c0_i32_0 : i32, i32, i32
  }
  func.func @transform_1(%arg0: i32, %arg1: i32) -> (i32, i32, i32) {
    %c0_i32 = arith.constant 0 : i32
    %c0_i32_0 = arith.constant 0 : i32
    return %arg0, %arg1, %c0_i32 : i32, i32, i32
  }
  func.func @transform_2(%arg0: i32, %arg1: i32) -> (i32, i32, i32) {
    %c0_i32 = arith.constant 0 : i32
    %c0_i32_0 = arith.constant 0 : i32
    return %arg0, %arg1, %c0_i32 : i32, i32, i32
  }
  func.func @transform_3(%arg0: i32, %arg1: i32) -> (i32, i32, i32) {
    %c0_i32 = arith.constant 0 : i32
    %c0_i32_0 = arith.constant 0 : i32
    return %arg0, %c0_i32, %arg1 : i32, i32, i32
  }
  func.func @transform_4(%arg0: i32, %arg1: i32) -> (i32, i32, i32) {
    %c0_i32 = arith.constant 0 : i32
    %c0_i32_0 = arith.constant 0 : i32
    %c0_i32_1 = arith.constant 0 : i32
    return %arg0, %c0_i32, %c0_i32_0 : i32, i32, i32
  }
}

module attributes {stable_mosaic.version = 11 : i64} {
  func.func @_add_ln_kernel(%arg0: i32, %arg1: memref<16x32xbf16, #tpu.memory_space<vmem>>, %arg2: memref<16x32xbf16, #tpu.memory_space<vmem>>, %arg3: memref<1x32xf32, #tpu.memory_space<vmem>>, %arg4: memref<1x32xf32, #tpu.memory_space<vmem>>, %arg5: memref<16x32xbf16, #tpu.memory_space<vmem>>) attributes {dimension_semantics = [#tpu.dimension_semantics<parallel>], iteration_bounds = array<i64: 1>, scalar_prefetch = 0 : i64, scratch_operands = 0 : i64, tpu.core_type = #tpu.core_type<tc>, window_params = [{transform_indices = @transform_0, window_bounds = array<i64: 16, 32>}, {transform_indices = @transform_1, window_bounds = array<i64: 16, 32>}, {pipeline_mode = #tpu.pipeline_mode<synchronous>, transform_indices = @transform_2, window_bounds = array<i64: 1, 32>}, {pipeline_mode = #tpu.pipeline_mode<synchronous>, transform_indices = @transform_3, window_bounds = array<i64: 1, 32>}, {transform_indices = @transform_4, window_bounds = array<i64: 16, 32>}]} {
    %c0 = arith.constant 0 : index
    %c0_0 = arith.constant 0 : index
    %0 = vector.load %arg1[%c0, %c0_0] : memref<16x32xbf16, #tpu.memory_space<vmem>>, vector<16x32xbf16>
    %1 = arith.extf %0 : vector<16x32xbf16> to vector<16x32xf32>
    %c0_1 = arith.constant 0 : index
    %c0_2 = arith.constant 0 : index
    %2 = vector.load %arg2[%c0_1, %c0_2] : memref<16x32xbf16, #tpu.memory_space<vmem>>, vector<16x32xbf16>
    %3 = arith.extf %2 : vector<16x32xbf16> to vector<16x32xf32>
    %4 = arith.addf %1, %3 : vector<16x32xf32>
    %cst = arith.constant dense<0.000000e+00> : vector<16xf32>
    %5 = vector.multi_reduction <add>, %4, %cst [1] : vector<16x32xf32> to vector<16xf32>
    %6 = vector.shape_cast %5 : vector<16xf32> to vector<16x1xf32>
    %cst_3 = arith.constant 3.200000e+01 : f32
    %7 = vector.broadcast %cst_3 : f32 to vector<16x1xf32>
    %8 = arith.divf %6, %7 : vector<16x1xf32>
    %9 = vector.broadcast %8 : vector<16x1xf32> to vector<16x32xf32>
    %10 = arith.subf %4, %9 : vector<16x32xf32>
    %11 = arith.mulf %10, %10 : vector<16x32xf32>
    %cst_4 = arith.constant dense<0.000000e+00> : vector<16xf32>
    %12 = vector.multi_reduction <add>, %11, %cst_4 [1] : vector<16x32xf32> to vector<16xf32>
    %13 = vector.shape_cast %12 : vector<16xf32> to vector<16x1xf32>
    %cst_5 = arith.constant 3.200000e+01 : f32
    %14 = vector.broadcast %cst_5 : f32 to vector<16x1xf32>
    %15 = arith.divf %13, %14 : vector<16x1xf32>
    %cst_6 = arith.constant 9.99999974E-6 : f32
    %16 = vector.broadcast %cst_6 : f32 to vector<16x1xf32>
    %17 = arith.addf %15, %16 : vector<16x1xf32>
    %18 = math.rsqrt %17 : vector<16x1xf32>
    %19 = vector.broadcast %8 : vector<16x1xf32> to vector<16x32xf32>
    %20 = arith.subf %4, %19 : vector<16x32xf32>
    %21 = vector.broadcast %18 : vector<16x1xf32> to vector<16x32xf32>
    %22 = arith.mulf %20, %21 : vector<16x32xf32>
    %c0_7 = arith.constant 0 : index
    %c0_8 = arith.constant 0 : index
    %23 = vector.load %arg3[%c0_7, %c0_8] : memref<1x32xf32, #tpu.memory_space<vmem>>, vector<1x32xf32>
    %24 = vector.broadcast %23 : vector<1x32xf32> to vector<16x32xf32>
    %25 = arith.mulf %22, %24 : vector<16x32xf32>
    %c0_9 = arith.constant 0 : index
    %c0_10 = arith.constant 0 : index
    %26 = vector.load %arg4[%c0_9, %c0_10] : memref<1x32xf32, #tpu.memory_space<vmem>>, vector<1x32xf32>
    %27 = vector.broadcast %26 : vector<1x32xf32> to vector<16x32xf32>
    %28 = arith.addf %25, %27 : vector<16x32xf32>
    %29 = arith.truncf %28 : vector<16x32xf32> to vector<16x32xbf16>
    %c0_11 = arith.constant 0 : index
    %c0_12 = arith.constant 0 : index
    %30 = vector.load %arg5[%c0_11, %c0_12] : memref<16x32xbf16, #tpu.memory_space<vmem>>, vector<16x32xbf16>
    tpu.vector_store %arg5[%c0_11, %c0_12], %29 {strides = array<i32>} : memref<16x32xbf16, #tpu.memory_space<vmem>>, vector<16x32xbf16>,
    return
  }
  func.func @transform_0(%arg0: i32) -> (i32, i32) {
    %c0_i32 = arith.constant 0 : i32
    %c0_i32_0 = arith.constant 0 : i32
    return %arg0, %c0_i32 : i32, i32
  }
  func.func @transform_1(%arg0: i32) -> (i32, i32) {
    %c0_i32 = arith.constant 0 : i32
    %c0_i32_0 = arith.constant 0 : i32
    return %arg0, %c0_i32 : i32, i32
  }
  func.func @transform_2(%arg0: i32) -> (i32, i32) {
    %c0_i32 = arith.constant 0 : i32
    %c0_i32_0 = arith.constant 0 : i32
    %c0_i32_1 = arith.constant 0 : i32
    return %c0_i32, %c0_i32_0 : i32, i32
  }
  func.func @transform_3(%arg0: i32) -> (i32, i32) {
    %c0_i32 = arith.constant 0 : i32
    %c0_i32_0 = arith.constant 0 : i32
    %c0_i32_1 = arith.constant 0 : i32
    return %c0_i32, %c0_i32_0 : i32, i32
  }
  func.func @transform_4(%arg0: i32) -> (i32, i32) {
    %c0_i32 = arith.constant 0 : i32
    %c0_i32_0 = arith.constant 0 : i32
    return %arg0, %c0_i32 : i32, i32
  }
}

module attributes {stable_mosaic.version = 11 : i64} {
  func.func @_ffn_kernel(%arg0: i32, %arg1: i32, %arg2: memref<16x32xbf16, #tpu.memory_space<vmem>>, %arg3: memref<32x64xbf16, #tpu.memory_space<vmem>>, %arg4: memref<1x64xf32, #tpu.memory_space<vmem>>, %arg5: memref<64x32xbf16, #tpu.memory_space<vmem>>, %arg6: memref<1x32xf32, #tpu.memory_space<vmem>>, %arg7: memref<16x32xbf16, #tpu.memory_space<vmem>>, %arg8: memref<16x32xf32, #tpu.memory_space<vmem>>) attributes {dimension_semantics = [#tpu.dimension_semantics<parallel>, #tpu.dimension_semantics<arbitrary>], iteration_bounds = array<i64: 1, 1>, scalar_prefetch = 0 : i64, scratch_operands = 1 : i64, tpu.core_type = #tpu.core_type<tc>, window_params = [{transform_indices = @transform_0, window_bounds = array<i64: 16, 32>}, {transform_indices = @transform_1, window_bounds = array<i64: 32, 64>}, {transform_indices = @transform_2, window_bounds = array<i64: 1, 64>}, {transform_indices = @transform_3, window_bounds = array<i64: 64, 32>}, {pipeline_mode = #tpu.pipeline_mode<synchronous>, transform_indices = @transform_4, window_bounds = array<i64: 1, 32>}, {transform_indices = @transform_5, window_bounds = array<i64: 16, 32>}]} {
    %c0_i32 = arith.constant 0 : i32
    %0 = arith.cmpi eq, %arg1, %c0_i32 : i32
    %1 = arith.extui %0 : i1 to i32
    %c0_i32_0 = arith.constant 0 : i32
    %2 = arith.cmpi ne, %1, %c0_i32_0 : i32
    scf.if %2 {
      %cst_16 = arith.constant 0.000000e+00 : f32
      %20 = vector.broadcast %cst_16 : f32 to vector<16x32xf32>
      %c0_17 = arith.constant 0 : index
      %c0_18 = arith.constant 0 : index
      %21 = vector.load %arg8[%c0_17, %c0_18] : memref<16x32xf32, #tpu.memory_space<vmem>>, vector<16x32xf32>
      tpu.vector_store %arg8[%c0_17, %c0_18], %20 {strides = array<i32>} : memref<16x32xf32, #tpu.memory_space<vmem>>, vector<16x32xf32>,
    } else {
    }
    %c0 = arith.constant 0 : index
    %c0_1 = arith.constant 0 : index
    %3 = vector.load %arg2[%c0, %c0_1] : memref<16x32xbf16, #tpu.memory_space<vmem>>, vector<16x32xbf16>
    %c0_2 = arith.constant 0 : index
    %c0_3 = arith.constant 0 : index
    %4 = vector.load %arg3[%c0_2, %c0_3] : memref<32x64xbf16, #tpu.memory_space<vmem>>, vector<32x64xbf16>
    %cst = arith.constant dense<0.000000e+00> : vector<16x64xf32>
    %5 = tpu.matmul %3, %4, %cst {dimension_numbers = #tpu.dot_dimension_numbers<[1], [0], [0], [1], [0, 0, 1, 1], [], []>} : vector<16x32xbf16>, vector<32x64xbf16>, vector<16x64xf32> -> vector<16x64xf32>
    %c0_4 = arith.constant 0 : index
    %c0_5 = arith.constant 0 : index
    %6 = vector.load %arg4[%c0_4, %c0_5] : memref<1x64xf32, #tpu.memory_space<vmem>>, vector<1x64xf32>
    %7 = vector.broadcast %6 : vector<1x64xf32> to vector<16x64xf32>
    %8 = arith.addf %5, %7 : vector<16x64xf32>
    %cst_6 = arith.constant 0.000000e+00 : f32
    %9 = vector.broadcast %cst_6 : f32 to vector<16x64xf32>
    %10 = arith.maximumf %8, %9 : vector<16x64xf32>
    %c0_7 = arith.constant 0 : index
    %c0_8 = arith.constant 0 : index
    %11 = vector.load %arg8[%c0_7, %c0_8] : memref<16x32xf32, #tpu.memory_space<vmem>>, vector<16x32xf32>
    %12 = arith.truncf %10 : vector<16x64xf32> to vector<16x64xbf16>
    %c0_9 = arith.constant 0 : index
    %c0_10 = arith.constant 0 : index
    %13 = vector.load %arg5[%c0_9, %c0_10] : memref<64x32xbf16, #tpu.memory_space<vmem>>, vector<64x32xbf16>
    %cst_11 = arith.constant dense<0.000000e+00> : vector<16x32xf32>
    %14 = tpu.matmul %12, %13, %cst_11 {dimension_numbers = #tpu.dot_dimension_numbers<[1], [0], [0], [1], [0, 0, 1, 1], [], []>} : vector<16x64xbf16>, vector<64x32xbf16>, vector<16x32xf32> -> vector<16x32xf32>
    %15 = arith.addf %11, %14 : vector<16x32xf32>
    %c0_12 = arith.constant 0 : index
    %c0_13 = arith.constant 0 : index
    %16 = vector.load %arg8[%c0_12, %c0_13] : memref<16x32xf32, #tpu.memory_space<vmem>>, vector<16x32xf32>
    tpu.vector_store %arg8[%c0_12, %c0_13], %15 {strides = array<i32>} : memref<16x32xf32, #tpu.memory_space<vmem>>, vector<16x32xf32>,
    %c0_i32_14 = arith.constant 0 : i32
    %17 = arith.cmpi eq, %arg1, %c0_i32_14 : i32
    %18 = arith.extui %17 : i1 to i32
    %c0_i32_15 = arith.constant 0 : i32
    %19 = arith.cmpi ne, %18, %c0_i32_15 : i32
    scf.if %19 {
      %c0_16 = arith.constant 0 : index
      %c0_17 = arith.constant 0 : index
      %20 = vector.load %arg8[%c0_16, %c0_17] : memref<16x32xf32, #tpu.memory_space<vmem>>, vector<16x32xf32>
      %c0_18 = arith.constant 0 : index
      %c0_19 = arith.constant 0 : index
      %21 = vector.load %arg6[%c0_18, %c0_19] : memref<1x32xf32, #tpu.memory_space<vmem>>, vector<1x32xf32>
      %22 = vector.broadcast %21 : vector<1x32xf32> to vector<16x32xf32>
      %23 = arith.addf %20, %22 : vector<16x32xf32>
      %24 = arith.truncf %23 : vector<16x32xf32> to vector<16x32xbf16>
      %c0_20 = arith.constant 0 : index
      %c0_21 = arith.constant 0 : index
      %25 = vector.load %arg7[%c0_20, %c0_21] : memref<16x32xbf16, #tpu.memory_space<vmem>>, vector<16x32xbf16>
      tpu.vector_store %arg7[%c0_20, %c0_21], %24 {strides = array<i32>} : memref<16x32xbf16, #tpu.memory_space<vmem>>, vector<16x32xbf16>,
    } else {
    }
    return
  }
  func.func @transform_0(%arg0: i32, %arg1: i32) -> (i32, i32) {
    %c0_i32 = arith.constant 0 : i32
    %c0_i32_0 = arith.constant 0 : i32
    return %arg0, %c0_i32 : i32, i32
  }
  func.func @transform_1(%arg0: i32, %arg1: i32) -> (i32, i32) {
    %c0_i32 = arith.constant 0 : i32
    %c0_i32_0 = arith.constant 0 : i32
    return %c0_i32, %arg1 : i32, i32
  }
  func.func @transform_2(%arg0: i32, %arg1: i32) -> (i32, i32) {
    %c0_i32 = arith.constant 0 : i32
    %c0_i32_0 = arith.constant 0 : i32
    return %c0_i32, %arg1 : i32, i32
  }
  func.func @transform_3(%arg0: i32, %arg1: i32) -> (i32, i32) {
    %c0_i32 = arith.constant 0 : i32
    %c0_i32_0 = arith.constant 0 : i32
    return %arg1, %c0_i32 : i32, i32
  }
  func.func @transform_4(%arg0: i32, %arg1: i32) -> (i32, i32) {
    %c0_i32 = arith.constant 0 : i32
    %c0_i32_0 = arith.constant 0 : i32
    %c0_i32_1 = arith.constant 0 : i32
    return %c0_i32, %c0_i32_0 : i32, i32
  }
  func.func @transform_5(%arg0: i32, %arg1: i32) -> (i32, i32) {
    %c0_i32 = arith.constant 0 : i32
    %c0_i32_0 = arith.constant 0 : i32
    return %arg0, %c0_i32 : i32, i32
  }
}

module attributes {stable_mosaic.version = 11 : i64} {
  func.func @_linear_kernel(%arg0: i32, %arg1: i32, %arg2: i32, %arg3: memref<16x32xbf16, #tpu.memory_space<vmem>>, %arg4: memref<32x64xbf16, #tpu.memory_space<vmem>>, %arg5: memref<1x64xf32, #tpu.memory_space<vmem>>, %arg6: memref<16x64xbf16, #tpu.memory_space<vmem>>, %arg7: memref<16x64xf32, #tpu.memory_space<vmem>>) attributes {dimension_semantics = [#tpu.dimension_semantics<parallel>, #tpu.dimension_semantics<parallel>, #tpu.dimension_semantics<arbitrary>], iteration_bounds = array<i64: 1, 1, 1>, scalar_prefetch = 0 : i64, scratch_operands = 1 : i64, tpu.core_type = #tpu.core_type<tc>, window_params = [{transform_indices = @transform_0, window_bounds = array<i64: 16, 32>}, {transform_indices = @transform_1, window_bounds = array<i64: 32, 64>}, {transform_indices = @transform_2, window_bounds = array<i64: 1, 64>}, {transform_indices = @transform_3, window_bounds = array<i64: 16, 64>}]} {
    %c0_i32 = arith.constant 0 : i32
    %0 = arith.cmpi eq, %arg2, %c0_i32 : i32
    %1 = arith.extui %0 : i1 to i32
    %c0_i32_0 = arith.constant 0 : i32
    %2 = arith.cmpi ne, %1, %c0_i32_0 : i32
    scf.if %2 {
      %cst_10 = arith.constant 0.000000e+00 : f32
      %12 = vector.broadcast %cst_10 : f32 to vector<16x64xf32>
      %c0_11 = arith.constant 0 : index
      %c0_12 = arith.constant 0 : index
      %13 = vector.load %arg7[%c0_11, %c0_12] : memref<16x64xf32, #tpu.memory_space<vmem>>, vector<16x64xf32>
      tpu.vector_store %arg7[%c0_11, %c0_12], %12 {strides = array<i32>} : memref<16x64xf32, #tpu.memory_space<vmem>>, vector<16x64xf32>,
    } else {
    }
    %c0 = arith.constant 0 : index
    %c0_1 = arith.constant 0 : index
    %3 = vector.load %arg7[%c0, %c0_1] : memref<16x64xf32, #tpu.memory_space<vmem>>, vector<16x64xf32>
    %c0_2 = arith.constant 0 : index
    %c0_3 = arith.constant 0 : index
    %4 = vector.load %arg3[%c0_2, %c0_3] : memref<16x32xbf16, #tpu.memory_space<vmem>>, vector<16x32xbf16>
    %c0_4 = arith.constant 0 : index
    %c0_5 = arith.constant 0 : index
    %5 = vector.load %arg4[%c0_4, %c0_5] : memref<32x64xbf16, #tpu.memory_space<vmem>>, vector<32x64xbf16>
    %cst = arith.constant dense<0.000000e+00> : vector<16x64xf32>
    %6 = tpu.matmul %4, %5, %cst {dimension_numbers = #tpu.dot_dimension_numbers<[1], [0], [0], [1], [0, 0, 1, 1], [], []>} : vector<16x32xbf16>, vector<32x64xbf16>, vector<16x64xf32> -> vector<16x64xf32>
    %7 = arith.addf %3, %6 : vector<16x64xf32>
    %c0_6 = arith.constant 0 : index
    %c0_7 = arith.constant 0 : index
    %8 = vector.load %arg7[%c0_6, %c0_7] : memref<16x64xf32, #tpu.memory_space<vmem>>, vector<16x64xf32>
    tpu.vector_store %arg7[%c0_6, %c0_7], %7 {strides = array<i32>} : memref<16x64xf32, #tpu.memory_space<vmem>>, vector<16x64xf32>,
    %c0_i32_8 = arith.constant 0 : i32
    %9 = arith.cmpi eq, %arg2, %c0_i32_8 : i32
    %10 = arith.extui %9 : i1 to i32
    %c0_i32_9 = arith.constant 0 : i32
    %11 = arith.cmpi ne, %10, %c0_i32_9 : i32
    scf.if %11 {
      %c0_10 = arith.constant 0 : index
      %c0_11 = arith.constant 0 : index
      %12 = vector.load %arg7[%c0_10, %c0_11] : memref<16x64xf32, #tpu.memory_space<vmem>>, vector<16x64xf32>
      %c0_12 = arith.constant 0 : index
      %c0_13 = arith.constant 0 : index
      %13 = vector.load %arg5[%c0_12, %c0_13] : memref<1x64xf32, #tpu.memory_space<vmem>>, vector<1x64xf32>
      %14 = vector.broadcast %13 : vector<1x64xf32> to vector<16x64xf32>
      %15 = arith.addf %12, %14 : vector<16x64xf32>
      %16 = arith.truncf %15 : vector<16x64xf32> to vector<16x64xbf16>
      %c0_14 = arith.constant 0 : index
      %c0_15 = arith.constant 0 : index
      %17 = vector.load %arg6[%c0_14, %c0_15] : memref<16x64xbf16, #tpu.memory_space<vmem>>, vector<16x64xbf16>
      tpu.vector_store %arg6[%c0_14, %c0_15], %16 {strides = array<i32>} : memref<16x64xbf16, #tpu.memory_space<vmem>>, vector<16x64xbf16>,
    } else {
    }
    return
  }
  func.func @transform_0(%arg0: i32, %arg1: i32, %arg2: i32) -> (i32, i32) {
    %c0_i32 = arith.constant 0 : i32
    return %arg0, %arg2 : i32, i32
  }
  func.func @transform_1(%arg0: i32, %arg1: i32, %arg2: i32) -> (i32, i32) {
    %c0_i32 = arith.constant 0 : i32
    return %arg2, %arg1 : i32, i32
  }
  func.func @transform_2(%arg0: i32, %arg1: i32, %arg2: i32) -> (i32, i32) {
    %c0_i32 = arith.constant 0 : i32
    %c0_i32_0 = arith.constant 0 : i32
    return %c0_i32, %arg1 : i32, i32
  }
  func.func @transform_3(%arg0: i32, %arg1: i32, %arg2: i32) -> (i32, i32) {
    %c0_i32 = arith.constant 0 : i32
    return %arg0, %arg1 : i32, i32
  }
}

module attributes {stable_mosaic.version = 11 : i64} {
  func.func @_attn_kernel(%arg0: i32, %arg1: i32, %arg2: memref<1x8x32xbf16, #tpu.memory_space<vmem>>, %arg3: memref<1x8x32xbf16, #tpu.memory_space<vmem>>, %arg4: memref<1x8x32xbf16, #tpu.memory_space<vmem>>, %arg5: memref<1x1x8xf32, #tpu.memory_space<vmem>>, %arg6: memref<1x8x32xbf16, #tpu.memory_space<vmem>>, %arg7: memref<4x8x1xf32, #tpu.memory_space<vmem>>, %arg8: memref<4x8x1xf32, #tpu.memory_space<vmem>>, %arg9: memref<4x8x8xf32, #tpu.memory_space<vmem>>) attributes {dimension_semantics = [#tpu.dimension_semantics<parallel>, #tpu.dimension_semantics<arbitrary>], iteration_bounds = array<i64: 2, 1>, scalar_prefetch = 0 : i64, scratch_operands = 3 : i64, tpu.core_type = #tpu.core_type<tc>, window_params = [{transform_indices = @transform_0, window_bounds = array<i64: 1, 8, 32>}, {transform_indices = @transform_1, window_bounds = array<i64: 1, 8, 32>}, {transform_indices = @transform_2, window_bounds = array<i64: 1, 8, 32>}, {transform_indices = @transform_3, window_bounds = array<i64: 1, 1, 8>}, {transform_indices = @transform_4, window_bounds = array<i64: 1, 8, 32>}]} {
    %c0_i32 = arith.constant 0 : i32
    %0 = arith.cmpi eq, %arg1, %c0_i32 : i32
    %1 = arith.extui %0 : i1 to i32
    %c0_i32_0 = arith.constant 0 : i32
    %2 = arith.cmpi ne, %1, %c0_i32_0 : i32
    scf.if %2 {
      %cst_104 = arith.constant 0xFF800000 : f32
      %181 = vector.broadcast %cst_104 : f32 to vector<4x8x1xf32>
      %c0_105 = arith.constant 0 : index
      %c0_106 = arith.constant 0 : index
      %c0_107 = arith.constant 0 : index
      %182 = vector.load %arg7[%c0_105, %c0_106, %c0_107] : memref<4x8x1xf32, #tpu.memory_space<vmem>>, vector<4x8x1xf32>
      tpu.vector_store %arg7[%c0_105, %c0_106, %c0_107], %181 {strides = array<i32>} : memref<4x8x1xf32, #tpu.memory_space<vmem>>, vector<4x8x1xf32>,
      %cst_108 = arith.constant 0.000000e+00 : f32
      %183 = vector.broadcast %cst_108 : f32 to vector<4x8x1xf32>
      %c0_109 = arith.constant 0 : index
      %c0_110 = arith.constant 0 : index
      %c0_111 = arith.constant 0 : index
      %184 = vector.load %arg8[%c0_109, %c0_110, %c0_111] : memref<4x8x1xf32, #tpu.memory_space<vmem>>, vector<4x8x1xf32>
      tpu.vector_store %arg8[%c0_109, %c0_110, %c0_111], %183 {strides = array<i32>} : memref<4x8x1xf32, #tpu.memory_space<vmem>>, vector<4x8x1xf32>,
      %cst_112 = arith.constant 0.000000e+00 : f32
      %185 = vector.broadcast %cst_112 : f32 to vector<4x8x8xf32>
      %c0_113 = arith.constant 0 : index
      %c0_114 = arith.constant 0 : index
      %c0_115 = arith.constant 0 : index
      %186 = vector.load %arg9[%c0_113, %c0_114, %c0_115] : memref<4x8x8xf32, #tpu.memory_space<vmem>>, vector<4x8x8xf32>
      tpu.vector_store %arg9[%c0_113, %c0_114, %c0_115], %185 {strides = array<i32>} : memref<4x8x8xf32, #tpu.memory_space<vmem>>, vector<4x8x8xf32>,
    } else {
    }
    %c0 = arith.constant 0 : index
    %c0_1 = arith.constant 0 : index
    %c0_2 = arith.constant 0 : index
    %3 = vector.load %arg2[%c0, %c0_1, %c0_2] : memref<1x8x32xbf16, #tpu.memory_space<vmem>>, vector<1x8x32xbf16>
    %4 = vector.shape_cast %3 : vector<1x8x32xbf16> to vector<8x32xbf16>
    %c0_3 = arith.constant 0 : index
    %c0_4 = arith.constant 0 : index
    %c0_5 = arith.constant 0 : index
    %5 = vector.load %arg3[%c0_3, %c0_4, %c0_5] : memref<1x8x32xbf16, #tpu.memory_space<vmem>>, vector<1x8x32xbf16>
    %6 = vector.shape_cast %5 : vector<1x8x32xbf16> to vector<8x32xbf16>
    %c0_6 = arith.constant 0 : index
    %c0_7 = arith.constant 0 : index
    %c0_8 = arith.constant 0 : index
    %7 = vector.load %arg4[%c0_6, %c0_7, %c0_8] : memref<1x8x32xbf16, #tpu.memory_space<vmem>>, vector<1x8x32xbf16>
    %8 = vector.shape_cast %7 : vector<1x8x32xbf16> to vector<8x32xbf16>
    %c0_9 = arith.constant 0 : index
    %c0_10 = arith.constant 0 : index
    %c0_11 = arith.constant 0 : index
    %9 = vector.load %arg5[%c0_9, %c0_10, %c0_11] : memref<1x1x8xf32, #tpu.memory_space<vmem>>, vector<1x1x8xf32>
    %10 = vector.shape_cast %9 : vector<1x1x8xf32> to vector<1x8xf32>
    %11 = tpu.iota {dimensions = array<i32: 0>} : vector<8x8xi32>
    %12 = tpu.iota {dimensions = array<i32: 1>} : vector<8x8xi32>
    %c8_i32 = arith.constant 8 : i32
    %13 = arith.muli %arg1, %c8_i32 : i32
    %14 = vector.broadcast %13 : i32 to vector<8x8xi32>
    %15 = arith.addi %12, %14 : vector<8x8xi32>
    %16 = arith.cmpi sgt, %15, %11 : vector<8x8xi32>
    %cst = arith.constant -1.000000e+09 : f32
    %cst_12 = arith.constant 0.000000e+00 : f32
    %17 = vector.broadcast %cst : f32 to vector<8x8xf32>
    %18 = vector.broadcast %cst_12 : f32 to vector<8x8xf32>
    %19 = arith.select %16, %17, %18 : vector<8x8xi1>, vector<8x8xf32>
    %20 = vector.broadcast %10 : vector<1x8xf32> to vector<8x8xf32>
    %21 = arith.addf %20, %19 : vector<8x8xf32>
    %22 = vector.extract_strided_slice %4 {offsets = [0, 0], sizes = [8, 8], strides = [1, 1]} : vector<8x32xbf16> to vector<8x8xbf16>
    %23 = vector.extract_strided_slice %6 {offsets = [0, 0], sizes = [8, 8], strides = [1, 1]} : vector<8x32xbf16> to vector<8x8xbf16>
    %24 = vector.extract_strided_slice %8 {offsets = [0, 0], sizes = [8, 8], strides = [1, 1]} : vector<8x32xbf16> to vector<8x8xbf16>
    %cst_13 = arith.constant dense<0.000000e+00> : vector<8x8xf32>
    %25 = tpu.matmul %22, %23, %cst_13 {dimension_numbers = #tpu.dot_dimension_numbers<[1], [1], [0], [0], [0, 0, 1, 0], [], []>} : vector<8x8xbf16>, vector<8x8xbf16>, vector<8x8xf32> -> vector<8x8xf32>
    %cst_14 = arith.constant 0.353553385 : f32
    %26 = vector.broadcast %cst_14 : f32 to vector<8x8xf32>
    %27 = arith.mulf %25, %26 : vector<8x8xf32>
    %28 = arith.addf %27, %21 : vector<8x8xf32>
    %c0_15 = arith.constant 0 : index
    %c0_16 = arith.constant 0 : index
    %c0_17 = arith.constant 0 : index
    %29 = vector.load %arg7[%c0_15, %c0_16, %c0_17] : memref<4x8x1xf32, #tpu.memory_space<vmem>>, vector<1x8x1xf32>
    %30 = vector.shape_cast %29 : vector<1x8x1xf32> to vector<8x1xf32>
    %cst_18 = arith.constant dense<0xFF800000> : vector<8xf32>
    %31 = vector.multi_reduction <maximumf>, %28, %cst_18 [1] : vector<8x8xf32> to vector<8xf32>
    %32 = vector.shape_cast %31 : vector<8xf32> to vector<8x1xf32>
    %33 = arith.maximumf %30, %32 : vector<8x1xf32>
    %34 = arith.subf %30, %33 : vector<8x1xf32>
    %35 = math.exp %34 : vector<8x1xf32>
    %36 = vector.broadcast %33 : vector<8x1xf32> to vector<8x8xf32>
    %37 = arith.subf %28, %36 : vector<8x8xf32>
    %38 = math.exp %37 : vector<8x8xf32>
    %c0_19 = arith.constant 0 : index
    %c0_20 = arith.constant 0 : index
    %c0_21 = arith.constant 0 : index
    %39 = vector.load %arg8[%c0_19, %c0_20, %c0_21] : memref<4x8x1xf32, #tpu.memory_space<vmem>>, vector<1x8x1xf32>
    %40 = vector.shape_cast %39 : vector<1x8x1xf32> to vector<8x1xf32>
    %41 = arith.mulf %35, %40 : vector<8x1xf32>
    %cst_22 = arith.constant dense<0.000000e+00> : vector<8xf32>
    %42 = vector.multi_reduction <add>, %38, %cst_22 [1] : vector<8x8xf32> to vector<8xf32>
    %43 = vector.shape_cast %42 : vector<8xf32> to vector<8x1xf32>
    %44 = arith.addf %41, %43 : vector<8x1xf32>
    %c0_23 = arith.constant 0 : index
    %c0_24 = arith.constant 0 : index
    %c0_25 = arith.constant 0 : index
    %45 = vector.load %arg8[%c0_23, %c0_24, %c0_25] : memref<4x8x1xf32, #tpu.memory_space<vmem>>, vector<1x8x1xf32>
    %46 = vector.shape_cast %45 : vector<1x8x1xf32> to vector<8x1xf32>
    %47 = vector.shape_cast %44 : vector<8x1xf32> to vector<1x8x1xf32>
    tpu.vector_store %arg8[%c0_23, %c0_24, %c0_25], %47 {strides = array<i32>} : memref<4x8x1xf32, #tpu.memory_space<vmem>>, vector<1x8x1xf32>,
    %c0_26 = arith.constant 0 : index
    %c0_27 = arith.constant 0 : index
    %c0_28 = arith.constant 0 : index
    %48 = vector.load %arg9[%c0_26, %c0_27, %c0_28] : memref<4x8x8xf32, #tpu.memory_space<vmem>>, vector<1x8x8xf32>
    %49 = vector.shape_cast %48 : vector<1x8x8xf32> to vector<8x8xf32>
    %50 = vector.broadcast %35 : vector<8x1xf32> to vector<8x8xf32>
    %51 = arith.mulf %50, %49 : vector<8x8xf32>
    %52 = arith.truncf %38 : vector<8x8xf32> to vector<8x8xbf16>
    %cst_29 = arith.constant dense<0.000000e+00> : vector<8x8xf32>
    %53 = tpu.matmul %52, %24, %cst_29 {dimension_numbers = #tpu.dot_dimension_numbers<[1], [0], [0], [1], [0, 0, 1, 1], [], []>} : vector<8x8xbf16>, vector<8x8xbf16>, vector<8x8xf32> -> vector<8x8xf32>
    %54 = arith.addf %51, %53 : vector<8x8xf32>
    %c0_30 = arith.constant 0 : index
    %c0_31 = arith.constant 0 : index
    %c0_32 = arith.constant 0 : index
    %55 = vector.load %arg9[%c0_30, %c0_31, %c0_32] : memref<4x8x8xf32, #tpu.memory_space<vmem>>, vector<1x8x8xf32>
    %56 = vector.shape_cast %55 : vector<1x8x8xf32> to vector<8x8xf32>
    %57 = vector.shape_cast %54 : vector<8x8xf32> to vector<1x8x8xf32>
    tpu.vector_store %arg9[%c0_30, %c0_31, %c0_32], %57 {strides = array<i32>} : memref<4x8x8xf32, #tpu.memory_space<vmem>>, vector<1x8x8xf32>,
    %c0_33 = arith.constant 0 : index
    %c0_34 = arith.constant 0 : index
    %c0_35 = arith.constant 0 : index
    %58 = vector.load %arg7[%c0_33, %c0_34, %c0_35] : memref<4x8x1xf32, #tpu.memory_space<vmem>>, vector<1x8x1xf32>
    %59 = vector.shape_cast %58 : vector<1x8x1xf32> to vector<8x1xf32>
    %60 = vector.shape_cast %33 : vector<8x1xf32> to vector<1x8x1xf32>
    tpu.vector_store %arg7[%c0_33, %c0_34, %c0_35], %60 {strides = array<i32>} : memref<4x8x1xf32, #tpu.memory_space<vmem>>, vector<1x8x1xf32>,
    %61 = vector.extract_strided_slice %4 {offsets = [0, 8], sizes = [8, 8], strides = [1, 1]} : vector<8x32xbf16> to vector<8x8xbf16>
    %62 = vector.extract_strided_slice %6 {offsets = [0, 8], sizes = [8, 8], strides = [1, 1]} : vector<8x32xbf16> to vector<8x8xbf16>
    %63 = vector.extract_strided_slice %8 {offsets = [0, 8], sizes = [8, 8], strides = [1, 1]} : vector<8x32xbf16> to vector<8x8xbf16>
    %cst_36 = arith.constant dense<0.000000e+00> : vector<8x8xf32>
    %64 = tpu.matmul %61, %62, %cst_36 {dimension_numbers = #tpu.dot_dimension_numbers<[1], [1], [0], [0], [0, 0, 1, 0], [], []>} : vector<8x8xbf16>, vector<8x8xbf16>, vector<8x8xf32> -> vector<8x8xf32>
    %cst_37 = arith.constant 0.353553385 : f32
    %65 = vector.broadcast %cst_37 : f32 to vector<8x8xf32>
    %66 = arith.mulf %64, %65 : vector<8x8xf32>
    %67 = arith.addf %66, %21 : vector<8x8xf32>
    %c1 = arith.constant 1 : index
    %c0_38 = arith.constant 0 : index
    %c0_39 = arith.constant 0 : index
    %68 = vector.load %arg7[%c1, %c0_38, %c0_39] : memref<4x8x1xf32, #tpu.memory_space<vmem>>, vector<1x8x1xf32>
    %69 = vector.shape_cast %68 : vector<1x8x1xf32> to vector<8x1xf32>
    %cst_40 = arith.constant dense<0xFF800000> : vector<8xf32>
    %70 = vector.multi_reduction <maximumf>, %67, %cst_40 [1] : vector<8x8xf32> to vector<8xf32>
    %71 = vector.shape_cast %70 : vector<8xf32> to vector<8x1xf32>
    %72 = arith.maximumf %69, %71 : vector<8x1xf32>
    %73 = arith.subf %69, %72 : vector<8x1xf32>
    %74 = math.exp %73 : vector<8x1xf32>
    %75 = vector.broadcast %72 : vector<8x1xf32> to vector<8x8xf32>
    %76 = arith.subf %67, %75 : vector<8x8xf32>
    %77 = math.exp %76 : vector<8x8xf32>
    %c1_41 = arith.constant 1 : index
    %c0_42 = arith.constant 0 : index
    %c0_43 = arith.constant 0 : index
    %78 = vector.load %arg8[%c1_41, %c0_42, %c0_43] : memref<4x8x1xf32, #tpu.memory_space<vmem>>, vector<1x8x1xf32>
    %79 = vector.shape_cast %78 : vector<1x8x1xf32> to vector<8x1xf32>
    %80 = arith.mulf %74, %79 : vector<8x1xf32>
    %cst_44 = arith.constant dense<0.000000e+00> : vector<8xf32>
    %81 = vector.multi_reduction <add>, %77, %cst_44 [1] : vector<8x8xf32> to vector<8xf32>
    %82 = vector.shape_cast %81 : vector<8xf32> to vector<8x1xf32>
    %83 = arith.addf %80, %82 : vector<8x1xf32>
    %c1_45 = arith.constant 1 : index
    %c0_46 = arith.constant 0 : index
    %c0_47 = arith.constant 0 : index
    %84 = vector.load %arg8[%c1_45, %c0_46, %c0_47] : memref<4x8x1xf32, #tpu.memory_space<vmem>>, vector<1x8x1xf32>
    %85 = vector.shape_cast %84 : vector<1x8x1xf32> to vector<8x1xf32>
    %86 = vector.shape_cast %83 : vector<8x1xf32> to vector<1x8x1xf32>
    tpu.vector_store %arg8[%c1_45, %c0_46, %c0_47], %86 {strides = array<i32>} : memref<4x8x1xf32, #tpu.memory_space<vmem>>, vector<1x8x1xf32>,
    %c1_48 = arith.constant 1 : index
    %c0_49 = arith.constant 0 : index
    %c0_50 = arith.constant 0 : index
    %87 = vector.load %arg9[%c1_48, %c0_49, %c0_50] : memref<4x8x8xf32, #tpu.memory_space<vmem>>, vector<1x8x8xf32>
    %88 = vector.shape_cast %87 : vector<1x8x8xf32> to vector<8x8xf32>
    %89 = vector.broadcast %74 : vector<8x1xf32> to vector<8x8xf32>
    %90 = arith.mulf %89, %88 : vector<8x8xf32>
    %91 = arith.truncf %77 : vector<8x8xf32> to vector<8x8xbf16>
    %cst_51 = arith.constant dense<0.000000e+00> : vector<8x8xf32>
    %92 = tpu.matmul %91, %63, %cst_51 {dimension_numbers = #tpu.dot_dimension_numbers<[1], [0], [0], [1], [0, 0, 1, 1], [], []>} : vector<8x8xbf16>, vector<8x8xbf16>, vector<8x8xf32> -> vector<8x8xf32>
    %93 = arith.addf %90, %92 : vector<8x8xf32>
    %c1_52 = arith.constant 1 : index
    %c0_53 = arith.constant 0 : index
    %c0_54 = arith.constant 0 : index
    %94 = vector.load %arg9[%c1_52, %c0_53, %c0_54] : memref<4x8x8xf32, #tpu.memory_space<vmem>>, vector<1x8x8xf32>
    %95 = vector.shape_cast %94 : vector<1x8x8xf32> to vector<8x8xf32>
    %96 = vector.shape_cast %93 : vector<8x8xf32> to vector<1x8x8xf32>
    tpu.vector_store %arg9[%c1_52, %c0_53, %c0_54], %96 {strides = array<i32>} : memref<4x8x8xf32, #tpu.memory_space<vmem>>, vector<1x8x8xf32>,
    %c1_55 = arith.constant 1 : index
    %c0_56 = arith.constant 0 : index
    %c0_57 = arith.constant 0 : index
    %97 = vector.load %arg7[%c1_55, %c0_56, %c0_57] : memref<4x8x1xf32, #tpu.memory_space<vmem>>, vector<1x8x1xf32>
    %98 = vector.shape_cast %97 : vector<1x8x1xf32> to vector<8x1xf32>
    %99 = vector.shape_cast %72 : vector<8x1xf32> to vector<1x8x1xf32>
    tpu.vector_store %arg7[%c1_55, %c0_56, %c0_57], %99 {strides = array<i32>} : memref<4x8x1xf32, #tpu.memory_space<vmem>>, vector<1x8x1xf32>,
    %100 = vector.extract_strided_slice %4 {offsets = [0, 16], sizes = [8, 8], strides = [1, 1]} : vector<8x32xbf16> to vector<8x8xbf16>
    %101 = vector.extract_strided_slice %6 {offsets = [0, 16], sizes = [8, 8], strides = [1, 1]} : vector<8x32xbf16> to vector<8x8xbf16>
    %102 = vector.extract_strided_slice %8 {offsets = [0, 16], sizes = [8, 8], strides = [1, 1]} : vector<8x32xbf16> to vector<8x8xbf16>
    %cst_58 = arith.constant dense<0.000000e+00> : vector<8x8xf32>
    %103 = tpu.matmul %100, %101, %cst_58 {dimension_numbers = #tpu.dot_dimension_numbers<[1], [1], [0], [0], [0, 0, 1, 0], [], []>} : vector<8x8xbf16>, vector<8x8xbf16>, vector<8x8xf32> -> vector<8x8xf32>
    %cst_59 = arith.constant 0.353553385 : f32
    %104 = vector.broadcast %cst_59 : f32 to vector<8x8xf32>
    %105 = arith.mulf %103, %104 : vector<8x8xf32>
    %106 = arith.addf %105, %21 : vector<8x8xf32>
    %c2 = arith.constant 2 : index
    %c0_60 = arith.constant 0 : index
    %c0_61 = arith.constant 0 : index
    %107 = vector.load %arg7[%c2, %c0_60, %c0_61] : memref<4x8x1xf32, #tpu.memory_space<vmem>>, vector<1x8x1xf32>
    %108 = vector.shape_cast %107 : vector<1x8x1xf32> to vector<8x1xf32>
    %cst_62 = arith.constant dense<0xFF800000> : vector<8xf32>
    %109 = vector.multi_reduction <maximumf>, %106, %cst_62 [1] : vector<8x8xf32> to vector<8xf32>
    %110 = vector.shape_cast %109 : vector<8xf32> to vector<8x1xf32>
    %111 = arith.maximumf %108, %110 : vector<8x1xf32>
    %112 = arith.subf %108, %111 : vector<8x1xf32>
    %113 = math.exp %112 : vector<8x1xf32>
    %114 = vector.broadcast %111 : vector<8x1xf32> to vector<8x8xf32>
    %115 = arith.subf %106, %114 : vector<8x8xf32>
    %116 = math.exp %115 : vector<8x8xf32>
    %c2_63 = arith.constant 2 : index
    %c0_64 = arith.constant 0 : index
    %c0_65 = arith.constant 0 : index
    %117 = vector.load %arg8[%c2_63, %c0_64, %c0_65] : memref<4x8x1xf32, #tpu.memory_space<vmem>>, vector<1x8x1xf32>
    %118 = vector.shape_cast %117 : vector<1x8x1xf32> to vector<8x1xf32>
    %119 = arith.mulf %113, %118 : vector<8x1xf32>
    %cst_66 = arith.constant dense<0.000000e+00> : vector<8xf32>
    %120 = vector.multi_reduction <add>, %116, %cst_66 [1] : vector<8x8xf32> to vector<8xf32>
    %121 = vector.shape_cast %120 : vector<8xf32> to vector<8x1xf32>
    %122 = arith.addf %119, %121 : vector<8x1xf32>
    %c2_67 = arith.constant 2 : index
    %c0_68 = arith.constant 0 : index
    %c0_69 = arith.constant 0 : index
    %123 = vector.load %arg8[%c2_67, %c0_68, %c0_69] : memref<4x8x1xf32, #tpu.memory_space<vmem>>, vector<1x8x1xf32>
    %124 = vector.shape_cast %123 : vector<1x8x1xf32> to vector<8x1xf32>
    %125 = vector.shape_cast %122 : vector<8x1xf32> to vector<1x8x1xf32>
    tpu.vector_store %arg8[%c2_67, %c0_68, %c0_69], %125 {strides = array<i32>} : memref<4x8x1xf32, #tpu.memory_space<vmem>>, vector<1x8x1xf32>,
    %c2_70 = arith.constant 2 : index
    %c0_71 = arith.constant 0 : index
    %c0_72 = arith.constant 0 : index
    %126 = vector.load %arg9[%c2_70, %c0_71, %c0_72] : memref<4x8x8xf32, #tpu.memory_space<vmem>>, vector<1x8x8xf32>
    %127 = vector.shape_cast %126 : vector<1x8x8xf32> to vector<8x8xf32>
    %128 = vector.broadcast %113 : vector<8x1xf32> to vector<8x8xf32>
    %129 = arith.mulf %128, %127 : vector<8x8xf32>
    %130 = arith.truncf %116 : vector<8x8xf32> to vector<8x8xbf16>
    %cst_73 = arith.constant dense<0.000000e+00> : vector<8x8xf32>
    %131 = tpu.matmul %130, %102, %cst_73 {dimension_numbers = #tpu.dot_dimension_numbers<[1], [0], [0], [1], [0, 0, 1, 1], [], []>} : vector<8x8xbf16>, vector<8x8xbf16>, vector<8x8xf32> -> vector<8x8xf32>
    %132 = arith.addf %129, %131 : vector<8x8xf32>
    %c2_74 = arith.constant 2 : index
    %c0_75 = arith.constant 0 : index
    %c0_76 = arith.constant 0 : index
    %133 = vector.load %arg9[%c2_74, %c0_75, %c0_76] : memref<4x8x8xf32, #tpu.memory_space<vmem>>, vector<1x8x8xf32>
    %134 = vector.shape_cast %133 : vector<1x8x8xf32> to vector<8x8xf32>
    %135 = vector.shape_cast %132 : vector<8x8xf32> to vector<1x8x8xf32>
    tpu.vector_store %arg9[%c2_74, %c0_75, %c0_76], %135 {strides = array<i32>} : memref<4x8x8xf32, #tpu.memory_space<vmem>>, vector<1x8x8xf32>,
    %c2_77 = arith.constant 2 : index
    %c0_78 = arith.constant 0 : index
    %c0_79 = arith.constant 0 : index
    %136 = vector.load %arg7[%c2_77, %c0_78, %c0_79] : memref<4x8x1xf32, #tpu.memory_space<vmem>>, vector<1x8x1xf32>
    %137 = vector.shape_cast %136 : vector<1x8x1xf32> to vector<8x1xf32>
    %138 = vector.shape_cast %111 : vector<8x1xf32> to vector<1x8x1xf32>
    tpu.vector_store %arg7[%c2_77, %c0_78, %c0_79], %138 {strides = array<i32>} : memref<4x8x1xf32, #tpu.memory_space<vmem>>, vector<1x8x1xf32>,
    %139 = vector.extract_strided_slice %4 {offsets = [0, 24], sizes = [8, 8], strides = [1, 1]} : vector<8x32xbf16> to vector<8x8xbf16>
    %140 = vector.extract_strided_slice %6 {offsets = [0, 24], sizes = [8, 8], strides = [1, 1]} : vector<8x32xbf16> to vector<8x8xbf16>
    %141 = vector.extract_strided_slice %8 {offsets = [0, 24], sizes = [8, 8], strides = [1, 1]} : vector<8x32xbf16> to vector<8x8xbf16>
    %cst_80 = arith.constant dense<0.000000e+00> : vector<8x8xf32>
    %142 = tpu.matmul %139, %140, %cst_80 {dimension_numbers = #tpu.dot_dimension_numbers<[1], [1], [0], [0], [0, 0, 1, 0], [], []>} : vector<8x8xbf16>, vector<8x8xbf16>, vector<8x8xf32> -> vector<8x8xf32>
    %cst_81 = arith.constant 0.353553385 : f32
    %143 = vector.broadcast %cst_81 : f32 to vector<8x8xf32>
    %144 = arith.mulf %142, %143 : vector<8x8xf32>
    %145 = arith.addf %144, %21 : vector<8x8xf32>
    %c3 = arith.constant 3 : index
    %c0_82 = arith.constant 0 : index
    %c0_83 = arith.constant 0 : index
    %146 = vector.load %arg7[%c3, %c0_82, %c0_83] : memref<4x8x1xf32, #tpu.memory_space<vmem>>, vector<1x8x1xf32>
    %147 = vector.shape_cast %146 : vector<1x8x1xf32> to vector<8x1xf32>
    %cst_84 = arith.constant dense<0xFF800000> : vector<8xf32>
    %148 = vector.multi_reduction <maximumf>, %145, %cst_84 [1] : vector<8x8xf32> to vector<8xf32>
    %149 = vector.shape_cast %148 : vector<8xf32> to vector<8x1xf32>
    %150 = arith.maximumf %147, %149 : vector<8x1xf32>
    %151 = arith.subf %147, %150 : vector<8x1xf32>
    %152 = math.exp %151 : vector<8x1xf32>
    %153 = vector.broadcast %150 : vector<8x1xf32> to vector<8x8xf32>
    %154 = arith.subf %145, %153 : vector<8x8xf32>
    %155 = math.exp %154 : vector<8x8xf32>
    %c3_85 = arith.constant 3 : index
    %c0_86 = arith.constant 0 : index
    %c0_87 = arith.constant 0 : index
    %156 = vector.load %arg8[%c3_85, %c0_86, %c0_87] : memref<4x8x1xf32, #tpu.memory_space<vmem>>, vector<1x8x1xf32>
    %157 = vector.shape_cast %156 : vector<1x8x1xf32> to vector<8x1xf32>
    %158 = arith.mulf %152, %157 : vector<8x1xf32>
    %cst_88 = arith.constant dense<0.000000e+00> : vector<8xf32>
    %159 = vector.multi_reduction <add>, %155, %cst_88 [1] : vector<8x8xf32> to vector<8xf32>
    %160 = vector.shape_cast %159 : vector<8xf32> to vector<8x1xf32>
    %161 = arith.addf %158, %160 : vector<8x1xf32>
    %c3_89 = arith.constant 3 : index
    %c0_90 = arith.constant 0 : index
    %c0_91 = arith.constant 0 : index
    %162 = vector.load %arg8[%c3_89, %c0_90, %c0_91] : memref<4x8x1xf32, #tpu.memory_space<vmem>>, vector<1x8x1xf32>
    %163 = vector.shape_cast %162 : vector<1x8x1xf32> to vector<8x1xf32>
    %164 = vector.shape_cast %161 : vector<8x1xf32> to vector<1x8x1xf32>
    tpu.vector_store %arg8[%c3_89, %c0_90, %c0_91], %164 {strides = array<i32>} : memref<4x8x1xf32, #tpu.memory_space<vmem>>, vector<1x8x1xf32>,
    %c3_92 = arith.constant 3 : index
    %c0_93 = arith.constant 0 : index
    %c0_94 = arith.constant 0 : index
    %165 = vector.load %arg9[%c3_92, %c0_93, %c0_94] : memref<4x8x8xf32, #tpu.memory_space<vmem>>, vector<1x8x8xf32>
    %166 = vector.shape_cast %165 : vector<1x8x8xf32> to vector<8x8xf32>
    %167 = vector.broadcast %152 : vector<8x1xf32> to vector<8x8xf32>
    %168 = arith.mulf %167, %166 : vector<8x8xf32>
    %169 = arith.truncf %155 : vector<8x8xf32> to vector<8x8xbf16>
    %cst_95 = arith.constant dense<0.000000e+00> : vector<8x8xf32>
    %170 = tpu.matmul %169, %141, %cst_95 {dimension_numbers = #tpu.dot_dimension_numbers<[1], [0], [0], [1], [0, 0, 1, 1], [], []>} : vector<8x8xbf16>, vector<8x8xbf16>, vector<8x8xf32> -> vector<8x8xf32>
    %171 = arith.addf %168, %170 : vector<8x8xf32>
    %c3_96 = arith.constant 3 : index
    %c0_97 = arith.constant 0 : index
    %c0_98 = arith.constant 0 : index
    %172 = vector.load %arg9[%c3_96, %c0_97, %c0_98] : memref<4x8x8xf32, #tpu.memory_space<vmem>>, vector<1x8x8xf32>
    %173 = vector.shape_cast %172 : vector<1x8x8xf32> to vector<8x8xf32>
    %174 = vector.shape_cast %171 : vector<8x8xf32> to vector<1x8x8xf32>
    tpu.vector_store %arg9[%c3_96, %c0_97, %c0_98], %174 {strides = array<i32>} : memref<4x8x8xf32, #tpu.memory_space<vmem>>, vector<1x8x8xf32>,
    %c3_99 = arith.constant 3 : index
    %c0_100 = arith.constant 0 : index
    %c0_101 = arith.constant 0 : index
    %175 = vector.load %arg7[%c3_99, %c0_100, %c0_101] : memref<4x8x1xf32, #tpu.memory_space<vmem>>, vector<1x8x1xf32>
    %176 = vector.shape_cast %175 : vector<1x8x1xf32> to vector<8x1xf32>
    %177 = vector.shape_cast %150 : vector<8x1xf32> to vector<1x8x1xf32>
    tpu.vector_store %arg7[%c3_99, %c0_100, %c0_101], %177 {strides = array<i32>} : memref<4x8x1xf32, #tpu.memory_space<vmem>>, vector<1x8x1xf32>,
    %c0_i32_102 = arith.constant 0 : i32
    %178 = arith.cmpi eq, %arg1, %c0_i32_102 : i32
    %179 = arith.extui %178 : i1 to i32
    %c0_i32_103 = arith.constant 0 : i32
    %180 = arith.cmpi ne, %179, %c0_i32_103 : i32
    scf.if %180 {
      %c0_104 = arith.constant 0 : index
      %c0_105 = arith.constant 0 : index
      %c0_106 = arith.constant 0 : index
      %181 = vector.load %arg9[%c0_104, %c0_105, %c0_106] : memref<4x8x8xf32, #tpu.memory_space<vmem>>, vector<1x8x8xf32>
      %182 = vector.shape_cast %181 : vector<1x8x8xf32> to vector<8x8xf32>
      %c0_107 = arith.constant 0 : index
      %c0_108 = arith.constant 0 : index
      %c0_109 = arith.constant 0 : index
      %183 = vector.load %arg8[%c0_107, %c0_108, %c0_109] : memref<4x8x1xf32, #tpu.memory_space<vmem>>, vector<1x8x1xf32>
      %184 = vector.shape_cast %183 : vector<1x8x1xf32> to vector<8x1xf32>
      %185 = tpu.reciprocal %184 {approx = true} : vector<8x1xf32> -> vector<8x1xf32>
      %186 = vector.broadcast %185 : vector<8x1xf32> to vector<8x8xf32>
      %187 = arith.mulf %182, %186 : vector<8x8xf32>
      %c1_110 = arith.constant 1 : index
      %c0_111 = arith.constant 0 : index
      %c0_112 = arith.constant 0 : index
      %188 = vector.load %arg9[%c1_110, %c0_111, %c0_112] : memref<4x8x8xf32, #tpu.memory_space<vmem>>, vector<1x8x8xf32>
      %189 = vector.shape_cast %188 : vector<1x8x8xf32> to vector<8x8xf32>
      %c1_113 = arith.constant 1 : index
      %c0_114 = arith.constant 0 : index
      %c0_115 = arith.constant 0 : index
      %190 = vector.load %arg8[%c1_113, %c0_114, %c0_115] : memref<4x8x1xf32, #tpu.memory_space<vmem>>, vector<1x8x1xf32>
      %191 = vector.shape_cast %190 : vector<1x8x1xf32> to vector<8x1xf32>
      %192 = tpu.reciprocal %191 {approx = true} : vector<8x1xf32> -> vector<8x1xf32>
      %193 = vector.broadcast %192 : vector<8x1xf32> to vector<8x8xf32>
      %194 = arith.mulf %189, %193 : vector<8x8xf32>
      %c2_116 = arith.constant 2 : index
      %c0_117 = arith.constant 0 : index
      %c0_118 = arith.constant 0 : index
      %195 = vector.load %arg9[%c2_116, %c0_117, %c0_118] : memref<4x8x8xf32, #tpu.memory_space<vmem>>, vector<1x8x8xf32>
      %196 = vector.shape_cast %195 : vector<1x8x8xf32> to vector<8x8xf32>
      %c2_119 = arith.constant 2 : index
      %c0_120 = arith.constant 0 : index
      %c0_121 = arith.constant 0 : index
      %197 = vector.load %arg8[%c2_119, %c0_120, %c0_121] : memref<4x8x1xf32, #tpu.memory_space<vmem>>, vector<1x8x1xf32>
      %198 = vector.shape_cast %197 : vector<1x8x1xf32> to vector<8x1xf32>
      %199 = tpu.reciprocal %198 {approx = true} : vector<8x1xf32> -> vector<8x1xf32>
      %200 = vector.broadcast %199 : vector<8x1xf32> to vector<8x8xf32>
      %201 = arith.mulf %196, %200 : vector<8x8xf32>
      %c3_122 = arith.constant 3 : index
      %c0_123 = arith.constant 0 : index
      %c0_124 = arith.constant 0 : index
      %202 = vector.load %arg9[%c3_122, %c0_123, %c0_124] : memref<4x8x8xf32, #tpu.memory_space<vmem>>, vector<1x8x8xf32>
      %203 = vector.shape_cast %202 : vector<1x8x8xf32> to vector<8x8xf32>
      %c3_125 = arith.constant 3 : index
      %c0_126 = arith.constant 0 : index
      %c0_127 = arith.constant 0 : index
      %204 = vector.load %arg8[%c3_125, %c0_126, %c0_127] : memref<4x8x1xf32, #tpu.memory_space<vmem>>, vector<1x8x1xf32>
      %205 = vector.shape_cast %204 : vector<1x8x1xf32> to vector<8x1xf32>
      %206 = tpu.reciprocal %205 {approx = true} : vector<8x1xf32> -> vector<8x1xf32>
      %207 = vector.broadcast %206 : vector<8x1xf32> to vector<8x8xf32>
      %208 = arith.mulf %203, %207 : vector<8x8xf32>
      %209 = tpu.concatenate %187, %194, %201, %208 in 1 : vector<8x8xf32>, vector<8x8xf32>, vector<8x8xf32>, vector<8x8xf32> -> vector<8x32xf32>
      %210 = arith.truncf %209 : vector<8x32xf32> to vector<8x32xbf16>
      %c0_128 = arith.constant 0 : index
      %c0_129 = arith.constant 0 : index
      %c0_130 = arith.constant 0 : index
      %211 = vector.load %arg6[%c0_128, %c0_129, %c0_130] : memref<1x8x32xbf16, #tpu.memory_space<vmem>>, vector<1x8x32xbf16>
      %212 = vector.shape_cast %211 : vector<1x8x32xbf16> to vector<8x32xbf16>
      %213 = vector.shape_cast %210 : vector<8x32xbf16> to vector<1x8x32xbf16>
      tpu.vector_store %arg6[%c0_128, %c0_129, %c0_130], %213 {strides = array<i32>} : memref<1x8x32xbf16, #tpu.memory_space<vmem>>, vector<1x8x32xbf16>,
    } else {
    }
    return
  }
  func.func @transform_0(%arg0: i32, %arg1: i32) -> (i32, i32, i32) {
    %c0_i32 = arith.constant 0 : i32
    %c0_i32_0 = arith.constant 0 : i32
    %c0_i32_1 = arith.constant 0 : i32
    return %arg0, %c0_i32, %c0_i32_0 : i32, i32, i32
  }
  func.func @transform_1(%arg0: i32, %arg1: i32) -> (i32, i32, i32) {
    %c0_i32 = arith.constant 0 : i32
    %c0_i32_0 = arith.constant 0 : i32
    return %arg0, %arg1, %c0_i32 : i32, i32, i32
  }
  func.func @transform_2(%arg0: i32, %arg1: i32) -> (i32, i32, i32) {
    %c0_i32 = arith.constant 0 : i32
    %c0_i32_0 = arith.constant 0 : i32
    return %arg0, %arg1, %c0_i32 : i32, i32, i32
  }
  func.func @transform_3(%arg0: i32, %arg1: i32) -> (i32, i32, i32) {
    %c0_i32 = arith.constant 0 : i32
    %c0_i32_0 = arith.constant 0 : i32
    return %arg0, %c0_i32, %arg1 : i32, i32, i32
  }
  func.func @transform_4(%arg0: i32, %arg1: i32) -> (i32, i32, i32) {
    %c0_i32 = arith.constant 0 : i32
    %c0_i32_0 = arith.constant 0 : i32
    %c0_i32_1 = arith.constant 0 : i32
    return %arg0, %c0_i32, %c0_i32_0 : i32, i32, i32
  }
}

module attributes {stable_mosaic.version = 11 : i64} {
  func.func @_linear_kernel(%arg0: i32, %arg1: i32, %arg2: i32, %arg3: memref<16x32xbf16, #tpu.memory_space<vmem>>, %arg4: memref<32x16xbf16, #tpu.memory_space<vmem>>, %arg5: memref<1x16xf32, #tpu.memory_space<vmem>>, %arg6: memref<16x16xf32, #tpu.memory_space<vmem>>, %arg7: memref<16x16xf32, #tpu.memory_space<vmem>>) attributes {dimension_semantics = [#tpu.dimension_semantics<parallel>, #tpu.dimension_semantics<parallel>, #tpu.dimension_semantics<arbitrary>], iteration_bounds = array<i64: 1, 1, 1>, scalar_prefetch = 0 : i64, scratch_operands = 1 : i64, tpu.core_type = #tpu.core_type<tc>, window_params = [{transform_indices = @transform_0, window_bounds = array<i64: 16, 32>}, {transform_indices = @transform_1, window_bounds = array<i64: 32, 16>}, {transform_indices = @transform_2, window_bounds = array<i64: 1, 16>}, {transform_indices = @transform_3, window_bounds = array<i64: 16, 16>}]} {
    %c0_i32 = arith.constant 0 : i32
    %0 = arith.cmpi eq, %arg2, %c0_i32 : i32
    %1 = arith.extui %0 : i1 to i32
    %c0_i32_0 = arith.constant 0 : i32
    %2 = arith.cmpi ne, %1, %c0_i32_0 : i32
    scf.if %2 {
      %cst_10 = arith.constant 0.000000e+00 : f32
      %12 = vector.broadcast %cst_10 : f32 to vector<16x16xf32>
      %c0_11 = arith.constant 0 : index
      %c0_12 = arith.constant 0 : index
      %13 = vector.load %arg7[%c0_11, %c0_12] : memref<16x16xf32, #tpu.memory_space<vmem>>, vector<16x16xf32>
      tpu.vector_store %arg7[%c0_11, %c0_12], %12 {strides = array<i32>} : memref<16x16xf32, #tpu.memory_space<vmem>>, vector<16x16xf32>,
    } else {
    }
    %c0 = arith.constant 0 : index
    %c0_1 = arith.constant 0 : index
    %3 = vector.load %arg7[%c0, %c0_1] : memref<16x16xf32, #tpu.memory_space<vmem>>, vector<16x16xf32>
    %c0_2 = arith.constant 0 : index
    %c0_3 = arith.constant 0 : index
    %4 = vector.load %arg3[%c0_2, %c0_3] : memref<16x32xbf16, #tpu.memory_space<vmem>>, vector<16x32xbf16>
    %c0_4 = arith.constant 0 : index
    %c0_5 = arith.constant 0 : index
    %5 = vector.load %arg4[%c0_4, %c0_5] : memref<32x16xbf16, #tpu.memory_space<vmem>>, vector<32x16xbf16>
    %cst = arith.constant dense<0.000000e+00> : vector<16x16xf32>
    %6 = tpu.matmul %4, %5, %cst {dimension_numbers = #tpu.dot_dimension_numbers<[1], [0], [0], [1], [0, 0, 1, 1], [], []>} : vector<16x32xbf16>, vector<32x16xbf16>, vector<16x16xf32> -> vector<16x16xf32>
    %7 = arith.addf %3, %6 : vector<16x16xf32>
    %c0_6 = arith.constant 0 : index
    %c0_7 = arith.constant 0 : index
    %8 = vector.load %arg7[%c0_6, %c0_7] : memref<16x16xf32, #tpu.memory_space<vmem>>, vector<16x16xf32>
    tpu.vector_store %arg7[%c0_6, %c0_7], %7 {strides = array<i32>} : memref<16x16xf32, #tpu.memory_space<vmem>>, vector<16x16xf32>,
    %c0_i32_8 = arith.constant 0 : i32
    %9 = arith.cmpi eq, %arg2, %c0_i32_8 : i32
    %10 = arith.extui %9 : i1 to i32
    %c0_i32_9 = arith.constant 0 : i32
    %11 = arith.cmpi ne, %10, %c0_i32_9 : i32
    scf.if %11 {
      %c0_10 = arith.constant 0 : index
      %c0_11 = arith.constant 0 : index
      %12 = vector.load %arg7[%c0_10, %c0_11] : memref<16x16xf32, #tpu.memory_space<vmem>>, vector<16x16xf32>
      %c0_12 = arith.constant 0 : index
      %c0_13 = arith.constant 0 : index
      %13 = vector.load %arg5[%c0_12, %c0_13] : memref<1x16xf32, #tpu.memory_space<vmem>>, vector<1x16xf32>
      %14 = vector.broadcast %13 : vector<1x16xf32> to vector<16x16xf32>
      %15 = arith.addf %12, %14 : vector<16x16xf32>
      %c0_14 = arith.constant 0 : index
      %c0_15 = arith.constant 0 : index
      %16 = vector.load %arg6[%c0_14, %c0_15] : memref<16x16xf32, #tpu.memory_space<vmem>>, vector<16x16xf32>
      tpu.vector_store %arg6[%c0_14, %c0_15], %15 {strides = array<i32>} : memref<16x16xf32, #tpu.memory_space<vmem>>, vector<16x16xf32>,
    } else {
    }
    return
  }
  func.func @transform_0(%arg0: i32, %arg1: i32, %arg2: i32) -> (i32, i32) {
    %c0_i32 = arith.constant 0 : i32
    return %arg0, %arg2 : i32, i32
  }
  func.func @transform_1(%arg0: i32, %arg1: i32, %arg2: i32) -> (i32, i32) {
    %c0_i32 = arith.constant 0 : i32
    return %arg2, %arg1 : i32, i32
  }
  func.func @transform_2(%arg0: i32, %arg1: i32, %arg2: i32) -> (i32, i32) {
    %c0_i32 = arith.constant 0 : i32
    %c0_i32_0 = arith.constant 0 : i32
    return %c0_i32, %arg1 : i32, i32
  }
  func.func @transform_3(%arg0: i32, %arg1: i32, %arg2: i32) -> (i32, i32) {
    %c0_i32 = arith.constant 0 : i32
    return %arg0, %arg1 : i32, i32
  }
}

</mosaic_0001>

<llo_original>
// kernel: transformer_forward.37
$region0: #{transformer_forward.37}
  #allocation0 [shape = 'u32[]', space=smem, size = 0x4, offset = 0x4, fixed_abs, tag = 'smem constant byte address 0x4 - core index']
  #allocation1 [shape = 'u32[144,128]{1,0:T(1,128)}', space=vmem, size = 0x12000, scoped, tag = 'internal scratch']
  #allocation2 [shape = 'f32[16,32]{1,0:T(8,128)}', space=vmem, size = 0x2000, scoped, tag = 'scratch operand']
  %s0 = inlined_call_operand.vmem [shape: bf16[16,32], index: 0, kind: input, shape index: {}]
  %s1 = inlined_call_operand.vmem [shape: bf16[32,32], index: 1, kind: input, shape index: {}]
  %s2 = inlined_call_operand.vmem [shape: f32[1,32], index: 2, kind: input, shape index: {}]
  %s3 = inlined_call_operand.vmem [shape: bf16[16,32], index: 3, kind: output, shape index: {}]
  %s4 = sld [smem:[#allocation0]]
  $region30: #{transformer_forward.37} parent=0
    _
  %s6 = ssub.s32 1, %s4
  %s7 = scalar_select 0, %s6, %s4
  // Predicated region
  $region2: #{transformer_forward.37} parent=0 // pred_check
    _
  $region3: #{transformer_forward.37} parent=0 // pred_check_branch
    %9 = sbr.rel (0) target = $region5
  $region4: #{transformer_forward.37} parent=0 // pred_region
    _
  $region5: #{transformer_forward.37} parent=0 // pred_fallthru
    _
  // Predicated region
  $region6: #{transformer_forward.37} parent=0 // pred_check
    _
  $region7: #{transformer_forward.37} parent=0 // pred_check_branch
    %11 = sbr.rel (0) target = $region9
  $region8: #{transformer_forward.37} parent=0 // pred_region
    _
  $region9: #{transformer_forward.37} parent=0 // pred_fallthru
    _
  // Predicated region
  $region10: #{transformer_forward.37} parent=0 // pred_check
    _
  $region11: #{transformer_forward.37} parent=0 // pred_check_branch
    %13 = sbr.rel (0) target = $region13
  $region12: #{transformer_forward.37} parent=0 // pred_region
    _
  $region13: #{transformer_forward.37} parent=0 // pred_fallthru
    _
  %p15 = scmp.eq.s32.totalorder 0, 0
  // Predicated region
  $region14: #{transformer_forward.37} parent=0 // pred_check
    %p16 = pneg %p15
  $region15: #{transformer_forward.37} parent=0 // pred_check_branch
    %18 = sbr.rel (%p16) target = $region17
  $region16: #{transformer_forward.37} parent=0 // pred_region
    %vm19 = vcmask 261120
    %20 = vst.msk [vmem:[#allocation2] sm:$0xff] %vm19, 0.0
    %21 = vst.msk [vmem:[#allocation2 + $0x8] sm:$0xff] %vm19, 0.0
  $region17: #{transformer_forward.37} parent=0 // pred_fallthru
    _
  %v22 = vld [vmem:[#allocation2] sm:$0xff]
  %v23 = vld [vmem:[#allocation2 + $0x8] sm:$0xff]
  %v24 = vld [vmem:[%s0] sm:$0xf]
  %v25 = vld [vmem:[%s0 + $0x4] sm:$0xf]
  %v26 = vld [vmem:[%s1] sm:$0xf]
  %v27 = vld [vmem:[%s1 + $0x4] sm:$0xf]
  %v28 = vld [vmem:[%s1 + $0x8] sm:$0xf]
  %v29 = vld [vmem:[%s1 + $0xc] sm:$0xf]
  %v32 = vunpack.c.l.b16 %v24
  %v33 = vunpack.c.l.b16 %v25
  %v34 = vpack.c.b16 %v33, %v32
  %v39 = vunpack.c.l.b16 %v26
  %v40 = vunpack.c.l.b16 %v27
  %v41 = vunpack.c.l.b16 %v28
  %v42 = vunpack.c.l.b16 %v29
  %v43 = vpack.c.b16 %v40, %v39
  %v44 = vpack.c.b16 %v42, %v41
  %vm47 = vcmask 261120
  %v49 = vsel %vm47, %v34, 0
  %51 = vmatprep.subr.bf16.mxu0 0
  %52 = vmatpush1.bf16.msra.mxu0 %v43
  %53 = vmatprep.subr.bf16.mxu0 0
  %54 = vmatpush1.bf16.msra.mxu0 %v44
  %55 = vmatprep.subr.bf16.mxu0 0
  %56 = vmatpush1.bf16.msra.mxu0 0
  %57 = vmatprep.subr.bf16.mxu0 0
  %58 = vmatpush1.bf16.msra.mxu0 0
  %59 = vmatprep.subr.bf16.mxu0 0
  %60 = vmatpush1.bf16.msra.mxu0 0
  %61 = vmatprep.subr.bf16.mxu0 0
  %62 = vmatpush1.bf16.msra.mxu0 0
  %63 = vmatprep.subr.bf16.mxu0 0
  %64 = vmatpush1.bf16.msra.mxu0 0
  %65 = vmatprep.subr.bf16.mxu0 0
  %66 = vmatpush1.bf16.msra.mxu0 0
  %67 = vmatprep.subr.bf16.mxu0 0
  %68 = vmatpush1.bf16.msra.mxu0 0
  %69 = vmatprep.subr.bf16.mxu0 0
  %70 = vmatpush1.bf16.msra.mxu0 0
  %71 = vmatprep.subr.bf16.mxu0 0
  %72 = vmatpush1.bf16.msra.mxu0 0
  %73 = vmatprep.subr.bf16.mxu0 0
  %74 = vmatpush1.bf16.msra.mxu0 0
  %75 = vmatprep.subr.bf16.mxu0 0
  %76 = vmatpush1.bf16.msra.mxu0 0
  %77 = vmatprep.subr.bf16.mxu0 0
  %78 = vmatpush1.bf16.msra.mxu0 0
  %79 = vmatprep.subr.bf16.mxu0 0
  %80 = vmatpush1.bf16.msra.mxu0 0
  %81 = vmatprep.subr.bf16.mxu0 0
  %82 = vmatpush1.bf16.msra.mxu0 0
  %83 = vmatprep.mubr.bf16.mxu0 0
  %84 = vmatmul.mubr.bf16.gmra.mrb[0].mxu0 %v49
  %v85 = vpop.f32.mrb[0].mxu0
  %v86 = vadd.f32 0.0, %v85
  %v87 = vpop.f32.mrb[0].mxu0
  %v88 = vpop.f32.mrb[0].mxu0
  %v89 = vadd.f32 0.0, %v88
  %v90 = vpop.f32.mrb[0].mxu0
  %91 = vdwg.mxu0
  %v92 = vadd.f32 %v22, %v86
  %v93 = vadd.f32 %v23, %v89
  %94 = vst.msk [vmem:[#allocation2] sm:$0xff] %vm47, %v92
  %95 = vst.msk [vmem:[#allocation2 + $0x8] sm:$0xff] %vm47, %v93
  // Predicated region
  $region18: #{transformer_forward.37} parent=0 // pred_check
    %p96 = pneg %p15
  $region19: #{transformer_forward.37} parent=0 // pred_check_branch
    %98 = sbr.rel (%p96) target = $region21
  $region20: #{transformer_forward.37} parent=0 // pred_region
    %v99 = vld [vmem:[#allocation2] sm:$0xff]
    %v100 = vld [vmem:[#allocation2 + $0x8] sm:$0xff]
    %v101 = vld [vmem:[%s2] sm:$0x1]
    %v103 = vlaneseq
    %v104 = vshrl.u32 %v103, 7
    %v105 = vsub.s32 0, %v104
    %v106 = vrot.slane %v101, %v105
    %v108 = vadd.f32 %v99, %v106
    %v109 = vadd.f32 %v100, %v106
    %v110 = vpack.c.bf16 %v109, %v108
    %v112 = vunpack.c.l.b16 %v110
    %v113 = vunpack.c.h.b16 %v110
    %v114 = vpack.c.b16 %v112, %v112
    %v115 = vpack.c.b16 %v113, %v113
    %vm118 = vcmask 257024
    %119 = vst.msk [vmem:[%s3] sm:$0xf] %vm118, %v114
    %120 = vst.msk [vmem:[%s3 + $0x4] sm:$0xf] %vm118, %v115
  $region21: #{transformer_forward.37} parent=0 // pred_fallthru
    _
  // Predicated region
  $region22: #{transformer_forward.37} parent=0 // pred_check
    _
  $region23: #{transformer_forward.37} parent=0 // pred_check_branch
    %122 = sbr.rel (0) target = $region25
  $region24: #{transformer_forward.37} parent=0 // pred_region
    _
  $region25: #{transformer_forward.37} parent=0 // pred_fallthru
    _
  // Predicated region
  $region26: #{transformer_forward.37} parent=0 // pred_check
    _
  $region27: #{transformer_forward.37} parent=0 // pred_check_branch
    %124 = sbr.rel (0) target = $region29
  $region28: #{transformer_forward.37} parent=0 // pred_region
    _
  $region29: #{transformer_forward.37} parent=0 // pred_fallthru
    _

// kernel: transformer_forward.38
$region0: #{transformer_forward.38}
  #allocation0 [shape = 'u32[]', space=smem, size = 0x4, offset = 0x4, fixed_abs, tag = 'smem constant byte address 0x4 - core index']
  #allocation1 [shape = 'u32[144,128]{1,0:T(1,128)}', space=vmem, size = 0x12000, scoped, tag = 'internal scratch']
  %s0 = inlined_call_operand.vmem [shape: bf16[16,32], index: 0, kind: input, shape index: {}]
  %s1 = inlined_call_operand.vmem [shape: bf16[16,32], index: 1, kind: input, shape index: {}]
  %s2 = inlined_call_operand.vmem [shape: f32[1,32], index: 2, kind: input, shape index: {}]
  %s3 = inlined_call_operand.vmem [shape: f32[1,32], index: 3, kind: input, shape index: {}]
  %s4 = inlined_call_operand.vmem [shape: bf16[16,32], index: 4, kind: output, shape index: {}]
  %s5 = sld [smem:[#allocation0]]
  $region26: #{transformer_forward.38} parent=0
    _
  %s7 = ssub.s32 1, %s5
  %s8 = scalar_select 0, %s7, %s5
  // Predicated region
  $region2: #{transformer_forward.38} parent=0 // pred_check
    _
  $region3: #{transformer_forward.38} parent=0 // pred_check_branch
    %10 = sbr.rel (0) target = $region5
  $region4: #{transformer_forward.38} parent=0 // pred_region
    _
  $region5: #{transformer_forward.38} parent=0 // pred_fallthru
    _
  // Predicated region
  $region6: #{transformer_forward.38} parent=0 // pred_check
    _
  $region7: #{transformer_forward.38} parent=0 // pred_check_branch
    %12 = sbr.rel (0) target = $region9
  $region8: #{transformer_forward.38} parent=0 // pred_region
    _
  $region9: #{transformer_forward.38} parent=0 // pred_fallthru
    _
  // Predicated region
  $region10: #{transformer_forward.38} parent=0 // pred_check
    _
  $region11: #{transformer_forward.38} parent=0 // pred_check_branch
    %14 = sbr.rel (0) target = $region13
  $region12: #{transformer_forward.38} parent=0 // pred_region
    _
  $region13: #{transformer_forward.38} parent=0 // pred_fallthru
    _
  // Predicated region
  $region14: #{transformer_forward.38} parent=0 // pred_check
    _
  $region15: #{transformer_forward.38} parent=0 // pred_check_branch
    %16 = sbr.rel (0) target = $region17
  $region16: #{transformer_forward.38} parent=0 // pred_region
    _
  $region17: #{transformer_forward.38} parent=0 // pred_fallthru
    _
  %v17 = vld [vmem:[%s0] sm:$0xf]
  %v18 = vld [vmem:[%s0 + $0x4] sm:$0xf]
  %v19 = vunpack.c.l.bf16 %v17
  %v20 = vunpack.c.l.bf16 %v18
  %v21 = vld [vmem:[%s1] sm:$0xf]
  %v22 = vld [vmem:[%s1 + $0x4] sm:$0xf]
  %v23 = vunpack.c.l.bf16 %v21
  %v24 = vunpack.c.l.bf16 %v22
  %v25 = vadd.f32 %v19, %v23
  %v26 = vadd.f32 %v20, %v24
  %vm27 = vcmask 261120
  %v28 = vsel %vm27, %v25, 0.0
  %29 = vadd.xlane.f32.xlu0 %v28
  %v30 = vpop.xlane.xlu0 %29
  %v31 = vsel %vm27, %v26, 0.0
  %32 = vadd.xlane.f32.xlu0 %v31
  %v33 = vpop.xlane.xlu0 %32
  %v34 = vrcp.pop 32.0
  %v35 = vmul.f32 %v30, %v34
  %v36 = vmul.f32 %v33, %v34
  %v37 = vsub.f32 %v25, %v35
  %v38 = vsub.f32 %v26, %v36
  %v39 = vmul.f32 %v37, %v37
  %v40 = vmul.f32 %v38, %v38
  %v41 = vsel %vm27, %v39, 0.0
  %42 = vadd.xlane.f32.xlu0 %v41
  %v43 = vpop.xlane.xlu0 %42
  %v44 = vsel %vm27, %v40, 0.0
  %45 = vadd.xlane.f32.xlu0 %v44
  %v46 = vpop.xlane.xlu0 %45
  %v47 = vmul.f32 %v43, %v34
  %v48 = vmul.f32 %v46, %v34
  %v49 = vadd.f32 %v47, 1e-05
  %v50 = vadd.f32 %v48, 1e-05
  %v51 = vrsqrt.pop %v49
  %v52 = vrsqrt.pop %v50
  %v53 = vmul.f32 %v37, %v51
  %v54 = vmul.f32 %v38, %v52
  %v55 = vld [vmem:[%s2] sm:$0x1]
  %v57 = vlaneseq
  %v58 = vshrl.u32 %v57, 7
  %v59 = vsub.s32 0, %v58
  %v60 = vrot.slane %v55, %v59
  %v62 = vmul.f32 %v53, %v60
  %v63 = vmul.f32 %v54, %v60
  %v64 = vld [vmem:[%s3] sm:$0x1]
  %v66 = vlaneseq
  %v67 = vshrl.u32 %v66, 7
  %v68 = vsub.s32 0, %v67
  %v69 = vrot.slane %v64, %v68
  %v71 = vadd.f32 %v62, %v69
  %v72 = vadd.f32 %v63, %v69
  %v73 = vpack.c.bf16 %v72, %v71
  %v75 = vunpack.c.l.b16 %v73
  %v76 = vunpack.c.h.b16 %v73
  %v77 = vpack.c.b16 %v75, %v75
  %v78 = vpack.c.b16 %v76, %v76
  %vm81 = vcmask 257024
  %82 = vst.msk [vmem:[%s4] sm:$0xf] %vm81, %v77
  %83 = vst.msk [vmem:[%s4 + $0x4] sm:$0xf] %vm81, %v78
  // Predicated region
  $region18: #{transformer_forward.38} parent=0 // pred_check
    _
  $region19: #{transformer_forward.38} parent=0 // pred_check_branch
    %85 = sbr.rel (0) target = $region21
  $region20: #{transformer_forward.38} parent=0 // pred_region
    _
  $region21: #{transformer_forward.38} parent=0 // pred_fallthru
    _
  // Predicated region
  $region22: #{transformer_forward.38} parent=0 // pred_check
    _
  $region23: #{transformer_forward.38} parent=0 // pred_check_branch
    %87 = sbr.rel (0) target = $region25
  $region24: #{transformer_forward.38} parent=0 // pred_region
    _
  $region25: #{transformer_forward.38} parent=0 // pred_fallthru
    _

// kernel: transformer_forward.35
$region0: #{transformer_forward.35}
  #allocation0 [shape = 'u32[]', space=smem, size = 0x4, offset = 0x4, fixed_abs, tag = 'smem constant byte address 0x4 - core index']
  #allocation1 [shape = 'u32[144,128]{1,0:T(1,128)}', space=vmem, size = 0x12000, scoped, tag = 'internal scratch']
  #allocation2 [shape = 'f32[16,96]{1,0:T(8,128)}', space=vmem, size = 0x2000, scoped, tag = 'scratch operand']
  %s0 = inlined_call_operand.vmem [shape: bf16[16,32], index: 0, kind: input, shape index: {}]
  %s1 = inlined_call_operand.vmem [shape: bf16[32,96], index: 1, kind: input, shape index: {}]
  %s2 = inlined_call_operand.vmem [shape: f32[1,96], index: 2, kind: input, shape index: {}]
  %s3 = inlined_call_operand.vmem [shape: bf16[16,96], index: 3, kind: output, shape index: {}]
  %s4 = sld [smem:[#allocation0]]
  $region30: #{transformer_forward.35} parent=0
    _
  %s6 = ssub.s32 1, %s4
  %s7 = scalar_select 0, %s6, %s4
  // Predicated region
  $region2: #{transformer_forward.35} parent=0 // pred_check
    _
  $region3: #{transformer_forward.35} parent=0 // pred_check_branch
    %9 = sbr.rel (0) target = $region5
  $region4: #{transformer_forward.35} parent=0 // pred_region
    _
  $region5: #{transformer_forward.35} parent=0 // pred_fallthru
    _
  // Predicated region
  $region6: #{transformer_forward.35} parent=0 // pred_check
    _
  $region7: #{transformer_forward.35} parent=0 // pred_check_branch
    %11 = sbr.rel (0) target = $region9
  $region8: #{transformer_forward.35} parent=0 // pred_region
    _
  $region9: #{transformer_forward.35} parent=0 // pred_fallthru
    _
  // Predicated region
  $region10: #{transformer_forward.35} parent=0 // pred_check
    _
  $region11: #{transformer_forward.35} parent=0 // pred_check_branch
    %13 = sbr.rel (0) target = $region13
  $region12: #{transformer_forward.35} parent=0 // pred_region
    _
  $region13: #{transformer_forward.35} parent=0 // pred_fallthru
    _
  %p15 = scmp.eq.s32.totalorder 0, 0
  // Predicated region
  $region14: #{transformer_forward.35} parent=0 // pred_check
    %p16 = pneg %p15
  $region15: #{transformer_forward.35} parent=0 // pred_check_branch
    %18 = sbr.rel (%p16) target = $region17
  $region16: #{transformer_forward.35} parent=0 // pred_region
    %vm19 = vcmask 785408
    %20 = vst.msk [vmem:[#allocation2] sm:$0xff] %vm19, 0.0
    %21 = vst.msk [vmem:[#allocation2 + $0x8] sm:$0xff] %vm19, 0.0
  $region17: #{transformer_forward.35} parent=0 // pred_fallthru
    _
  %v22 = vld [vmem:[#allocation2] sm:$0xff]
  %v23 = vld [vmem:[#allocation2 + $0x8] sm:$0xff]
  %v24 = vld [vmem:[%s0] sm:$0xf]
  %v25 = vld [vmem:[%s0 + $0x4] sm:$0xf]
  %v26 = vld [vmem:[%s1] sm:$0xf]
  %v27 = vld [vmem:[%s1 + $0x4] sm:$0xf]
  %v28 = vld [vmem:[%s1 + $0x8] sm:$0xf]
  %v29 = vld [vmem:[%s1 + $0xc] sm:$0xf]
  %v32 = vunpack.c.l.b16 %v24
  %v33 = vunpack.c.l.b16 %v25
  %v34 = vpack.c.b16 %v33, %v32
  %v39 = vunpack.c.l.b16 %v26
  %v40 = vunpack.c.l.b16 %v27
  %v41 = vunpack.c.l.b16 %v28
  %v42 = vunpack.c.l.b16 %v29
  %v43 = vpack.c.b16 %v40, %v39
  %v44 = vpack.c.b16 %v42, %v41
  %vm47 = vcmask 261120
  %v49 = vsel %vm47, %v34, 0
  %51 = vmatprep.subr.bf16.mxu0 0
  %52 = vmatpush1.bf16.msra.mxu0 %v43
  %53 = vmatprep.subr.bf16.mxu0 0
  %54 = vmatpush1.bf16.msra.mxu0 %v44
  %55 = vmatprep.subr.bf16.mxu0 0
  %56 = vmatpush1.bf16.msra.mxu0 0
  %57 = vmatprep.subr.bf16.mxu0 0
  %58 = vmatpush1.bf16.msra.mxu0 0
  %59 = vmatprep.subr.bf16.mxu0 0
  %60 = vmatpush1.bf16.msra.mxu0 0
  %61 = vmatprep.subr.bf16.mxu0 0
  %62 = vmatpush1.bf16.msra.mxu0 0
  %63 = vmatprep.subr.bf16.mxu0 0
  %64 = vmatpush1.bf16.msra.mxu0 0
  %65 = vmatprep.subr.bf16.mxu0 0
  %66 = vmatpush1.bf16.msra.mxu0 0
  %67 = vmatprep.subr.bf16.mxu0 0
  %68 = vmatpush1.bf16.msra.mxu0 0
  %69 = vmatprep.subr.bf16.mxu0 0
  %70 = vmatpush1.bf16.msra.mxu0 0
  %71 = vmatprep.subr.bf16.mxu0 0
  %72 = vmatpush1.bf16.msra.mxu0 0
  %73 = vmatprep.subr.bf16.mxu0 0
  %74 = vmatpush1.bf16.msra.mxu0 0
  %75 = vmatprep.subr.bf16.mxu0 0
  %76 = vmatpush1.bf16.msra.mxu0 0
  %77 = vmatprep.subr.bf16.mxu0 0
  %78 = vmatpush1.bf16.msra.mxu0 0
  %79 = vmatprep.subr.bf16.mxu0 0
  %80 = vmatpush1.bf16.msra.mxu0 0
  %81 = vmatprep.subr.bf16.mxu0 0
  %82 = vmatpush1.bf16.msra.mxu0 0
  %83 = vmatprep.mubr.bf16.mxu0 0
  %84 = vmatmul.mubr.bf16.gmra.mrb[0].mxu0 %v49
  %v85 = vpop.f32.mrb[0].mxu0
  %v86 = vadd.f32 0.0, %v85
  %v87 = vpop.f32.mrb[0].mxu0
  %v88 = vpop.f32.mrb[0].mxu0
  %v89 = vadd.f32 0.0, %v88
  %v90 = vpop.f32.mrb[0].mxu0
  %91 = vdwg.mxu0
  %v92 = vadd.f32 %v22, %v86
  %v93 = vadd.f32 %v23, %v89
  %vm94 = vcmask 785408
  %95 = vst.msk [vmem:[#allocation2] sm:$0xff] %vm94, %v92
  %96 = vst.msk [vmem:[#allocation2 + $0x8] sm:$0xff] %vm94, %v93
  // Predicated region
  $region18: #{transformer_forward.35} parent=0 // pred_check
    %p97 = pneg %p15
  $region19: #{transformer_forward.35} parent=0 // pred_check_branch
    %99 = sbr.rel (%p97) target = $region21
  $region20: #{transformer_forward.35} parent=0 // pred_region
    %v100 = vld [vmem:[#allocation2] sm:$0xff]
    %v101 = vld [vmem:[#allocation2 + $0x8] sm:$0xff]
    %v102 = vld [vmem:[%s2] sm:$0x1]
    %v104 = vlaneseq
    %v105 = vshrl.u32 %v104, 7
    %v106 = vsub.s32 0, %v105
    %v107 = vrot.slane %v102, %v106
    %v109 = vadd.f32 %v100, %v107
    %v110 = vadd.f32 %v101, %v107
    %v111 = vpack.c.bf16 %v110, %v109
    %v113 = vunpack.c.l.b16 %v111
    %v114 = vunpack.c.h.b16 %v111
    %v115 = vpack.c.b16 %v113, %v113
    %v116 = vpack.c.b16 %v114, %v114
    %vm119 = vcmask 781312
    %120 = vst.msk [vmem:[%s3] sm:$0xf] %vm119, %v115
    %121 = vst.msk [vmem:[%s3 + $0x4] sm:$0xf] %vm119, %v116
  $region21: #{transformer_forward.35} parent=0 // pred_fallthru
    _
  // Predicated region
  $region22: #{transformer_forward.35} parent=0 // pred_check
    _
  $region23: #{transformer_forward.35} parent=0 // pred_check_branch
    %123 = sbr.rel (0) target = $region25
  $region24: #{transformer_forward.35} parent=0 // pred_region
    _
  $region25: #{transformer_forward.35} parent=0 // pred_fallthru
    _
  // Predicated region
  $region26: #{transformer_forward.35} parent=0 // pred_check
    _
  $region27: #{transformer_forward.35} parent=0 // pred_check_branch
    %125 = sbr.rel (0) target = $region29
  $region28: #{transformer_forward.35} parent=0 // pred_region
    _
  $region29: #{transformer_forward.35} parent=0 // pred_fallthru
    _

// kernel: transformer_forward.36
$region0: #{transformer_forward.36}
  #allocation0 [shape = 'u32[]', space=smem, size = 0x4, offset = 0x4, fixed_abs, tag = 'smem constant byte address 0x4 - core index']
  #allocation1 [shape = 'u32[144,128]{1,0:T(1,128)}', space=vmem, size = 0x12000, scoped, tag = 'internal scratch']
  #allocation2 [shape = 'f32[4,8,1]{2,1,0:T(8,128)}', space=vmem, size = 0x4000, scoped, tag = 'scratch operand']
  #allocation3 [shape = 'f32[4,8,1]{2,1,0:T(8,128)}', space=vmem, size = 0x4000, scoped, tag = 'scratch operand']
  #allocation4 [shape = 'f32[4,8,8]{2,1,0:T(8,128)}', space=vmem, size = 0x4000, scoped, tag = 'scratch operand']
  %s0 = inlined_call_operand.vmem [shape: bf16[2,8,32], index: 0, kind: input, shape index: {}]
  %s1 = inlined_call_operand.vmem [shape: bf16[2,8,32], index: 1, kind: input, shape index: {}]
  %s2 = inlined_call_operand.vmem [shape: bf16[2,8,32], index: 2, kind: input, shape index: {}]
  %s3 = inlined_call_operand.vmem [shape: f32[2,1,8], index: 3, kind: input, shape index: {}]
  %s4 = inlined_call_operand.vmem [shape: bf16[2,8,32], index: 4, kind: output, shape index: {}]
  %s5 = sld [smem:[#allocation0]]
  $region57: #{transformer_forward.36} parent=0
    _
  %s7 = ssub.s32 1, %s5
  %s8 = scalar_select 0, %s7, %s5
  loop: start=0, step=1, limit=4
  $region2: #{transformer_forward.36} parent=0 // loop_pre_header
    _
  $region3: #{transformer_forward.36} parent=0 // loop_header
    %s10 = sphi 0, %s14
    %p11 = scmp.ge.s32.totalorder %s10, 4
    %s17 = sphi 0, %s29
    %s18 = sphi 0, %s25
    %s19 = sphi 0, %s17
    %s20 = sphi 0, %s18
    %s21 = sphi 0, %s19
    %s22 = sphi 0, %s20
    %s32 = sphi 0, %s34
    %s35 = sphi 0, %s32
    %s36 = sphi 0, %s35
    %s52 = sphi 0, %s36
    %s60 = sphi 0, %s62
    %s63 = sphi 0, %s60
    %s64 = sphi 0, %s63
    %s80 = sphi 0, %s64
    %s88 = sphi 0, %s90
    %s91 = sphi 0, %s88
    %s92 = sphi 0, %s91
    %s108 = sphi 0, %s92
    %s116 = sphi 0, %s118
    %s119 = sphi 0, %s116
    %s120 = sphi 0, %s119
    %s136 = sphi 0, %s120
    %s142 = sphi 0, %s144
    %s145 = sphi 0, %s142
    %s146 = sphi 0, %s145
    %s162 = sphi 0, %s146
  $region4: #{transformer_forward.36} parent=0 // loop_header_branch
    %13 = sbr.rel (%p11) target = $region8
  $region5: #{transformer_forward.36} parent=0 // loop_body
    %s15 = ssub.s32 %s10, 1
    %s16 = ssub.s32 %s10, 2
    %s23 = sadd.s32 1, %s18
    %p24 = scmp.ge.s32.totalorder %s23, 1
    %s25 = scalar_select %p24, 0, %s23
    %s26 = sadd.s32 1, %s17
    %s27 = scalar_select %p24, %s26, %s17
    %p28 = scmp.ge.s32.totalorder %s27, 2
    %s29 = scalar_select %p28, 0, %s27
    %s30 = ssub.s32 %s17, %s29
    %p31 = scmp.eq.s32.totalorder %s30, 0
    %s33 = sadd.s32 %s32, 1
    %s34 = scalar_select %p31, %s32, %s33
    %p37 = pneg %p31
    %p38 = scmp.eq.s32.totalorder %s10, 1
    %p39 = por %p37, %p38
    %p40 = scmp.ne.s32.totalorder %s32, %s35
    %p41 = scmp.eq.s32.totalorder %s10, 0
    %p42 = por %p40, %p41
    %p43 = scmp.ne.s32.totalorder %s32, %s35
    %p44 = scmp.eq.s32.totalorder %s15, 1
    %p45 = por %p43, %p44
    %p46 = scmp.ne.s32.totalorder %s35, %s36
    %p47 = scmp.eq.s32.totalorder %s15, 0
    %p48 = por %p46, %p47
    %p49 = scmp.ne.s32.totalorder %s35, %s36
    %p50 = scmp.eq.s32.totalorder %s16, 1
    %p51 = por %p49, %p50
    %p53 = scmp.ne.s32.totalorder %s36, %s52
    %p54 = scmp.eq.s32.totalorder %s16, 0
    %p55 = por %p53, %p54
    %s56 = ssub.s32 %s17, %s29
    %s57 = ssub.s32 %s18, %s25
    %s58 = sor.u32 %s56, %s57
    %p59 = scmp.eq.s32.totalorder %s58, 0
    %s61 = sadd.s32 %s60, 1
    %s62 = scalar_select %p59, %s60, %s61
    %p65 = pneg %p59
    %p66 = scmp.eq.s32.totalorder %s10, 1
    %p67 = por %p65, %p66
    %p68 = scmp.ne.s32.totalorder %s60, %s63
    %p69 = scmp.eq.s32.totalorder %s10, 0
    %p70 = por %p68, %p69
    %p71 = scmp.ne.s32.totalorder %s60, %s63
    %p72 = scmp.eq.s32.totalorder %s15, 1
    %p73 = por %p71, %p72
    %p74 = scmp.ne.s32.totalorder %s63, %s64
    %p75 = scmp.eq.s32.totalorder %s15, 0
    %p76 = por %p74, %p75
    %p77 = scmp.ne.s32.totalorder %s63, %s64
    %p78 = scmp.eq.s32.totalorder %s16, 1
    %p79 = por %p77, %p78
    %p81 = scmp.ne.s32.totalorder %s64, %s80
    %p82 = scmp.eq.s32.totalorder %s16, 0
    %p83 = por %p81, %p82
    %s84 = ssub.s32 %s17, %s29
    %s85 = ssub.s32 %s18, %s25
    %s86 = sor.u32 %s84, %s85
    %p87 = scmp.eq.s32.totalorder %s86, 0
    %s89 = sadd.s32 %s88, 1
    %s90 = scalar_select %p87, %s88, %s89
    %p93 = pneg %p87
    %p94 = scmp.eq.s32.totalorder %s10, 1
    %p95 = por %p93, %p94
    %p96 = scmp.ne.s32.totalorder %s88, %s91
    %p97 = scmp.eq.s32.totalorder %s10, 0
    %p98 = por %p96, %p97
    %p99 = scmp.ne.s32.totalorder %s88, %s91
    %p100 = scmp.eq.s32.totalorder %s15, 1
    %p101 = por %p99, %p100
    %p102 = scmp.ne.s32.totalorder %s91, %s92
    %p103 = scmp.eq.s32.totalorder %s15, 0
    %p104 = por %p102, %p103
    %p105 = scmp.ne.s32.totalorder %s91, %s92
    %p106 = scmp.eq.s32.totalorder %s16, 1
    %p107 = por %p105, %p106
    %p109 = scmp.ne.s32.totalorder %s92, %s108
    %p110 = scmp.eq.s32.totalorder %s16, 0
    %p111 = por %p109, %p110
    %s112 = ssub.s32 %s17, %s29
    %s113 = ssub.s32 %s18, %s25
    %s114 = sor.u32 %s112, %s113
    %p115 = scmp.eq.s32.totalorder %s114, 0
    %s117 = sadd.s32 %s116, 1
    %s118 = scalar_select %p115, %s116, %s117
    %p121 = pneg %p115
    %p122 = scmp.eq.s32.totalorder %s10, 1
    %p123 = por %p121, %p122
    %p124 = scmp.ne.s32.totalorder %s116, %s119
    %p125 = scmp.eq.s32.totalorder %s10, 0
    %p126 = por %p124, %p125
    %p127 = scmp.ne.s32.totalorder %s116, %s119
    %p128 = scmp.eq.s32.totalorder %s15, 1
    %p129 = por %p127, %p128
    %p130 = scmp.ne.s32.totalorder %s119, %s120
    %p131 = scmp.eq.s32.totalorder %s15, 0
    %p132 = por %p130, %p131
    %p133 = scmp.ne.s32.totalorder %s119, %s120
    %p134 = scmp.eq.s32.totalorder %s16, 1
    %p135 = por %p133, %p134
    %p137 = scmp.ne.s32.totalorder %s120, %s136
    %p138 = scmp.eq.s32.totalorder %s16, 0
    %p139 = por %p137, %p138
    %s140 = ssub.s32 %s17, %s29
    %p141 = scmp.eq.s32.totalorder %s140, 0
    %s143 = sadd.s32 %s142, 1
    %s144 = scalar_select %p141, %s142, %s143
    %p147 = pneg %p141
    %p148 = scmp.eq.s32.totalorder %s10, 1
    %p149 = por %p147, %p148
    %p150 = scmp.ne.s32.totalorder %s142, %s145
    %p151 = scmp.eq.s32.totalorder %s10, 0
    %p152 = por %p150, %p151
    %p153 = scmp.ne.s32.totalorder %s142, %s145
    %p154 = scmp.eq.s32.totalorder %s15, 1
    %p155 = por %p153, %p154
    %p156 = scmp.ne.s32.totalorder %s145, %s146
    %p157 = scmp.eq.s32.totalorder %s15, 0
    %p158 = por %p156, %p157
    %p159 = scmp.ne.s32.totalorder %s145, %s146
    %p160 = scmp.eq.s32.totalorder %s16, 1
    %p161 = por %p159, %p160
    %p163 = scmp.ne.s32.totalorder %s146, %s162
    %p164 = scmp.eq.s32.totalorder %s16, 0
    %p165 = por %p163, %p164
    %p166 = scmp.le.s32.totalorder 1, %s10
    %p167 = scmp.lt.s32.totalorder %s10, 3
    %p168 = pnand %p166, %p167
    %p169 = pneg %p168
    // Predicated region
    $region9: #{transformer_forward.36} parent=5 // pred_check
      _
    $region10: #{transformer_forward.36} parent=5 // pred_check_branch
      %171 = sbr.rel (%p168) target = $region12
    $region11: #{transformer_forward.36} parent=5 // pred_region
      %s172 = ssub.s32 %s10, 1
    $region12: #{transformer_forward.36} parent=5 // pred_fallthru
      _
    %p173 = scmp.lt.s32.totalorder %s10, 2
    // Predicated region
    $region13: #{transformer_forward.36} parent=5 // pred_check
      %p174 = pneg %p173
    $region14: #{transformer_forward.36} parent=5 // pred_check_branch
      %176 = sbr.rel (%p174) target = $region16
    $region15: #{transformer_forward.36} parent=5 // pred_region
      // Predicated region
      $region17: #{transformer_forward.36} parent=15 // pred_check
        %p177 = pneg %p42
      $region18: #{transformer_forward.36} parent=15 // pred_check_branch
        %179 = sbr.rel (%p177) target = $region20
      $region19: #{transformer_forward.36} parent=15 // pred_region
        %p180 = scmp.lt.s32.totalorder %s17, 1
        %s181 = scalar_select %p180, %s17, 1
        %s182 = smul.addr %s181, 4
        %s183 = scalar_lea.vmem %s0, %s182
      $region20: #{transformer_forward.36} parent=15 // pred_fallthru
        _
      // Predicated region
      $region21: #{transformer_forward.36} parent=15 // pred_check
        %p184 = pneg %p70
      $region22: #{transformer_forward.36} parent=15 // pred_check_branch
        %186 = sbr.rel (%p184) target = $region24
      $region23: #{transformer_forward.36} parent=15 // pred_region
        %p187 = scmp.lt.s32.totalorder %s17, 1
        %s188 = scalar_select %p187, %s17, 1
        %p189 = scmp.lt.s32.totalorder %s18, 0
        %s190 = scalar_select %p189, %s18, 0
        %s191 = sadd.s32 %s190, %s188
        %s192 = smul.addr %s191, 4
        %s193 = scalar_lea.vmem %s1, %s192
      $region24: #{transformer_forward.36} parent=15 // pred_fallthru
        _
      // Predicated region
      $region25: #{transformer_forward.36} parent=15 // pred_check
        %p194 = pneg %p98
      $region26: #{transformer_forward.36} parent=15 // pred_check_branch
        %196 = sbr.rel (%p194) target = $region28
      $region27: #{transformer_forward.36} parent=15 // pred_region
        %p197 = scmp.lt.s32.totalorder %s17, 1
        %s198 = scalar_select %p197, %s17, 1
        %p199 = scmp.lt.s32.totalorder %s18, 0
        %s200 = scalar_select %p199, %s18, 0
        %s201 = sadd.s32 %s200, %s198
        %s202 = smul.addr %s201, 4
        %s203 = scalar_lea.vmem %s2, %s202
      $region28: #{transformer_forward.36} parent=15 // pred_fallthru
        _
      // Predicated region
      $region29: #{transformer_forward.36} parent=15 // pred_check
        %p204 = pneg %p126
      $region30: #{transformer_forward.36} parent=15 // pred_check_branch
        %206 = sbr.rel (%p204) target = $region32
      $region31: #{transformer_forward.36} parent=15 // pred_region
        %p207 = scmp.lt.s32.totalorder %s17, 1
        %s208 = scalar_select %p207, %s17, 1
        %p209 = scmp.lt.s32.totalorder %s18, 0
        %s210 = scalar_select %p209, %s18, 0
        %s211 = sadd.s32 %s210, %s208
        %s212 = scalar_lea.vmem %s3, %s211
      $region32: #{transformer_forward.36} parent=15 // pred_fallthru
        _
    $region16: #{transformer_forward.36} parent=5 // pred_fallthru
      _
    %p213 = scmp.le.s32.totalorder 1, %s10
    %p214 = scmp.lt.s32.totalorder %s10, 3
    %p215 = pnand %p213, %p214
    %p216 = pneg %p215
    // Predicated region
    $region33: #{transformer_forward.36} parent=5 // pred_check
      _
    $region34: #{transformer_forward.36} parent=5 // pred_check_branch
      %218 = sbr.rel (%p215) target = $region36
    $region35: #{transformer_forward.36} parent=5 // pred_region
      %s219 = ssub.s32 %s10, 1
      %p220 = scmp.lt.s32.totalorder %s19, 1
      %s221 = scalar_select %p220, %s19, 1
      %s222 = smul.addr %s221, 4
      %s223 = scalar_lea.vmem %s0, %s222
      %p224 = pneg %p48
      %p225 = pneg %p45
      %p226 = scmp.lt.s32.totalorder %s19, 1
      %s227 = scalar_select %p226, %s19, 1
      %p228 = scmp.lt.s32.totalorder %s20, 0
      %s229 = scalar_select %p228, %s20, 0
      %s230 = sadd.s32 %s229, %s227
      %s231 = smul.addr %s230, 4
      %s232 = scalar_lea.vmem %s1, %s231
      %p233 = pneg %p76
      %p234 = pneg %p73
      %p235 = scmp.lt.s32.totalorder %s19, 1
      %s236 = scalar_select %p235, %s19, 1
      %p237 = scmp.lt.s32.totalorder %s20, 0
      %s238 = scalar_select %p237, %s20, 0
      %s239 = sadd.s32 %s238, %s236
      %s240 = smul.addr %s239, 4
      %s241 = scalar_lea.vmem %s2, %s240
      %p242 = pneg %p104
      %p243 = pneg %p101
      %p244 = scmp.lt.s32.totalorder %s19, 1
      %s245 = scalar_select %p244, %s19, 1
      %p246 = scmp.lt.s32.totalorder %s20, 0
      %s247 = scalar_select %p246, %s20, 0
      %s248 = sadd.s32 %s247, %s245
      %s249 = scalar_lea.vmem %s3, %s248
      %p250 = pneg %p132
      %p251 = pneg %p129
      %p252 = pneg %p158
      %p253 = pneg %p155
      %p254 = scmp.lt.s32.totalorder %s19, 1
      %s255 = scalar_select %p254, %s19, 1
      %s256 = smul.addr %s255, 4
      %s257 = scalar_lea.vmem %s4, %s256
      %p258 = scmp.lt.s32.totalorder %s19, 1
      %s259 = scalar_select %p258, %s19, 1
      %s260 = smul.addr %s259, 4
      %s261 = scalar_lea.vmem %s0, %s260
      %p262 = scmp.lt.s32.totalorder %s19, 1
      %s263 = scalar_select %p262, %s19, 1
      %p264 = scmp.lt.s32.totalorder %s20, 0
      %s265 = scalar_select %p264, %s20, 0
      %s266 = sadd.s32 %s265, %s263
      %s267 = smul.addr %s266, 4
      %s268 = scalar_lea.vmem %s1, %s267
      %p269 = scmp.lt.s32.totalorder %s19, 1
      %s270 = scalar_select %p269, %s19, 1
      %p271 = scmp.lt.s32.totalorder %s20, 0
      %s272 = scalar_select %p271, %s20, 0
      %s273 = sadd.s32 %s272, %s270
      %s274 = smul.addr %s273, 4
      %s275 = scalar_lea.vmem %s2, %s274
      %p276 = scmp.lt.s32.totalorder %s19, 1
      %s277 = scalar_select %p276, %s19, 1
      %p278 = scmp.lt.s32.totalorder %s20, 0
      %s279 = scalar_select %p278, %s20, 0
      %s280 = sadd.s32 %s279, %s277
      %s281 = scalar_lea.vmem %s3, %s280
      %p282 = scmp.lt.s32.totalorder %s19, 1
      %s283 = scalar_select %p282, %s19, 1
      %s284 = smul.addr %s283, 4
      %s285 = scalar_lea.vmem %s4, %s284
      %p287 = scmp.eq.s32.totalorder %s20, 0
      // Predicated region
      $region37: #{transformer_forward.36} parent=35 // pred_check
        %p288 = pneg %p287
      $region38: #{transformer_forward.36} parent=35 // pred_check_branch
        %290 = sbr.rel (%p288) target = $region40
      $region39: #{transformer_forward.36} parent=35 // pred_region
        %vm291 = vcmask 7168
        %292 = vst.msk [vmem:[#allocation2] sm:$0xff] %vm291, -inf
        %293 = vst.msk [vmem:[#allocation2 + $0x8] sm:$0xff] %vm291, -inf
        %294 = vst.msk [vmem:[#allocation2 + $0x10] sm:$0xff] %vm291, -inf
        %295 = vst.msk [vmem:[#allocation2 + $0x18] sm:$0xff] %vm291, -inf
        %296 = vst.msk [vmem:[#allocation3] sm:$0xff] %vm291, 0.0
        %297 = vst.msk [vmem:[#allocation3 + $0x8] sm:$0xff] %vm291, 0.0
        %298 = vst.msk [vmem:[#allocation3 + $0x10] sm:$0xff] %vm291, 0.0
        %299 = vst.msk [vmem:[#allocation3 + $0x18] sm:$0xff] %vm291, 0.0
        %vm300 = vcmask 64512
        %301 = vst.msk [vmem:[#allocation4] sm:$0xff] %vm300, 0.0
        %302 = vst.msk [vmem:[#allocation4 + $0x8] sm:$0xff] %vm300, 0.0
        %303 = vst.msk [vmem:[#allocation4 + $0x10] sm:$0xff] %vm300, 0.0
        %304 = vst.msk [vmem:[#allocation4 + $0x18] sm:$0xff] %vm300, 0.0
      $region40: #{transformer_forward.36} parent=35 // pred_fallthru
        _
      %v305 = vld [vmem:[%s261] sm:$0xf]
      %v306 = vld [vmem:[%s268] sm:$0xf]
      %v307 = vld [vmem:[%s275] sm:$0xf]
      %v308 = vld [vmem:[%s281] sm:$0x1]
      %vm309 = vcmask 64512
      %v311 = vsel %vm309, %v305, 0
      %v314 = vsel %vm309, %v306, 0
      %316 = vmatprep.subr.bf16.mxu0 0
      %317 = vmatpush1.bf16.xpose.msra.mxu0 %v314
      %318 = vmatprep.subr.bf16.mxu0 0
      %319 = vmatpush1.bf16.xpose.msra.mxu0 0
      %320 = vmatprep.subr.bf16.mxu0 0
      %321 = vmatpush1.bf16.xpose.msra.mxu0 0
      %322 = vmatprep.subr.bf16.mxu0 0
      %323 = vmatpush1.bf16.xpose.msra.mxu0 0
      %324 = vmatprep.subr.bf16.mxu0 0
      %325 = vmatpush1.bf16.xpose.msra.mxu0 0
      %326 = vmatprep.subr.bf16.mxu0 0
      %327 = vmatpush1.bf16.xpose.msra.mxu0 0
      %328 = vmatprep.subr.bf16.mxu0 0
      %329 = vmatpush1.bf16.xpose.msra.mxu0 0
      %330 = vmatprep.subr.bf16.mxu0 0
      %331 = vmatpush1.bf16.xpose.msra.mxu0 0
      %332 = vmatprep.subr.bf16.mxu0 0
      %333 = vmatpush1.bf16.xpose.msra.mxu0 0
      %334 = vmatprep.subr.bf16.mxu0 0
      %335 = vmatpush1.bf16.xpose.msra.mxu0 0
      %336 = vmatprep.subr.bf16.mxu0 0
      %337 = vmatpush1.bf16.xpose.msra.mxu0 0
      %338 = vmatprep.subr.bf16.mxu0 0
      %339 = vmatpush1.bf16.xpose.msra.mxu0 0
      %340 = vmatprep.subr.bf16.mxu0 0
      %341 = vmatpush1.bf16.xpose.msra.mxu0 0
      %342 = vmatprep.subr.bf16.mxu0 0
      %343 = vmatpush1.bf16.xpose.msra.mxu0 0
      %344 = vmatprep.subr.bf16.mxu0 0
      %345 = vmatpush1.bf16.xpose.msra.mxu0 0
      %346 = vmatprep.subr.bf16.mxu0 0
      %347 = vmatpush1.bf16.xpose.msra.mxu0 0
      %348 = vmatprep.mubr.bf16.mxu0 0
      %349 = vmatmul.mubr.bf16.gmra.mrb[0].mxu0 %v311
      %v350 = vpop.f32.mrb[0].mxu0
      %v351 = vadd.f32 0.0, %v350
      %v352 = vpop.f32.mrb[0].mxu0
      %v353 = vpop.f32.mrb[0].mxu0
      %v354 = vpop.f32.mrb[0].mxu0
      %355 = vdwg.mxu0
      %v356 = vmul.f32 %v351, 0.35355338
      %v358 = vlaneseq
      %v359 = vshrl.u32 %v358, 7
      %v360 = vsub.s32 0, %v359
      %v361 = vrot.slane %v308, %v360
      %v363 = vadd.f32 %v356, %v361
      %v364 = vld [vmem:[#allocation2] sm:$0xff]
      %v365 = vsel %vm309, %v363, -inf
      %366 = vmax.xlane.f32.xlu0 %v365
      %v367 = vpop.xlane.xlu0 %366
      %v368 = vmax.f32 %v364, %v367
      %v369 = vsub.f32 %v364, %v368
      %v370 = vmul.f32 %v369, 1.442695
      %v371 = vpow.pop %v370
      %373 = vset.pattern.permute.xlu0 0
      %374 = vperm.xlu0 %373, %v368
      %v375 = vpop.permute.xlu0 %374
      %v377 = vsub.f32 %v363, %v375
      %v378 = vmul.f32 %v377, 1.442695
      %v379 = vpow.pop %v378
      %v380 = vld [vmem:[#allocation3] sm:$0xff]
      %v381 = vmul.f32 %v371, %v380
      %v382 = vsel %vm309, %v379, 0.0
      %383 = vadd.xlane.f32.xlu0 %v382
      %v384 = vpop.xlane.xlu0 %383
      %v385 = vadd.f32 %v381, %v384
      %vm386 = vcmask 7168
      %387 = vst.msk [vmem:[#allocation3] sm:$0xff] %vm386, %v385
      %v388 = vld [vmem:[#allocation4] sm:$0xff]
      %390 = vset.pattern.permute.xlu0 0
      %391 = vperm.xlu0 %390, %v371
      %v392 = vpop.permute.xlu0 %391
      %v394 = vmul.f32 %v392, %v388
      %v395 = vpack.c.bf16 %v379, %v379
      %v397 = vsel %vm309, %v395, 0
      %vm399 = vcmask 1043456
      %v401 = vsel %vm399, %v307, 0
      %403 = vmatprep.subr.bf16.mxu0 0
      %404 = vmatpush1.bf16.msra.mxu0 %v401
      %405 = vmatprep.subr.bf16.mxu0 0
      %406 = vmatpush1.bf16.msra.mxu0 0
      %407 = vmatprep.subr.bf16.mxu0 0
      %408 = vmatpush1.bf16.msra.mxu0 0
      %409 = vmatprep.subr.bf16.mxu0 0
      %410 = vmatpush1.bf16.msra.mxu0 0
      %411 = vmatprep.subr.bf16.mxu0 0
      %412 = vmatpush1.bf16.msra.mxu0 0
      %413 = vmatprep.subr.bf16.mxu0 0
      %414 = vmatpush1.bf16.msra.mxu0 0
      %415 = vmatprep.subr.bf16.mxu0 0
      %416 = vmatpush1.bf16.msra.mxu0 0
      %417 = vmatprep.subr.bf16.mxu0 0
      %418 = vmatpush1.bf16.msra.mxu0 0
      %419 = vmatprep.subr.bf16.mxu0 0
      %420 = vmatpush1.bf16.msra.mxu0 0
      %421 = vmatprep.subr.bf16.mxu0 0
      %422 = vmatpush1.bf16.msra.mxu0 0
      %423 = vmatprep.subr.bf16.mxu0 0
      %424 = vmatpush1.bf16.msra.mxu0 0
      %425 = vmatprep.subr.bf16.mxu0 0
      %426 = vmatpush1.bf16.msra.mxu0 0
      %427 = vmatprep.subr.bf16.mxu0 0
      %428 = vmatpush1.bf16.msra.mxu0 0
      %429 = vmatprep.subr.bf16.mxu0 0
      %430 = vmatpush1.bf16.msra.mxu0 0
      %431 = vmatprep.subr.bf16.mxu0 0
      %432 = vmatpush1.bf16.msra.mxu0 0
      %433 = vmatprep.subr.bf16.mxu0 0
      %434 = vmatpush1.bf16.msra.mxu0 0
      %435 = vmatprep.mubr.bf16.mxu0 0
      %436 = vmatmul.mubr.bf16.gmra.mrb[0].mxu0 %v397
      %v437 = vpop.f32.mrb[0].mxu0
      %v438 = vadd.f32 0.0, %v437
      %v439 = vpop.f32.mrb[0].mxu0
      %v440 = vpop.f32.mrb[0].mxu0
      %v441 = vpop.f32.mrb[0].mxu0
      %442 = vdwg.mxu0
      %v443 = vadd.f32 %v394, %v438
      %444 = vst.msk [vmem:[#allocation4] sm:$0xff] %vm309, %v443
      %445 = vst.msk [vmem:[#allocation2] sm:$0xff] %vm386, %v368
      %v447 = vunpack.c.l.b16 %v305
      %v448 = vpack.c.b16 %v447, %v447
      %449 = vrot.lane.b32.xlu0 %v448, 120
      %v450 = vpop.permute.xlu0 %449
      %v452 = vunpack.c.l.b16 %v306
      %v453 = vpack.c.b16 %v452, %v452
      %454 = vrot.lane.b32.xlu0 %v453, 120
      %v455 = vpop.permute.xlu0 %454
      %v457 = vsel %vm309, %v450, 0
      %v460 = vsel %vm309, %v455, 0
      %462 = vmatprep.subr.bf16.mxu0 0
      %463 = vmatpush1.bf16.xpose.msra.mxu0 %v460
      %464 = vmatprep.subr.bf16.mxu0 0
      %465 = vmatpush1.bf16.xpose.msra.mxu0 0
      %466 = vmatprep.subr.bf16.mxu0 0
      %467 = vmatpush1.bf16.xpose.msra.mxu0 0
      %468 = vmatprep.subr.bf16.mxu0 0
      %469 = vmatpush1.bf16.xpose.msra.mxu0 0
      %470 = vmatprep.subr.bf16.mxu0 0
      %471 = vmatpush1.bf16.xpose.msra.mxu0 0
      %472 = vmatprep.subr.bf16.mxu0 0
      %473 = vmatpush1.bf16.xpose.msra.mxu0 0
      %474 = vmatprep.subr.bf16.mxu0 0
      %475 = vmatpush1.bf16.xpose.msra.mxu0 0
      %476 = vmatprep.subr.bf16.mxu0 0
      %477 = vmatpush1.bf16.xpose.msra.mxu0 0
      %478 = vmatprep.subr.bf16.mxu0 0
      %479 = vmatpush1.bf16.xpose.msra.mxu0 0
      %480 = vmatprep.subr.bf16.mxu0 0
      %481 = vmatpush1.bf16.xpose.msra.mxu0 0
      %482 = vmatprep.subr.bf16.mxu0 0
      %483 = vmatpush1.bf16.xpose.msra.mxu0 0
      %484 = vmatprep.subr.bf16.mxu0 0
      %485 = vmatpush1.bf16.xpose.msra.mxu0 0
      %486 = vmatprep.subr.bf16.mxu0 0
      %487 = vmatpush1.bf16.xpose.msra.mxu0 0
      %488 = vmatprep.subr.bf16.mxu0 0
      %489 = vmatpush1.bf16.xpose.msra.mxu0 0
      %490 = vmatprep.subr.bf16.mxu0 0
      %491 = vmatpush1.bf16.xpose.msra.mxu0 0
      %492 = vmatprep.subr.bf16.mxu0 0
      %493 = vmatpush1.bf16.xpose.msra.mxu0 0
      %494 = vmatprep.mubr.bf16.mxu0 0
      %495 = vmatmul.mubr.bf16.gmra.mrb[0].mxu0 %v457
      %v496 = vpop.f32.mrb[0].mxu0
      %v497 = vadd.f32 0.0, %v496
      %v498 = vpop.f32.mrb[0].mxu0
      %v499 = vpop.f32.mrb[0].mxu0
      %v500 = vpop.f32.mrb[0].mxu0
      %501 = vdwg.mxu0
      %v502 = vmul.f32 %v497, 0.35355338
      %v503 = vadd.f32 %v502, %v361
      %s504 = scalar_lea.vmem [#allocation2], 8
      %v505 = vld [vmem:[%s504] sm:$0xff]
      %v506 = vsel %vm309, %v503, -inf
      %507 = vmax.xlane.f32.xlu0 %v506
      %v508 = vpop.xlane.xlu0 %507
      %v509 = vmax.f32 %v505, %v508
      %v510 = vsub.f32 %v505, %v509
      %v511 = vmul.f32 %v510, 1.442695
      %v512 = vpow.pop %v511
      %514 = vset.pattern.permute.xlu0 0
      %515 = vperm.xlu0 %514, %v509
      %v516 = vpop.permute.xlu0 %515
      %v518 = vsub.f32 %v503, %v516
      %v519 = vmul.f32 %v518, 1.442695
      %v520 = vpow.pop %v519
      %s521 = scalar_lea.vmem [#allocation3], 8
      %v522 = vld [vmem:[%s521] sm:$0xff]
      %v523 = vmul.f32 %v512, %v522
      %v524 = vsel %vm309, %v520, 0.0
      %525 = vadd.xlane.f32.xlu0 %v524
      %v526 = vpop.xlane.xlu0 %525
      %v527 = vadd.f32 %v523, %v526
      %528 = vst.msk [vmem:[%s521] sm:$0xff] %vm386, %v527
      %s529 = scalar_lea.vmem [#allocation4], 8
      %v530 = vld [vmem:[%s529] sm:$0xff]
      %532 = vset.pattern.permute.xlu0 0
      %533 = vperm.xlu0 %532, %v512
      %v534 = vpop.permute.xlu0 %533
      %v536 = vmul.f32 %v534, %v530
      %v537 = vpack.c.bf16 %v520, %v520
      %v539 = vunpack.c.l.b16 %v307
      %v540 = vpack.c.b16 %v539, %v539
      %541 = vrot.lane.b32.xlu0 %v540, 120
      %v542 = vpop.permute.xlu0 %541
      %v544 = vsel %vm309, %v537, 0
      %v547 = vsel %vm399, %v542, 0
      %549 = vmatprep.subr.bf16.mxu0 0
      %550 = vmatpush1.bf16.msra.mxu0 %v547
      %551 = vmatprep.subr.bf16.mxu0 0
      %552 = vmatpush1.bf16.msra.mxu0 0
      %553 = vmatprep.subr.bf16.mxu0 0
      %554 = vmatpush1.bf16.msra.mxu0 0
      %555 = vmatprep.subr.bf16.mxu0 0
      %556 = vmatpush1.bf16.msra.mxu0 0
      %557 = vmatprep.subr.bf16.mxu0 0
      %558 = vmatpush1.bf16.msra.mxu0 0
      %559 = vmatprep.subr.bf16.mxu0 0
      %560 = vmatpush1.bf16.msra.mxu0 0
      %561 = vmatprep.subr.bf16.mxu0 0
      %562 = vmatpush1.bf16.msra.mxu0 0
      %563 = vmatprep.subr.bf16.mxu0 0
      %564 = vmatpush1.bf16.msra.mxu0 0
      %565 = vmatprep.subr.bf16.mxu0 0
      %566 = vmatpush1.bf16.msra.mxu0 0
      %567 = vmatprep.subr.bf16.mxu0 0
      %568 = vmatpush1.bf16.msra.mxu0 0
      %569 = vmatprep.subr.bf16.mxu0 0
      %570 = vmatpush1.bf16.msra.mxu0 0
      %571 = vmatprep.subr.bf16.mxu0 0
      %572 = vmatpush1.bf16.msra.mxu0 0
      %573 = vmatprep.subr.bf16.mxu0 0
      %574 = vmatpush1.bf16.msra.mxu0 0
      %575 = vmatprep.subr.bf16.mxu0 0
      %576 = vmatpush1.bf16.msra.mxu0 0
      %577 = vmatprep.subr.bf16.mxu0 0
      %578 = vmatpush1.bf16.msra.mxu0 0
      %579 = vmatprep.subr.bf16.mxu0 0
      %580 = vmatpush1.bf16.msra.mxu0 0
      %581 = vmatprep.mubr.bf16.mxu0 0
      %582 = vmatmul.mubr.bf16.gmra.mrb[0].mxu0 %v544
      %v583 = vpop.f32.mrb[0].mxu0
      %v584 = vadd.f32 0.0, %v583
      %v585 = vpop.f32.mrb[0].mxu0
      %v586 = vpop.f32.mrb[0].mxu0
      %v587 = vpop.f32.mrb[0].mxu0
      %588 = vdwg.mxu0
      %v589 = vadd.f32 %v536, %v584
      %590 = vst.msk [vmem:[%s529] sm:$0xff] %vm309, %v589
      %591 = vst.msk [vmem:[%s504] sm:$0xff] %vm386, %v509
      %592 = vrot.lane.b32.xlu0 %v448, 112
      %v593 = vpop.permute.xlu0 %592
      %594 = vrot.lane.b32.xlu0 %v453, 112
      %v595 = vpop.permute.xlu0 %594
      %v597 = vsel %vm309, %v593, 0
      %v600 = vsel %vm309, %v595, 0
      %602 = vmatprep.subr.bf16.mxu0 0
      %603 = vmatpush1.bf16.xpose.msra.mxu0 %v600
      %604 = vmatprep.subr.bf16.mxu0 0
      %605 = vmatpush1.bf16.xpose.msra.mxu0 0
      %606 = vmatprep.subr.bf16.mxu0 0
      %607 = vmatpush1.bf16.xpose.msra.mxu0 0
      %608 = vmatprep.subr.bf16.mxu0 0
      %609 = vmatpush1.bf16.xpose.msra.mxu0 0
      %610 = vmatprep.subr.bf16.mxu0 0
      %611 = vmatpush1.bf16.xpose.msra.mxu0 0
      %612 = vmatprep.subr.bf16.mxu0 0
      %613 = vmatpush1.bf16.xpose.msra.mxu0 0
      %614 = vmatprep.subr.bf16.mxu0 0
      %615 = vmatpush1.bf16.xpose.msra.mxu0 0
      %616 = vmatprep.subr.bf16.mxu0 0
      %617 = vmatpush1.bf16.xpose.msra.mxu0 0
      %618 = vmatprep.subr.bf16.mxu0 0
      %619 = vmatpush1.bf16.xpose.msra.mxu0 0
      %620 = vmatprep.subr.bf16.mxu0 0
      %621 = vmatpush1.bf16.xpose.msra.mxu0 0
      %622 = vmatprep.subr.bf16.mxu0 0
      %623 = vmatpush1.bf16.xpose.msra.mxu0 0
      %624 = vmatprep.subr.bf16.mxu0 0
      %625 = vmatpush1.bf16.xpose.msra.mxu0 0
      %626 = vmatprep.subr.bf16.mxu0 0
      %627 = vmatpush1.bf16.xpose.msra.mxu0 0
      %628 = vmatprep.subr.bf16.mxu0 0
      %629 = vmatpush1.bf16.xpose.msra.mxu0 0
      %630 = vmatprep.subr.bf16.mxu0 0
      %631 = vmatpush1.bf16.xpose.msra.mxu0 0
      %632 = vmatprep.subr.bf16.mxu0 0
      %633 = vmatpush1.bf16.xpose.msra.mxu0 0
      %634 = vmatprep.mubr.bf16.mxu0 0
      %635 = vmatmul.mubr.bf16.gmra.mrb[0].mxu0 %v597
      %v636 = vpop.f32.mrb[0].mxu0
      %v637 = vadd.f32 0.0, %v636
      %v638 = vpop.f32.mrb[0].mxu0
      %v639 = vpop.f32.mrb[0].mxu0
      %v640 = vpop.f32.mrb[0].mxu0
      %641 = vdwg.mxu0
      %v642 = vmul.f32 %v637, 0.35355338
      %v643 = vadd.f32 %v642, %v361
      %s644 = scalar_lea.vmem [#allocation2], 16
      %v645 = vld [vmem:[%s644] sm:$0xff]
      %v646 = vsel %vm309, %v643, -inf
      %647 = vmax.xlane.f32.xlu0 %v646
      %v648 = vpop.xlane.xlu0 %647
      %v649 = vmax.f32 %v645, %v648
      %v650 = vsub.f32 %v645, %v649
      %v651 = vmul.f32 %v650, 1.442695
      %v652 = vpow.pop %v651
      %654 = vset.pattern.permute.xlu0 0
      %655 = vperm.xlu0 %654, %v649
      %v656 = vpop.permute.xlu0 %655
      %v658 = vsub.f32 %v643, %v656
      %v659 = vmul.f32 %v658, 1.442695
      %v660 = vpow.pop %v659
      %s661 = scalar_lea.vmem [#allocation3], 16
      %v662 = vld [vmem:[%s661] sm:$0xff]
      %v663 = vmul.f32 %v652, %v662
      %v664 = vsel %vm309, %v660, 0.0
      %665 = vadd.xlane.f32.xlu0 %v664
      %v666 = vpop.xlane.xlu0 %665
      %v667 = vadd.f32 %v663, %v666
      %668 = vst.msk [vmem:[%s661] sm:$0xff] %vm386, %v667
      %s669 = scalar_lea.vmem [#allocation4], 16
      %v670 = vld [vmem:[%s669] sm:$0xff]
      %672 = vset.pattern.permute.xlu0 0
      %673 = vperm.xlu0 %672, %v652
      %v674 = vpop.permute.xlu0 %673
      %v676 = vmul.f32 %v674, %v670
      %v677 = vpack.c.bf16 %v660, %v660
      %678 = vrot.lane.b32.xlu0 %v540, 112
      %v679 = vpop.permute.xlu0 %678
      %v681 = vsel %vm309, %v677, 0
      %v684 = vsel %vm399, %v679, 0
      %686 = vmatprep.subr.bf16.mxu0 0
      %687 = vmatpush1.bf16.msra.mxu0 %v684
      %688 = vmatprep.subr.bf16.mxu0 0
      %689 = vmatpush1.bf16.msra.mxu0 0
      %690 = vmatprep.subr.bf16.mxu0 0
      %691 = vmatpush1.bf16.msra.mxu0 0
      %692 = vmatprep.subr.bf16.mxu0 0
      %693 = vmatpush1.bf16.msra.mxu0 0
      %694 = vmatprep.subr.bf16.mxu0 0
      %695 = vmatpush1.bf16.msra.mxu0 0
      %696 = vmatprep.subr.bf16.mxu0 0
      %697 = vmatpush1.bf16.msra.mxu0 0
      %698 = vmatprep.subr.bf16.mxu0 0
      %699 = vmatpush1.bf16.msra.mxu0 0
      %700 = vmatprep.subr.bf16.mxu0 0
      %701 = vmatpush1.bf16.msra.mxu0 0
      %702 = vmatprep.subr.bf16.mxu0 0
      %703 = vmatpush1.bf16.msra.mxu0 0
      %704 = vmatprep.subr.bf16.mxu0 0
      %705 = vmatpush1.bf16.msra.mxu0 0
      %706 = vmatprep.subr.bf16.mxu0 0
      %707 = vmatpush1.bf16.msra.mxu0 0
      %708 = vmatprep.subr.bf16.mxu0 0
      %709 = vmatpush1.bf16.msra.mxu0 0
      %710 = vmatprep.subr.bf16.mxu0 0
      %711 = vmatpush1.bf16.msra.mxu0 0
      %712 = vmatprep.subr.bf16.mxu0 0
      %713 = vmatpush1.bf16.msra.mxu0 0
      %714 = vmatprep.subr.bf16.mxu0 0
      %715 = vmatpush1.bf16.msra.mxu0 0
      %716 = vmatprep.subr.bf16.mxu0 0
      %717 = vmatpush1.bf16.msra.mxu0 0
      %718 = vmatprep.mubr.bf16.mxu0 0
      %719 = vmatmul.mubr.bf16.gmra.mrb[0].mxu0 %v681
      %v720 = vpop.f32.mrb[0].mxu0
      %v721 = vadd.f32 0.0, %v720
      %v722 = vpop.f32.mrb[0].mxu0
      %v723 = vpop.f32.mrb[0].mxu0
      %v724 = vpop.f32.mrb[0].mxu0
      %725 = vdwg.mxu0
      %v726 = vadd.f32 %v676, %v721
      %727 = vst.msk [vmem:[%s669] sm:$0xff] %vm309, %v726
      %728 = vst.msk [vmem:[%s644] sm:$0xff] %vm386, %v649
      %729 = vrot.lane.b32.xlu0 %v448, 104
      %v730 = vpop.permute.xlu0 %729
      %731 = vrot.lane.b32.xlu0 %v453, 104
      %v732 = vpop.permute.xlu0 %731
      %v734 = vsel %vm309, %v730, 0
      %v737 = vsel %vm309, %v732, 0
      %739 = vmatprep.subr.bf16.mxu0 0
      %740 = vmatpush1.bf16.xpose.msra.mxu0 %v737
      %741 = vmatprep.subr.bf16.mxu0 0
      %742 = vmatpush1.bf16.xpose.msra.mxu0 0
      %743 = vmatprep.subr.bf16.mxu0 0
      %744 = vmatpush1.bf16.xpose.msra.mxu0 0
      %745 = vmatprep.subr.bf16.mxu0 0
      %746 = vmatpush1.bf16.xpose.msra.mxu0 0
      %747 = vmatprep.subr.bf16.mxu0 0
      %748 = vmatpush1.bf16.xpose.msra.mxu0 0
      %749 = vmatprep.subr.bf16.mxu0 0
      %750 = vmatpush1.bf16.xpose.msra.mxu0 0
      %751 = vmatprep.subr.bf16.mxu0 0
      %752 = vmatpush1.bf16.xpose.msra.mxu0 0
      %753 = vmatprep.subr.bf16.mxu0 0
      %754 = vmatpush1.bf16.xpose.msra.mxu0 0
      %755 = vmatprep.subr.bf16.mxu0 0
      %756 = vmatpush1.bf16.xpose.msra.mxu0 0
      %757 = vmatprep.subr.bf16.mxu0 0
      %758 = vmatpush1.bf16.xpose.msra.mxu0 0
      %759 = vmatprep.subr.bf16.mxu0 0
      %760 = vmatpush1.bf16.xpose.msra.mxu0 0
      %761 = vmatprep.subr.bf16.mxu0 0
      %762 = vmatpush1.bf16.xpose.msra.mxu0 0
      %763 = vmatprep.subr.bf16.mxu0 0
      %764 = vmatpush1.bf16.xpose.msra.mxu0 0
      %765 = vmatprep.subr.bf16.mxu0 0
      %766 = vmatpush1.bf16.xpose.msra.mxu0 0
      %767 = vmatprep.subr.bf16.mxu0 0
      %768 = vmatpush1.bf16.xpose.msra.mxu0 0
      %769 = vmatprep.subr.bf16.mxu0 0
      %770 = vmatpush1.bf16.xpose.msra.mxu0 0
      %771 = vmatprep.mubr.bf16.mxu0 0
      %772 = vmatmul.mubr.bf16.gmra.mrb[0].mxu0 %v734
      %v773 = vpop.f32.mrb[0].mxu0
      %v774 = vadd.f32 0.0, %v773
      %v775 = vpop.f32.mrb[0].mxu0
      %v776 = vpop.f32.mrb[0].mxu0
      %v777 = vpop.f32.mrb[0].mxu0
      %778 = vdwg.mxu0
      %v779 = vmul.f32 %v774, 0.35355338
      %v780 = vadd.f32 %v779, %v361
      %s781 = scalar_lea.vmem [#allocation2], 24
      %v782 = vld [vmem:[%s781] sm:$0xff]
      %v783 = vsel %vm309, %v780, -inf
      %784 = vmax.xlane.f32.xlu0 %v783
      %v785 = vpop.xlane.xlu0 %784
      %v786 = vmax.f32 %v782, %v785
      %v787 = vsub.f32 %v782, %v786
      %v788 = vmul.f32 %v787, 1.442695
      %v789 = vpow.pop %v788
      %791 = vset.pattern.permute.xlu0 0
      %792 = vperm.xlu0 %791, %v786
      %v793 = vpop.permute.xlu0 %792
      %v795 = vsub.f32 %v780, %v793
      %v796 = vmul.f32 %v795, 1.442695
      %v797 = vpow.pop %v796
      %s798 = scalar_lea.vmem [#allocation3], 24
      %v799 = vld [vmem:[%s798] sm:$0xff]
      %v800 = vmul.f32 %v789, %v799
      %v801 = vsel %vm309, %v797, 0.0
      %802 = vadd.xlane.f32.xlu0 %v801
      %v803 = vpop.xlane.xlu0 %802
      %v804 = vadd.f32 %v800, %v803
      %805 = vst.msk [vmem:[%s798] sm:$0xff] %vm386, %v804
      %s806 = scalar_lea.vmem [#allocation4], 24
      %v807 = vld [vmem:[%s806] sm:$0xff]
      %809 = vset.pattern.permute.xlu0 0
      %810 = vperm.xlu0 %809, %v789
      %v811 = vpop.permute.xlu0 %810
      %v813 = vmul.f32 %v811, %v807
      %v814 = vpack.c.bf16 %v797, %v797
      %815 = vrot.lane.b32.xlu0 %v540, 104
      %v816 = vpop.permute.xlu0 %815
      %v818 = vsel %vm309, %v814, 0
      %v821 = vsel %vm399, %v816, 0
      %823 = vmatprep.subr.bf16.mxu0 0
      %824 = vmatpush1.bf16.msra.mxu0 %v821
      %825 = vmatprep.subr.bf16.mxu0 0
      %826 = vmatpush1.bf16.msra.mxu0 0
      %827 = vmatprep.subr.bf16.mxu0 0
      %828 = vmatpush1.bf16.msra.mxu0 0
      %829 = vmatprep.subr.bf16.mxu0 0
      %830 = vmatpush1.bf16.msra.mxu0 0
      %831 = vmatprep.subr.bf16.mxu0 0
      %832 = vmatpush1.bf16.msra.mxu0 0
      %833 = vmatprep.subr.bf16.mxu0 0
      %834 = vmatpush1.bf16.msra.mxu0 0
      %835 = vmatprep.subr.bf16.mxu0 0
      %836 = vmatpush1.bf16.msra.mxu0 0
      %837 = vmatprep.subr.bf16.mxu0 0
      %838 = vmatpush1.bf16.msra.mxu0 0
      %839 = vmatprep.subr.bf16.mxu0 0
      %840 = vmatpush1.bf16.msra.mxu0 0
      %841 = vmatprep.subr.bf16.mxu0 0
      %842 = vmatpush1.bf16.msra.mxu0 0
      %843 = vmatprep.subr.bf16.mxu0 0
      %844 = vmatpush1.bf16.msra.mxu0 0
      %845 = vmatprep.subr.bf16.mxu0 0
      %846 = vmatpush1.bf16.msra.mxu0 0
      %847 = vmatprep.subr.bf16.mxu0 0
      %848 = vmatpush1.bf16.msra.mxu0 0
      %849 = vmatprep.subr.bf16.mxu0 0
      %850 = vmatpush1.bf16.msra.mxu0 0
      %851 = vmatprep.subr.bf16.mxu0 0
      %852 = vmatpush1.bf16.msra.mxu0 0
      %853 = vmatprep.subr.bf16.mxu0 0
      %854 = vmatpush1.bf16.msra.mxu0 0
      %855 = vmatprep.mubr.bf16.mxu0 0
      %856 = vmatmul.mubr.bf16.gmra.mrb[0].mxu0 %v818
      %v857 = vpop.f32.mrb[0].mxu0
      %v858 = vadd.f32 0.0, %v857
      %v859 = vpop.f32.mrb[0].mxu0
      %v860 = vpop.f32.mrb[0].mxu0
      %v861 = vpop.f32.mrb[0].mxu0
      %862 = vdwg.mxu0
      %v863 = vadd.f32 %v813, %v858
      %864 = vst.msk [vmem:[%s806] sm:$0xff] %vm309, %v863
      %865 = vst.msk [vmem:[%s781] sm:$0xff] %vm386, %v786
      // Predicated region
      $region41: #{transformer_forward.36} parent=35 // pred_check
        %p866 = pneg %p287
      $region42: #{transformer_forward.36} parent=35 // pred_check_branch
        %868 = sbr.rel (%p866) target = $region44
      $region43: #{transformer_forward.36} parent=35 // pred_region
        %v869 = vld [vmem:[#allocation4] sm:$0xff]
        %v870 = vld [vmem:[#allocation3] sm:$0xff]
        %v871 = vrcp.pop %v870
        %873 = vset.pattern.permute.xlu0 0
        %874 = vperm.xlu0 %873, %v871
        %v875 = vpop.permute.xlu0 %874
        %v877 = vmul.f32 %v869, %v875
        %v878 = vld [vmem:[%s529] sm:$0xff]
        %v879 = vld [vmem:[%s521] sm:$0xff]
        %v880 = vrcp.pop %v879
        %882 = vset.pattern.permute.xlu0 0
        %883 = vperm.xlu0 %882, %v880
        %v884 = vpop.permute.xlu0 %883
        %v886 = vmul.f32 %v878, %v884
        %v887 = vld [vmem:[%s669] sm:$0xff]
        %v888 = vld [vmem:[%s661] sm:$0xff]
        %v889 = vrcp.pop %v888
        %891 = vset.pattern.permute.xlu0 0
        %892 = vperm.xlu0 %891, %v889
        %v893 = vpop.permute.xlu0 %892
        %v895 = vmul.f32 %v887, %v893
        %v896 = vld [vmem:[%s806] sm:$0xff]
        %v897 = vld [vmem:[%s798] sm:$0xff]
        %v898 = vrcp.pop %v897
        %900 = vset.pattern.permute.xlu0 0
        %901 = vperm.xlu0 %900, %v898
        %v902 = vpop.permute.xlu0 %901
        %v904 = vmul.f32 %v896, %v902
        %906 = vrot.lane.b32.xlu0 %v886, 8
        %v907 = vpop.permute.xlu0 %906
        %910 = vrot.lane.b32.xlu0 %v895, 16
        %v911 = vpop.permute.xlu0 %910
        %914 = vrot.lane.b32.xlu0 %v904, 24
        %v915 = vpop.permute.xlu0 %914
        %v917 = vsel %vm309, %v877, %v907
        %vm918 = vcmask 130048
        %v919 = vsel %vm918, %v917, %v911
        %vm920 = vcmask 195584
        %v921 = vsel %vm920, %v919, %v915
        %v922 = vpack.c.bf16 %v921, %v921
        %vm923 = vcmask 257024
        %924 = vst.msk [vmem:[%s285] sm:$0xf] %vm923, %v922
      $region44: #{transformer_forward.36} parent=35 // pred_fallthru
        _
      %p925 = scmp.lt.s32.totalorder %s19, 1
      %s926 = scalar_select %p925, %s19, 1
      %s927 = smul.addr %s926, 4
      %s928 = scalar_lea.vmem %s4, %s927
      // Predicated region
      $region45: #{transformer_forward.36} parent=35 // pred_check
        %p929 = pneg %p155
      $region46: #{transformer_forward.36} parent=35 // pred_check_branch
        %931 = sbr.rel (%p929) target = $region48
      $region47: #{transformer_forward.36} parent=35 // pred_region
        _
      $region48: #{transformer_forward.36} parent=35 // pred_fallthru
        _
    $region36: #{transformer_forward.36} parent=5 // pred_fallthru
      _
    %p932 = scmp.le.s32.totalorder 2, %s10
    // Predicated region
    $region49: #{transformer_forward.36} parent=5 // pred_check
      %p933 = pneg %p932
    $region50: #{transformer_forward.36} parent=5 // pred_check_branch
      %935 = sbr.rel (%p933) target = $region52
    $region51: #{transformer_forward.36} parent=5 // pred_region
      %s936 = ssub.s32 %s10, 2
      // Predicated region
      $region53: #{transformer_forward.36} parent=51 // pred_check
        %p937 = pneg %p161
      $region54: #{transformer_forward.36} parent=51 // pred_check_branch
        %939 = sbr.rel (%p937) target = $region56
      $region55: #{transformer_forward.36} parent=51 // pred_region
        %p940 = scmp.lt.s32.totalorder %s21, 1
        %s941 = scalar_select %p940, %s21, 1
        %s942 = smul.addr %s941, 4
        %s943 = scalar_lea.vmem %s4, %s942
      $region56: #{transformer_forward.36} parent=51 // pred_fallthru
        _
    $region52: #{transformer_forward.36} parent=5 // pred_fallthru
      _
  $region6: #{transformer_forward.36} parent=0 // loop_footer
    %s14 = sadd.s32 1, %s10
  $region7: #{transformer_forward.36} parent=0 // loop_footer_branch
    %9 = sbr.rel target = $region3
  $region8: #{transformer_forward.36} parent=0 // loop_exit
    _

// kernel: transformer_forward.39
$region0: #{transformer_forward.39}
  #allocation0 [shape = 'u32[]', space=smem, size = 0x4, offset = 0x4, fixed_abs, tag = 'smem constant byte address 0x4 - core index']
  #allocation1 [shape = 'u32[144,128]{1,0:T(1,128)}', space=vmem, size = 0x12000, scoped, tag = 'internal scratch']
  #allocation2 [shape = 'f32[16,32]{1,0:T(8,128)}', space=vmem, size = 0x2000, scoped, tag = 'scratch operand']
  %s0 = inlined_call_operand.vmem [shape: bf16[16,32], index: 0, kind: input, shape index: {}]
  %s1 = inlined_call_operand.vmem [shape: bf16[32,64], index: 1, kind: input, shape index: {}]
  %s2 = inlined_call_operand.vmem [shape: f32[1,64], index: 2, kind: input, shape index: {}]
  %s3 = inlined_call_operand.vmem [shape: bf16[64,32], index: 3, kind: input, shape index: {}]
  %s4 = inlined_call_operand.vmem [shape: f32[1,32], index: 4, kind: input, shape index: {}]
  %s5 = inlined_call_operand.vmem [shape: bf16[16,32], index: 5, kind: output, shape index: {}]
  %s6 = sld [smem:[#allocation0]]
  $region38: #{transformer_forward.39} parent=0
    _
  %s8 = ssub.s32 1, %s6
  %s9 = scalar_select 0, %s8, %s6
  // Predicated region
  $region2: #{transformer_forward.39} parent=0 // pred_check
    _
  $region3: #{transformer_forward.39} parent=0 // pred_check_branch
    %11 = sbr.rel (0) target = $region5
  $region4: #{transformer_forward.39} parent=0 // pred_region
    _
  $region5: #{transformer_forward.39} parent=0 // pred_fallthru
    _
  // Predicated region
  $region6: #{transformer_forward.39} parent=0 // pred_check
    _
  $region7: #{transformer_forward.39} parent=0 // pred_check_branch
    %13 = sbr.rel (0) target = $region9
  $region8: #{transformer_forward.39} parent=0 // pred_region
    _
  $region9: #{transformer_forward.39} parent=0 // pred_fallthru
    _
  // Predicated region
  $region10: #{transformer_forward.39} parent=0 // pred_check
    _
  $region11: #{transformer_forward.39} parent=0 // pred_check_branch
    %15 = sbr.rel (0) target = $region13
  $region12: #{transformer_forward.39} parent=0 // pred_region
    _
  $region13: #{transformer_forward.39} parent=0 // pred_fallthru
    _
  // Predicated region
  $region14: #{transformer_forward.39} parent=0 // pred_check
    _
  $region15: #{transformer_forward.39} parent=0 // pred_check_branch
    %17 = sbr.rel (0) target = $region17
  $region16: #{transformer_forward.39} parent=0 // pred_region
    _
  $region17: #{transformer_forward.39} parent=0 // pred_fallthru
    _
  // Predicated region
  $region18: #{transformer_forward.39} parent=0 // pred_check
    _
  $region19: #{transformer_forward.39} parent=0 // pred_check_branch
    %19 = sbr.rel (0) target = $region21
  $region20: #{transformer_forward.39} parent=0 // pred_region
    _
  $region21: #{transformer_forward.39} parent=0 // pred_fallthru
    _
  %p21 = scmp.eq.s32.totalorder 0, 0
  // Predicated region
  $region22: #{transformer_forward.39} parent=0 // pred_check
    %p22 = pneg %p21
  $region23: #{transformer_forward.39} parent=0 // pred_check_branch
    %24 = sbr.rel (%p22) target = $region25
  $region24: #{transformer_forward.39} parent=0 // pred_region
    %vm25 = vcmask 261120
    %26 = vst.msk [vmem:[#allocation2] sm:$0xff] %vm25, 0.0
    %27 = vst.msk [vmem:[#allocation2 + $0x8] sm:$0xff] %vm25, 0.0
  $region25: #{transformer_forward.39} parent=0 // pred_fallthru
    _
  %v28 = vld [vmem:[%s0] sm:$0xf]
  %v29 = vld [vmem:[%s0 + $0x4] sm:$0xf]
  %v30 = vld [vmem:[%s1] sm:$0xf]
  %v31 = vld [vmem:[%s1 + $0x4] sm:$0xf]
  %v32 = vld [vmem:[%s1 + $0x8] sm:$0xf]
  %v33 = vld [vmem:[%s1 + $0xc] sm:$0xf]
  %v34 = vld [vmem:[%s2] sm:$0x1]
  %v36 = vlaneseq
  %v37 = vshrl.u32 %v36, 7
  %v38 = vsub.s32 0, %v37
  %v39 = vrot.slane %v34, %v38
  %v43 = vunpack.c.l.b16 %v28
  %v44 = vunpack.c.l.b16 %v29
  %v45 = vpack.c.b16 %v44, %v43
  %v50 = vunpack.c.l.b16 %v30
  %v51 = vunpack.c.l.b16 %v31
  %v52 = vunpack.c.l.b16 %v32
  %v53 = vunpack.c.l.b16 %v33
  %v54 = vpack.c.b16 %v51, %v50
  %v55 = vpack.c.b16 %v53, %v52
  %vm58 = vcmask 261120
  %v60 = vsel %vm58, %v45, 0
  %62 = vmatprep.subr.bf16.mxu0 0
  %63 = vmatpush1.bf16.msra.mxu0 %v54
  %64 = vmatprep.subr.bf16.mxu0 0
  %65 = vmatpush1.bf16.msra.mxu0 %v55
  %66 = vmatprep.subr.bf16.mxu0 0
  %67 = vmatpush1.bf16.msra.mxu0 0
  %68 = vmatprep.subr.bf16.mxu0 0
  %69 = vmatpush1.bf16.msra.mxu0 0
  %70 = vmatprep.subr.bf16.mxu0 0
  %71 = vmatpush1.bf16.msra.mxu0 0
  %72 = vmatprep.subr.bf16.mxu0 0
  %73 = vmatpush1.bf16.msra.mxu0 0
  %74 = vmatprep.subr.bf16.mxu0 0
  %75 = vmatpush1.bf16.msra.mxu0 0
  %76 = vmatprep.subr.bf16.mxu0 0
  %77 = vmatpush1.bf16.msra.mxu0 0
  %78 = vmatprep.subr.bf16.mxu0 0
  %79 = vmatpush1.bf16.msra.mxu0 0
  %80 = vmatprep.subr.bf16.mxu0 0
  %81 = vmatpush1.bf16.msra.mxu0 0
  %82 = vmatprep.subr.bf16.mxu0 0
  %83 = vmatpush1.bf16.msra.mxu0 0
  %84 = vmatprep.subr.bf16.mxu0 0
  %85 = vmatpush1.bf16.msra.mxu0 0
  %86 = vmatprep.subr.bf16.mxu0 0
  %87 = vmatpush1.bf16.msra.mxu0 0
  %88 = vmatprep.subr.bf16.mxu0 0
  %89 = vmatpush1.bf16.msra.mxu0 0
  %90 = vmatprep.subr.bf16.mxu0 0
  %91 = vmatpush1.bf16.msra.mxu0 0
  %92 = vmatprep.subr.bf16.mxu0 0
  %93 = vmatpush1.bf16.msra.mxu0 0
  %94 = vmatprep.mubr.bf16.mxu0 0
  %95 = vmatmul.mubr.bf16.gmra.mrb[0].mxu0 %v60
  %v96 = vpop.f32.mrb[0].mxu0
  %v97 = vadd.f32 %v39, %v96
  %v98 = vpop.f32.mrb[0].mxu0
  %v99 = vpop.f32.mrb[0].mxu0
  %v100 = vadd.f32 %v39, %v99
  %v101 = vpop.f32.mrb[0].mxu0
  %102 = vdwg.mxu0
  %v103 = vmax.f32 %v97, 0.0
  %v104 = vmax.f32 %v100, 0.0
  %v105 = vld [vmem:[#allocation2] sm:$0xff]
  %v106 = vld [vmem:[#allocation2 + $0x8] sm:$0xff]
  %v107 = vpack.c.bf16 %v104, %v103
  %v108 = vld [vmem:[%s3] sm:$0xf]
  %v109 = vld [vmem:[%s3 + $0x4] sm:$0xf]
  %v110 = vld [vmem:[%s3 + $0x8] sm:$0xf]
  %v111 = vld [vmem:[%s3 + $0xc] sm:$0xf]
  %v112 = vld [vmem:[%s3 + $0x10] sm:$0xf]
  %v113 = vld [vmem:[%s3 + $0x14] sm:$0xf]
  %v114 = vld [vmem:[%s3 + $0x18] sm:$0xf]
  %v115 = vld [vmem:[%s3 + $0x1c] sm:$0xf]
  %v124 = vunpack.c.l.b16 %v108
  %v125 = vunpack.c.l.b16 %v109
  %v126 = vunpack.c.l.b16 %v110
  %v127 = vunpack.c.l.b16 %v111
  %v128 = vunpack.c.l.b16 %v112
  %v129 = vunpack.c.l.b16 %v113
  %v130 = vunpack.c.l.b16 %v114
  %v131 = vunpack.c.l.b16 %v115
  %v132 = vpack.c.b16 %v125, %v124
  %v133 = vpack.c.b16 %v127, %v126
  %v134 = vpack.c.b16 %v129, %v128
  %v135 = vpack.c.b16 %v131, %v130
  %vm140 = vcmask 523264
  %v142 = vsel %vm140, %v107, 0
  %144 = vmatprep.subr.bf16.mxu0 0
  %145 = vmatpush1.bf16.msra.mxu0 %v132
  %146 = vmatprep.subr.bf16.mxu0 0
  %147 = vmatpush1.bf16.msra.mxu0 %v133
  %148 = vmatprep.subr.bf16.mxu0 0
  %149 = vmatpush1.bf16.msra.mxu0 %v134
  %150 = vmatprep.subr.bf16.mxu0 0
  %151 = vmatpush1.bf16.msra.mxu0 %v135
  %152 = vmatprep.subr.bf16.mxu0 0
  %153 = vmatpush1.bf16.msra.mxu0 0
  %154 = vmatprep.subr.bf16.mxu0 0
  %155 = vmatpush1.bf16.msra.mxu0 0
  %156 = vmatprep.subr.bf16.mxu0 0
  %157 = vmatpush1.bf16.msra.mxu0 0
  %158 = vmatprep.subr.bf16.mxu0 0
  %159 = vmatpush1.bf16.msra.mxu0 0
  %160 = vmatprep.subr.bf16.mxu0 0
  %161 = vmatpush1.bf16.msra.mxu0 0
  %162 = vmatprep.subr.bf16.mxu0 0
  %163 = vmatpush1.bf16.msra.mxu0 0
  %164 = vmatprep.subr.bf16.mxu0 0
  %165 = vmatpush1.bf16.msra.mxu0 0
  %166 = vmatprep.subr.bf16.mxu0 0
  %167 = vmatpush1.bf16.msra.mxu0 0
  %168 = vmatprep.subr.bf16.mxu0 0
  %169 = vmatpush1.bf16.msra.mxu0 0
  %170 = vmatprep.subr.bf16.mxu0 0
  %171 = vmatpush1.bf16.msra.mxu0 0
  %172 = vmatprep.subr.bf16.mxu0 0
  %173 = vmatpush1.bf16.msra.mxu0 0
  %174 = vmatprep.subr.bf16.mxu0 0
  %175 = vmatpush1.bf16.msra.mxu0 0
  %176 = vmatprep.mubr.bf16.mxu0 0
  %177 = vmatmul.mubr.bf16.gmra.mrb[0].mxu0 %v142
  %v178 = vpop.f32.mrb[0].mxu0
  %v179 = vadd.f32 0.0, %v178
  %v180 = vpop.f32.mrb[0].mxu0
  %v181 = vpop.f32.mrb[0].mxu0
  %v182 = vadd.f32 0.0, %v181
  %v183 = vpop.f32.mrb[0].mxu0
  %184 = vdwg.mxu0
  %v185 = vadd.f32 %v105, %v179
  %v186 = vadd.f32 %v106, %v182
  %187 = vst.msk [vmem:[#allocation2] sm:$0xff] %vm58, %v185
  %188 = vst.msk [vmem:[#allocation2 + $0x8] sm:$0xff] %vm58, %v186
  // Predicated region
  $region26: #{transformer_forward.39} parent=0 // pred_check
    %p189 = pneg %p21
  $region27: #{transformer_forward.39} parent=0 // pred_check_branch
    %191 = sbr.rel (%p189) target = $region29
  $region28: #{transformer_forward.39} parent=0 // pred_region
    %v192 = vld [vmem:[#allocation2] sm:$0xff]
    %v193 = vld [vmem:[#allocation2 + $0x8] sm:$0xff]
    %v194 = vld [vmem:[%s4] sm:$0x1]
    %v196 = vlaneseq
    %v197 = vshrl.u32 %v196, 7
    %v198 = vsub.s32 0, %v197
    %v199 = vrot.slane %v194, %v198
    %v201 = vadd.f32 %v192, %v199
    %v202 = vadd.f32 %v193, %v199
    %v203 = vpack.c.bf16 %v202, %v201
    %v205 = vunpack.c.l.b16 %v203
    %v206 = vunpack.c.h.b16 %v203
    %v207 = vpack.c.b16 %v205, %v205
    %v208 = vpack.c.b16 %v206, %v206
    %vm211 = vcmask 257024
    %212 = vst.msk [vmem:[%s5] sm:$0xf] %vm211, %v207
    %213 = vst.msk [vmem:[%s5 + $0x4] sm:$0xf] %vm211, %v208
  $region29: #{transformer_forward.39} parent=0 // pred_fallthru
    _
  // Predicated region
  $region30: #{transformer_forward.39} parent=0 // pred_check
    _
  $region31: #{transformer_forward.39} parent=0 // pred_check_branch
    %215 = sbr.rel (0) target = $region33
  $region32: #{transformer_forward.39} parent=0 // pred_region
    _
  $region33: #{transformer_forward.39} parent=0 // pred_fallthru
    _
  // Predicated region
  $region34: #{transformer_forward.39} parent=0 // pred_check
    _
  $region35: #{transformer_forward.39} parent=0 // pred_check_branch
    %217 = sbr.rel (0) target = $region37
  $region36: #{transformer_forward.39} parent=0 // pred_region
    _
  $region37: #{transformer_forward.39} parent=0 // pred_fallthru
    _

// kernel: transformer_forward.52
$region0: #{transformer_forward.52}
  #allocation0 [shape = 'u32[]', space=smem, size = 0x4, offset = 0x4, fixed_abs, tag = 'smem constant byte address 0x4 - core index']
  #allocation1 [shape = 'u32[144,128]{1,0:T(1,128)}', space=vmem, size = 0x12000, scoped, tag = 'internal scratch']
  #allocation2 [shape = 'f32[16,64]{1,0:T(8,128)}', space=vmem, size = 0x2000, scoped, tag = 'scratch operand']
  %s0 = inlined_call_operand.vmem [shape: bf16[16,32], index: 0, kind: input, shape index: {}]
  %s1 = inlined_call_operand.vmem [shape: bf16[32,64], index: 1, kind: input, shape index: {}]
  %s2 = inlined_call_operand.vmem [shape: f32[1,64], index: 2, kind: input, shape index: {}]
  %s3 = inlined_call_operand.vmem [shape: bf16[16,64], index: 3, kind: output, shape index: {}]
  %s4 = sld [smem:[#allocation0]]
  $region30: #{transformer_forward.52} parent=0
    _
  %s6 = ssub.s32 1, %s4
  %s7 = scalar_select 0, %s6, %s4
  // Predicated region
  $region2: #{transformer_forward.52} parent=0 // pred_check
    _
  $region3: #{transformer_forward.52} parent=0 // pred_check_branch
    %9 = sbr.rel (0) target = $region5
  $region4: #{transformer_forward.52} parent=0 // pred_region
    _
  $region5: #{transformer_forward.52} parent=0 // pred_fallthru
    _
  // Predicated region
  $region6: #{transformer_forward.52} parent=0 // pred_check
    _
  $region7: #{transformer_forward.52} parent=0 // pred_check_branch
    %11 = sbr.rel (0) target = $region9
  $region8: #{transformer_forward.52} parent=0 // pred_region
    _
  $region9: #{transformer_forward.52} parent=0 // pred_fallthru
    _
  // Predicated region
  $region10: #{transformer_forward.52} parent=0 // pred_check
    _
  $region11: #{transformer_forward.52} parent=0 // pred_check_branch
    %13 = sbr.rel (0) target = $region13
  $region12: #{transformer_forward.52} parent=0 // pred_region
    _
  $region13: #{transformer_forward.52} parent=0 // pred_fallthru
    _
  %p15 = scmp.eq.s32.totalorder 0, 0
  // Predicated region
  $region14: #{transformer_forward.52} parent=0 // pred_check
    %p16 = pneg %p15
  $region15: #{transformer_forward.52} parent=0 // pred_check_branch
    %18 = sbr.rel (%p16) target = $region17
  $region16: #{transformer_forward.52} parent=0 // pred_region
    %vm19 = vcmask 523264
    %20 = vst.msk [vmem:[#allocation2] sm:$0xff] %vm19, 0.0
    %21 = vst.msk [vmem:[#allocation2 + $0x8] sm:$0xff] %vm19, 0.0
  $region17: #{transformer_forward.52} parent=0 // pred_fallthru
    _
  %v22 = vld [vmem:[#allocation2] sm:$0xff]
  %v23 = vld [vmem:[#allocation2 + $0x8] sm:$0xff]
  %v24 = vld [vmem:[%s0] sm:$0xf]
  %v25 = vld [vmem:[%s0 + $0x4] sm:$0xf]
  %v26 = vld [vmem:[%s1] sm:$0xf]
  %v27 = vld [vmem:[%s1 + $0x4] sm:$0xf]
  %v28 = vld [vmem:[%s1 + $0x8] sm:$0xf]
  %v29 = vld [vmem:[%s1 + $0xc] sm:$0xf]
  %v32 = vunpack.c.l.b16 %v24
  %v33 = vunpack.c.l.b16 %v25
  %v34 = vpack.c.b16 %v33, %v32
  %v39 = vunpack.c.l.b16 %v26
  %v40 = vunpack.c.l.b16 %v27
  %v41 = vunpack.c.l.b16 %v28
  %v42 = vunpack.c.l.b16 %v29
  %v43 = vpack.c.b16 %v40, %v39
  %v44 = vpack.c.b16 %v42, %v41
  %vm47 = vcmask 261120
  %v49 = vsel %vm47, %v34, 0
  %51 = vmatprep.subr.bf16.mxu0 0
  %52 = vmatpush1.bf16.msra.mxu0 %v43
  %53 = vmatprep.subr.bf16.mxu0 0
  %54 = vmatpush1.bf16.msra.mxu0 %v44
  %55 = vmatprep.subr.bf16.mxu0 0
  %56 = vmatpush1.bf16.msra.mxu0 0
  %57 = vmatprep.subr.bf16.mxu0 0
  %58 = vmatpush1.bf16.msra.mxu0 0
  %59 = vmatprep.subr.bf16.mxu0 0
  %60 = vmatpush1.bf16.msra.mxu0 0
  %61 = vmatprep.subr.bf16.mxu0 0
  %62 = vmatpush1.bf16.msra.mxu0 0
  %63 = vmatprep.subr.bf16.mxu0 0
  %64 = vmatpush1.bf16.msra.mxu0 0
  %65 = vmatprep.subr.bf16.mxu0 0
  %66 = vmatpush1.bf16.msra.mxu0 0
  %67 = vmatprep.subr.bf16.mxu0 0
  %68 = vmatpush1.bf16.msra.mxu0 0
  %69 = vmatprep.subr.bf16.mxu0 0
  %70 = vmatpush1.bf16.msra.mxu0 0
  %71 = vmatprep.subr.bf16.mxu0 0
  %72 = vmatpush1.bf16.msra.mxu0 0
  %73 = vmatprep.subr.bf16.mxu0 0
  %74 = vmatpush1.bf16.msra.mxu0 0
  %75 = vmatprep.subr.bf16.mxu0 0
  %76 = vmatpush1.bf16.msra.mxu0 0
  %77 = vmatprep.subr.bf16.mxu0 0
  %78 = vmatpush1.bf16.msra.mxu0 0
  %79 = vmatprep.subr.bf16.mxu0 0
  %80 = vmatpush1.bf16.msra.mxu0 0
  %81 = vmatprep.subr.bf16.mxu0 0
  %82 = vmatpush1.bf16.msra.mxu0 0
  %83 = vmatprep.mubr.bf16.mxu0 0
  %84 = vmatmul.mubr.bf16.gmra.mrb[0].mxu0 %v49
  %v85 = vpop.f32.mrb[0].mxu0
  %v86 = vadd.f32 0.0, %v85
  %v87 = vpop.f32.mrb[0].mxu0
  %v88 = vpop.f32.mrb[0].mxu0
  %v89 = vadd.f32 0.0, %v88
  %v90 = vpop.f32.mrb[0].mxu0
  %91 = vdwg.mxu0
  %v92 = vadd.f32 %v22, %v86
  %v93 = vadd.f32 %v23, %v89
  %vm94 = vcmask 523264
  %95 = vst.msk [vmem:[#allocation2] sm:$0xff] %vm94, %v92
  %96 = vst.msk [vmem:[#allocation2 + $0x8] sm:$0xff] %vm94, %v93
  // Predicated region
  $region18: #{transformer_forward.52} parent=0 // pred_check
    %p97 = pneg %p15
  $region19: #{transformer_forward.52} parent=0 // pred_check_branch
    %99 = sbr.rel (%p97) target = $region21
  $region20: #{transformer_forward.52} parent=0 // pred_region
    %v100 = vld [vmem:[#allocation2] sm:$0xff]
    %v101 = vld [vmem:[#allocation2 + $0x8] sm:$0xff]
    %v102 = vld [vmem:[%s2] sm:$0x1]
    %v104 = vlaneseq
    %v105 = vshrl.u32 %v104, 7
    %v106 = vsub.s32 0, %v105
    %v107 = vrot.slane %v102, %v106
    %v109 = vadd.f32 %v100, %v107
    %v110 = vadd.f32 %v101, %v107
    %v111 = vpack.c.bf16 %v110, %v109
    %v113 = vunpack.c.l.b16 %v111
    %v114 = vunpack.c.h.b16 %v111
    %v115 = vpack.c.b16 %v113, %v113
    %v116 = vpack.c.b16 %v114, %v114
    %vm119 = vcmask 519168
    %120 = vst.msk [vmem:[%s3] sm:$0xf] %vm119, %v115
    %121 = vst.msk [vmem:[%s3 + $0x4] sm:$0xf] %vm119, %v116
  $region21: #{transformer_forward.52} parent=0 // pred_fallthru
    _
  // Predicated region
  $region22: #{transformer_forward.52} parent=0 // pred_check
    _
  $region23: #{transformer_forward.52} parent=0 // pred_check_branch
    %123 = sbr.rel (0) target = $region25
  $region24: #{transformer_forward.52} parent=0 // pred_region
    _
  $region25: #{transformer_forward.52} parent=0 // pred_fallthru
    _
  // Predicated region
  $region26: #{transformer_forward.52} parent=0 // pred_check
    _
  $region27: #{transformer_forward.52} parent=0 // pred_check_branch
    %125 = sbr.rel (0) target = $region29
  $region28: #{transformer_forward.52} parent=0 // pred_region
    _
  $region29: #{transformer_forward.52} parent=0 // pred_fallthru
    _

// kernel: transformer_forward.48
$region0: #{transformer_forward.48}
  #allocation0 [shape = 'u32[]', space=smem, size = 0x4, offset = 0x4, fixed_abs, tag = 'smem constant byte address 0x4 - core index']
  #allocation1 [shape = 'u32[144,128]{1,0:T(1,128)}', space=vmem, size = 0x12000, scoped, tag = 'internal scratch']
  #allocation2 [shape = 'f32[4,8,1]{2,1,0:T(8,128)}', space=vmem, size = 0x4000, scoped, tag = 'scratch operand']
  #allocation3 [shape = 'f32[4,8,1]{2,1,0:T(8,128)}', space=vmem, size = 0x4000, scoped, tag = 'scratch operand']
  #allocation4 [shape = 'f32[4,8,8]{2,1,0:T(8,128)}', space=vmem, size = 0x4000, scoped, tag = 'scratch operand']
  %s0 = inlined_call_operand.vmem [shape: bf16[2,8,32], index: 0, kind: input, shape index: {}]
  %s1 = inlined_call_operand.vmem [shape: bf16[2,8,32], index: 1, kind: input, shape index: {}]
  %s2 = inlined_call_operand.vmem [shape: bf16[2,8,32], index: 2, kind: input, shape index: {}]
  %s3 = inlined_call_operand.vmem [shape: f32[2,1,8], index: 3, kind: input, shape index: {}]
  %s4 = inlined_call_operand.vmem [shape: bf16[2,8,32], index: 4, kind: output, shape index: {}]
  %s5 = sld [smem:[#allocation0]]
  $region57: #{transformer_forward.48} parent=0
    _
  %s7 = ssub.s32 1, %s5
  %s8 = scalar_select 0, %s7, %s5
  loop: start=0, step=1, limit=4
  $region2: #{transformer_forward.48} parent=0 // loop_pre_header
    _
  $region3: #{transformer_forward.48} parent=0 // loop_header
    %s10 = sphi 0, %s14
    %p11 = scmp.ge.s32.totalorder %s10, 4
    %s17 = sphi 0, %s29
    %s18 = sphi 0, %s25
    %s19 = sphi 0, %s17
    %s20 = sphi 0, %s18
    %s21 = sphi 0, %s19
    %s22 = sphi 0, %s20
    %s32 = sphi 0, %s34
    %s35 = sphi 0, %s32
    %s36 = sphi 0, %s35
    %s52 = sphi 0, %s36
    %s60 = sphi 0, %s62
    %s63 = sphi 0, %s60
    %s64 = sphi 0, %s63
    %s80 = sphi 0, %s64
    %s88 = sphi 0, %s90
    %s91 = sphi 0, %s88
    %s92 = sphi 0, %s91
    %s108 = sphi 0, %s92
    %s116 = sphi 0, %s118
    %s119 = sphi 0, %s116
    %s120 = sphi 0, %s119
    %s136 = sphi 0, %s120
    %s142 = sphi 0, %s144
    %s145 = sphi 0, %s142
    %s146 = sphi 0, %s145
    %s162 = sphi 0, %s146
  $region4: #{transformer_forward.48} parent=0 // loop_header_branch
    %13 = sbr.rel (%p11) target = $region8
  $region5: #{transformer_forward.48} parent=0 // loop_body
    %s15 = ssub.s32 %s10, 1
    %s16 = ssub.s32 %s10, 2
    %s23 = sadd.s32 1, %s18
    %p24 = scmp.ge.s32.totalorder %s23, 1
    %s25 = scalar_select %p24, 0, %s23
    %s26 = sadd.s32 1, %s17
    %s27 = scalar_select %p24, %s26, %s17
    %p28 = scmp.ge.s32.totalorder %s27, 2
    %s29 = scalar_select %p28, 0, %s27
    %s30 = ssub.s32 %s17, %s29
    %p31 = scmp.eq.s32.totalorder %s30, 0
    %s33 = sadd.s32 %s32, 1
    %s34 = scalar_select %p31, %s32, %s33
    %p37 = pneg %p31
    %p38 = scmp.eq.s32.totalorder %s10, 1
    %p39 = por %p37, %p38
    %p40 = scmp.ne.s32.totalorder %s32, %s35
    %p41 = scmp.eq.s32.totalorder %s10, 0
    %p42 = por %p40, %p41
    %p43 = scmp.ne.s32.totalorder %s32, %s35
    %p44 = scmp.eq.s32.totalorder %s15, 1
    %p45 = por %p43, %p44
    %p46 = scmp.ne.s32.totalorder %s35, %s36
    %p47 = scmp.eq.s32.totalorder %s15, 0
    %p48 = por %p46, %p47
    %p49 = scmp.ne.s32.totalorder %s35, %s36
    %p50 = scmp.eq.s32.totalorder %s16, 1
    %p51 = por %p49, %p50
    %p53 = scmp.ne.s32.totalorder %s36, %s52
    %p54 = scmp.eq.s32.totalorder %s16, 0
    %p55 = por %p53, %p54
    %s56 = ssub.s32 %s17, %s29
    %s57 = ssub.s32 %s18, %s25
    %s58 = sor.u32 %s56, %s57
    %p59 = scmp.eq.s32.totalorder %s58, 0
    %s61 = sadd.s32 %s60, 1
    %s62 = scalar_select %p59, %s60, %s61
    %p65 = pneg %p59
    %p66 = scmp.eq.s32.totalorder %s10, 1
    %p67 = por %p65, %p66
    %p68 = scmp.ne.s32.totalorder %s60, %s63
    %p69 = scmp.eq.s32.totalorder %s10, 0
    %p70 = por %p68, %p69
    %p71 = scmp.ne.s32.totalorder %s60, %s63
    %p72 = scmp.eq.s32.totalorder %s15, 1
    %p73 = por %p71, %p72
    %p74 = scmp.ne.s32.totalorder %s63, %s64
    %p75 = scmp.eq.s32.totalorder %s15, 0
    %p76 = por %p74, %p75
    %p77 = scmp.ne.s32.totalorder %s63, %s64
    %p78 = scmp.eq.s32.totalorder %s16, 1
    %p79 = por %p77, %p78
    %p81 = scmp.ne.s32.totalorder %s64, %s80
    %p82 = scmp.eq.s32.totalorder %s16, 0
    %p83 = por %p81, %p82
    %s84 = ssub.s32 %s17, %s29
    %s85 = ssub.s32 %s18, %s25
    %s86 = sor.u32 %s84, %s85
    %p87 = scmp.eq.s32.totalorder %s86, 0
    %s89 = sadd.s32 %s88, 1
    %s90 = scalar_select %p87, %s88, %s89
    %p93 = pneg %p87
    %p94 = scmp.eq.s32.totalorder %s10, 1
    %p95 = por %p93, %p94
    %p96 = scmp.ne.s32.totalorder %s88, %s91
    %p97 = scmp.eq.s32.totalorder %s10, 0
    %p98 = por %p96, %p97
    %p99 = scmp.ne.s32.totalorder %s88, %s91
    %p100 = scmp.eq.s32.totalorder %s15, 1
    %p101 = por %p99, %p100
    %p102 = scmp.ne.s32.totalorder %s91, %s92
    %p103 = scmp.eq.s32.totalorder %s15, 0
    %p104 = por %p102, %p103
    %p105 = scmp.ne.s32.totalorder %s91, %s92
    %p106 = scmp.eq.s32.totalorder %s16, 1
    %p107 = por %p105, %p106
    %p109 = scmp.ne.s32.totalorder %s92, %s108
    %p110 = scmp.eq.s32.totalorder %s16, 0
    %p111 = por %p109, %p110
    %s112 = ssub.s32 %s17, %s29
    %s113 = ssub.s32 %s18, %s25
    %s114 = sor.u32 %s112, %s113
    %p115 = scmp.eq.s32.totalorder %s114, 0
    %s117 = sadd.s32 %s116, 1
    %s118 = scalar_select %p115, %s116, %s117
    %p121 = pneg %p115
    %p122 = scmp.eq.s32.totalorder %s10, 1
    %p123 = por %p121, %p122
    %p124 = scmp.ne.s32.totalorder %s116, %s119
    %p125 = scmp.eq.s32.totalorder %s10, 0
    %p126 = por %p124, %p125
    %p127 = scmp.ne.s32.totalorder %s116, %s119
    %p128 = scmp.eq.s32.totalorder %s15, 1
    %p129 = por %p127, %p128
    %p130 = scmp.ne.s32.totalorder %s119, %s120
    %p131 = scmp.eq.s32.totalorder %s15, 0
    %p132 = por %p130, %p131
    %p133 = scmp.ne.s32.totalorder %s119, %s120
    %p134 = scmp.eq.s32.totalorder %s16, 1
    %p135 = por %p133, %p134
    %p137 = scmp.ne.s32.totalorder %s120, %s136
    %p138 = scmp.eq.s32.totalorder %s16, 0
    %p139 = por %p137, %p138
    %s140 = ssub.s32 %s17, %s29
    %p141 = scmp.eq.s32.totalorder %s140, 0
    %s143 = sadd.s32 %s142, 1
    %s144 = scalar_select %p141, %s142, %s143
    %p147 = pneg %p141
    %p148 = scmp.eq.s32.totalorder %s10, 1
    %p149 = por %p147, %p148
    %p150 = scmp.ne.s32.totalorder %s142, %s145
    %p151 = scmp.eq.s32.totalorder %s10, 0
    %p152 = por %p150, %p151
    %p153 = scmp.ne.s32.totalorder %s142, %s145
    %p154 = scmp.eq.s32.totalorder %s15, 1
    %p155 = por %p153, %p154
    %p156 = scmp.ne.s32.totalorder %s145, %s146
    %p157 = scmp.eq.s32.totalorder %s15, 0
    %p158 = por %p156, %p157
    %p159 = scmp.ne.s32.totalorder %s145, %s146
    %p160 = scmp.eq.s32.totalorder %s16, 1
    %p161 = por %p159, %p160
    %p163 = scmp.ne.s32.totalorder %s146, %s162
    %p164 = scmp.eq.s32.totalorder %s16, 0
    %p165 = por %p163, %p164
    %p166 = scmp.le.s32.totalorder 1, %s10
    %p167 = scmp.lt.s32.totalorder %s10, 3
    %p168 = pnand %p166, %p167
    %p169 = pneg %p168
    // Predicated region
    $region9: #{transformer_forward.48} parent=5 // pred_check
      _
    $region10: #{transformer_forward.48} parent=5 // pred_check_branch
      %171 = sbr.rel (%p168) target = $region12
    $region11: #{transformer_forward.48} parent=5 // pred_region
      %s172 = ssub.s32 %s10, 1
    $region12: #{transformer_forward.48} parent=5 // pred_fallthru
      _
    %p173 = scmp.lt.s32.totalorder %s10, 2
    // Predicated region
    $region13: #{transformer_forward.48} parent=5 // pred_check
      %p174 = pneg %p173
    $region14: #{transformer_forward.48} parent=5 // pred_check_branch
      %176 = sbr.rel (%p174) target = $region16
    $region15: #{transformer_forward.48} parent=5 // pred_region
      // Predicated region
      $region17: #{transformer_forward.48} parent=15 // pred_check
        %p177 = pneg %p42
      $region18: #{transformer_forward.48} parent=15 // pred_check_branch
        %179 = sbr.rel (%p177) target = $region20
      $region19: #{transformer_forward.48} parent=15 // pred_region
        %p180 = scmp.lt.s32.totalorder %s17, 1
        %s181 = scalar_select %p180, %s17, 1
        %s182 = smul.addr %s181, 4
        %s183 = scalar_lea.vmem %s0, %s182
      $region20: #{transformer_forward.48} parent=15 // pred_fallthru
        _
      // Predicated region
      $region21: #{transformer_forward.48} parent=15 // pred_check
        %p184 = pneg %p70
      $region22: #{transformer_forward.48} parent=15 // pred_check_branch
        %186 = sbr.rel (%p184) target = $region24
      $region23: #{transformer_forward.48} parent=15 // pred_region
        %p187 = scmp.lt.s32.totalorder %s17, 1
        %s188 = scalar_select %p187, %s17, 1
        %p189 = scmp.lt.s32.totalorder %s18, 0
        %s190 = scalar_select %p189, %s18, 0
        %s191 = sadd.s32 %s190, %s188
        %s192 = smul.addr %s191, 4
        %s193 = scalar_lea.vmem %s1, %s192
      $region24: #{transformer_forward.48} parent=15 // pred_fallthru
        _
      // Predicated region
      $region25: #{transformer_forward.48} parent=15 // pred_check
        %p194 = pneg %p98
      $region26: #{transformer_forward.48} parent=15 // pred_check_branch
        %196 = sbr.rel (%p194) target = $region28
      $region27: #{transformer_forward.48} parent=15 // pred_region
        %p197 = scmp.lt.s32.totalorder %s17, 1
        %s198 = scalar_select %p197, %s17, 1
        %p199 = scmp.lt.s32.totalorder %s18, 0
        %s200 = scalar_select %p199, %s18, 0
        %s201 = sadd.s32 %s200, %s198
        %s202 = smul.addr %s201, 4
        %s203 = scalar_lea.vmem %s2, %s202
      $region28: #{transformer_forward.48} parent=15 // pred_fallthru
        _
      // Predicated region
      $region29: #{transformer_forward.48} parent=15 // pred_check
        %p204 = pneg %p126
      $region30: #{transformer_forward.48} parent=15 // pred_check_branch
        %206 = sbr.rel (%p204) target = $region32
      $region31: #{transformer_forward.48} parent=15 // pred_region
        %p207 = scmp.lt.s32.totalorder %s17, 1
        %s208 = scalar_select %p207, %s17, 1
        %p209 = scmp.lt.s32.totalorder %s18, 0
        %s210 = scalar_select %p209, %s18, 0
        %s211 = sadd.s32 %s210, %s208
        %s212 = scalar_lea.vmem %s3, %s211
      $region32: #{transformer_forward.48} parent=15 // pred_fallthru
        _
    $region16: #{transformer_forward.48} parent=5 // pred_fallthru
      _
    %p213 = scmp.le.s32.totalorder 1, %s10
    %p214 = scmp.lt.s32.totalorder %s10, 3
    %p215 = pnand %p213, %p214
    %p216 = pneg %p215
    // Predicated region
    $region33: #{transformer_forward.48} parent=5 // pred_check
      _
    $region34: #{transformer_forward.48} parent=5 // pred_check_branch
      %218 = sbr.rel (%p215) target = $region36
    $region35: #{transformer_forward.48} parent=5 // pred_region
      %s219 = ssub.s32 %s10, 1
      %p220 = scmp.lt.s32.totalorder %s19, 1
      %s221 = scalar_select %p220, %s19, 1
      %s222 = smul.addr %s221, 4
      %s223 = scalar_lea.vmem %s0, %s222
      %p224 = pneg %p48
      %p225 = pneg %p45
      %p226 = scmp.lt.s32.totalorder %s19, 1
      %s227 = scalar_select %p226, %s19, 1
      %p228 = scmp.lt.s32.totalorder %s20, 0
      %s229 = scalar_select %p228, %s20, 0
      %s230 = sadd.s32 %s229, %s227
      %s231 = smul.addr %s230, 4
      %s232 = scalar_lea.vmem %s1, %s231
      %p233 = pneg %p76
      %p234 = pneg %p73
      %p235 = scmp.lt.s32.totalorder %s19, 1
      %s236 = scalar_select %p235, %s19, 1
      %p237 = scmp.lt.s32.totalorder %s20, 0
      %s238 = scalar_select %p237, %s20, 0
      %s239 = sadd.s32 %s238, %s236
      %s240 = smul.addr %s239, 4
      %s241 = scalar_lea.vmem %s2, %s240
      %p242 = pneg %p104
      %p243 = pneg %p101
      %p244 = scmp.lt.s32.totalorder %s19, 1
      %s245 = scalar_select %p244, %s19, 1
      %p246 = scmp.lt.s32.totalorder %s20, 0
      %s247 = scalar_select %p246, %s20, 0
      %s248 = sadd.s32 %s247, %s245
      %s249 = scalar_lea.vmem %s3, %s248
      %p250 = pneg %p132
      %p251 = pneg %p129
      %p252 = pneg %p158
      %p253 = pneg %p155
      %p254 = scmp.lt.s32.totalorder %s19, 1
      %s255 = scalar_select %p254, %s19, 1
      %s256 = smul.addr %s255, 4
      %s257 = scalar_lea.vmem %s4, %s256
      %p258 = scmp.lt.s32.totalorder %s19, 1
      %s259 = scalar_select %p258, %s19, 1
      %s260 = smul.addr %s259, 4
      %s261 = scalar_lea.vmem %s0, %s260
      %p262 = scmp.lt.s32.totalorder %s19, 1
      %s263 = scalar_select %p262, %s19, 1
      %p264 = scmp.lt.s32.totalorder %s20, 0
      %s265 = scalar_select %p264, %s20, 0
      %s266 = sadd.s32 %s265, %s263
      %s267 = smul.addr %s266, 4
      %s268 = scalar_lea.vmem %s1, %s267
      %p269 = scmp.lt.s32.totalorder %s19, 1
      %s270 = scalar_select %p269, %s19, 1
      %p271 = scmp.lt.s32.totalorder %s20, 0
      %s272 = scalar_select %p271, %s20, 0
      %s273 = sadd.s32 %s272, %s270
      %s274 = smul.addr %s273, 4
      %s275 = scalar_lea.vmem %s2, %s274
      %p276 = scmp.lt.s32.totalorder %s19, 1
      %s277 = scalar_select %p276, %s19, 1
      %p278 = scmp.lt.s32.totalorder %s20, 0
      %s279 = scalar_select %p278, %s20, 0
      %s280 = sadd.s32 %s279, %s277
      %s281 = scalar_lea.vmem %s3, %s280
      %p282 = scmp.lt.s32.totalorder %s19, 1
      %s283 = scalar_select %p282, %s19, 1
      %s284 = smul.addr %s283, 4
      %s285 = scalar_lea.vmem %s4, %s284
      %p287 = scmp.eq.s32.totalorder %s20, 0
      // Predicated region
      $region37: #{transformer_forward.48} parent=35 // pred_check
        %p288 = pneg %p287
      $region38: #{transformer_forward.48} parent=35 // pred_check_branch
        %290 = sbr.rel (%p288) target = $region40
      $region39: #{transformer_forward.48} parent=35 // pred_region
        %vm291 = vcmask 7168
        %292 = vst.msk [vmem:[#allocation2] sm:$0xff] %vm291, -inf
        %293 = vst.msk [vmem:[#allocation2 + $0x8] sm:$0xff] %vm291, -inf
        %294 = vst.msk [vmem:[#allocation2 + $0x10] sm:$0xff] %vm291, -inf
        %295 = vst.msk [vmem:[#allocation2 + $0x18] sm:$0xff] %vm291, -inf
        %296 = vst.msk [vmem:[#allocation3] sm:$0xff] %vm291, 0.0
        %297 = vst.msk [vmem:[#allocation3 + $0x8] sm:$0xff] %vm291, 0.0
        %298 = vst.msk [vmem:[#allocation3 + $0x10] sm:$0xff] %vm291, 0.0
        %299 = vst.msk [vmem:[#allocation3 + $0x18] sm:$0xff] %vm291, 0.0
        %vm300 = vcmask 64512
        %301 = vst.msk [vmem:[#allocation4] sm:$0xff] %vm300, 0.0
        %302 = vst.msk [vmem:[#allocation4 + $0x8] sm:$0xff] %vm300, 0.0
        %303 = vst.msk [vmem:[#allocation4 + $0x10] sm:$0xff] %vm300, 0.0
        %304 = vst.msk [vmem:[#allocation4 + $0x18] sm:$0xff] %vm300, 0.0
      $region40: #{transformer_forward.48} parent=35 // pred_fallthru
        _
      %v305 = vld [vmem:[%s261] sm:$0xf]
      %v306 = vld [vmem:[%s268] sm:$0xf]
      %v307 = vld [vmem:[%s275] sm:$0xf]
      %v308 = vld [vmem:[%s281] sm:$0x1]
      %v309 = vlaneseq
      %v310 = vshrl.u32 %v309, 7
      %v311 = vlaneseq
      %v312 = vand.u32 %v311, 127
      %s313 = smul.u32 %s20, 8
      %v314 = vstv %s313
      %v315 = vadd.s32 %v312, %v314
      %vm316 = vcmp.gt.s32.totalorder %v315, %v310
      %v317 = vsel %vm316, -1e+09, 0.0
      %v319 = vlaneseq
      %v320 = vshrl.u32 %v319, 7
      %v321 = vsub.s32 0, %v320
      %v322 = vrot.slane %v308, %v321
      %v324 = vadd.f32 %v322, %v317
      %vm325 = vcmask 64512
      %v327 = vsel %vm325, %v305, 0
      %v330 = vsel %vm325, %v306, 0
      %332 = vmatprep.subr.bf16.mxu0 0
      %333 = vmatpush1.bf16.xpose.msra.mxu0 %v330
      %334 = vmatprep.subr.bf16.mxu0 0
      %335 = vmatpush1.bf16.xpose.msra.mxu0 0
      %336 = vmatprep.subr.bf16.mxu0 0
      %337 = vmatpush1.bf16.xpose.msra.mxu0 0
      %338 = vmatprep.subr.bf16.mxu0 0
      %339 = vmatpush1.bf16.xpose.msra.mxu0 0
      %340 = vmatprep.subr.bf16.mxu0 0
      %341 = vmatpush1.bf16.xpose.msra.mxu0 0
      %342 = vmatprep.subr.bf16.mxu0 0
      %343 = vmatpush1.bf16.xpose.msra.mxu0 0
      %344 = vmatprep.subr.bf16.mxu0 0
      %345 = vmatpush1.bf16.xpose.msra.mxu0 0
      %346 = vmatprep.subr.bf16.mxu0 0
      %347 = vmatpush1.bf16.xpose.msra.mxu0 0
      %348 = vmatprep.subr.bf16.mxu0 0
      %349 = vmatpush1.bf16.xpose.msra.mxu0 0
      %350 = vmatprep.subr.bf16.mxu0 0
      %351 = vmatpush1.bf16.xpose.msra.mxu0 0
      %352 = vmatprep.subr.bf16.mxu0 0
      %353 = vmatpush1.bf16.xpose.msra.mxu0 0
      %354 = vmatprep.subr.bf16.mxu0 0
      %355 = vmatpush1.bf16.xpose.msra.mxu0 0
      %356 = vmatprep.subr.bf16.mxu0 0
      %357 = vmatpush1.bf16.xpose.msra.mxu0 0
      %358 = vmatprep.subr.bf16.mxu0 0
      %359 = vmatpush1.bf16.xpose.msra.mxu0 0
      %360 = vmatprep.subr.bf16.mxu0 0
      %361 = vmatpush1.bf16.xpose.msra.mxu0 0
      %362 = vmatprep.subr.bf16.mxu0 0
      %363 = vmatpush1.bf16.xpose.msra.mxu0 0
      %364 = vmatprep.mubr.bf16.mxu0 0
      %365 = vmatmul.mubr.bf16.gmra.mrb[0].mxu0 %v327
      %v366 = vpop.f32.mrb[0].mxu0
      %v367 = vadd.f32 0.0, %v366
      %v368 = vpop.f32.mrb[0].mxu0
      %v369 = vpop.f32.mrb[0].mxu0
      %v370 = vpop.f32.mrb[0].mxu0
      %371 = vdwg.mxu0
      %v372 = vmul.f32 %v367, 0.35355338
      %v373 = vadd.f32 %v372, %v324
      %v374 = vld [vmem:[#allocation2] sm:$0xff]
      %v375 = vsel %vm325, %v373, -inf
      %376 = vmax.xlane.f32.xlu0 %v375
      %v377 = vpop.xlane.xlu0 %376
      %v378 = vmax.f32 %v374, %v377
      %v379 = vsub.f32 %v374, %v378
      %v380 = vmul.f32 %v379, 1.442695
      %v381 = vpow.pop %v380
      %383 = vset.pattern.permute.xlu0 0
      %384 = vperm.xlu0 %383, %v378
      %v385 = vpop.permute.xlu0 %384
      %v387 = vsub.f32 %v373, %v385
      %v388 = vmul.f32 %v387, 1.442695
      %v389 = vpow.pop %v388
      %v390 = vld [vmem:[#allocation3] sm:$0xff]
      %v391 = vmul.f32 %v381, %v390
      %v392 = vsel %vm325, %v389, 0.0
      %393 = vadd.xlane.f32.xlu0 %v392
      %v394 = vpop.xlane.xlu0 %393
      %v395 = vadd.f32 %v391, %v394
      %vm396 = vcmask 7168
      %397 = vst.msk [vmem:[#allocation3] sm:$0xff] %vm396, %v395
      %v398 = vld [vmem:[#allocation4] sm:$0xff]
      %400 = vset.pattern.permute.xlu0 0
      %401 = vperm.xlu0 %400, %v381
      %v402 = vpop.permute.xlu0 %401
      %v404 = vmul.f32 %v402, %v398
      %v405 = vpack.c.bf16 %v389, %v389
      %v407 = vsel %vm325, %v405, 0
      %vm409 = vcmask 1043456
      %v411 = vsel %vm409, %v307, 0
      %413 = vmatprep.subr.bf16.mxu0 0
      %414 = vmatpush1.bf16.msra.mxu0 %v411
      %415 = vmatprep.subr.bf16.mxu0 0
      %416 = vmatpush1.bf16.msra.mxu0 0
      %417 = vmatprep.subr.bf16.mxu0 0
      %418 = vmatpush1.bf16.msra.mxu0 0
      %419 = vmatprep.subr.bf16.mxu0 0
      %420 = vmatpush1.bf16.msra.mxu0 0
      %421 = vmatprep.subr.bf16.mxu0 0
      %422 = vmatpush1.bf16.msra.mxu0 0
      %423 = vmatprep.subr.bf16.mxu0 0
      %424 = vmatpush1.bf16.msra.mxu0 0
      %425 = vmatprep.subr.bf16.mxu0 0
      %426 = vmatpush1.bf16.msra.mxu0 0
      %427 = vmatprep.subr.bf16.mxu0 0
      %428 = vmatpush1.bf16.msra.mxu0 0
      %429 = vmatprep.subr.bf16.mxu0 0
      %430 = vmatpush1.bf16.msra.mxu0 0
      %431 = vmatprep.subr.bf16.mxu0 0
      %432 = vmatpush1.bf16.msra.mxu0 0
      %433 = vmatprep.subr.bf16.mxu0 0
      %434 = vmatpush1.bf16.msra.mxu0 0
      %435 = vmatprep.subr.bf16.mxu0 0
      %436 = vmatpush1.bf16.msra.mxu0 0
      %437 = vmatprep.subr.bf16.mxu0 0
      %438 = vmatpush1.bf16.msra.mxu0 0
      %439 = vmatprep.subr.bf16.mxu0 0
      %440 = vmatpush1.bf16.msra.mxu0 0
      %441 = vmatprep.subr.bf16.mxu0 0
      %442 = vmatpush1.bf16.msra.mxu0 0
      %443 = vmatprep.subr.bf16.mxu0 0
      %444 = vmatpush1.bf16.msra.mxu0 0
      %445 = vmatprep.mubr.bf16.mxu0 0
      %446 = vmatmul.mubr.bf16.gmra.mrb[0].mxu0 %v407
      %v447 = vpop.f32.mrb[0].mxu0
      %v448 = vadd.f32 0.0, %v447
      %v449 = vpop.f32.mrb[0].mxu0
      %v450 = vpop.f32.mrb[0].mxu0
      %v451 = vpop.f32.mrb[0].mxu0
      %452 = vdwg.mxu0
      %v453 = vadd.f32 %v404, %v448
      %454 = vst.msk [vmem:[#allocation4] sm:$0xff] %vm325, %v453
      %455 = vst.msk [vmem:[#allocation2] sm:$0xff] %vm396, %v378
      %v457 = vunpack.c.l.b16 %v305
      %v458 = vpack.c.b16 %v457, %v457
      %459 = vrot.lane.b32.xlu0 %v458, 120
      %v460 = vpop.permute.xlu0 %459
      %v462 = vunpack.c.l.b16 %v306
      %v463 = vpack.c.b16 %v462, %v462
      %464 = vrot.lane.b32.xlu0 %v463, 120
      %v465 = vpop.permute.xlu0 %464
      %v467 = vsel %vm325, %v460, 0
      %v470 = vsel %vm325, %v465, 0
      %472 = vmatprep.subr.bf16.mxu0 0
      %473 = vmatpush1.bf16.xpose.msra.mxu0 %v470
      %474 = vmatprep.subr.bf16.mxu0 0
      %475 = vmatpush1.bf16.xpose.msra.mxu0 0
      %476 = vmatprep.subr.bf16.mxu0 0
      %477 = vmatpush1.bf16.xpose.msra.mxu0 0
      %478 = vmatprep.subr.bf16.mxu0 0
      %479 = vmatpush1.bf16.xpose.msra.mxu0 0
      %480 = vmatprep.subr.bf16.mxu0 0
      %481 = vmatpush1.bf16.xpose.msra.mxu0 0
      %482 = vmatprep.subr.bf16.mxu0 0
      %483 = vmatpush1.bf16.xpose.msra.mxu0 0
      %484 = vmatprep.subr.bf16.mxu0 0
      %485 = vmatpush1.bf16.xpose.msra.mxu0 0
      %486 = vmatprep.subr.bf16.mxu0 0
      %487 = vmatpush1.bf16.xpose.msra.mxu0 0
      %488 = vmatprep.subr.bf16.mxu0 0
      %489 = vmatpush1.bf16.xpose.msra.mxu0 0
      %490 = vmatprep.subr.bf16.mxu0 0
      %491 = vmatpush1.bf16.xpose.msra.mxu0 0
      %492 = vmatprep.subr.bf16.mxu0 0
      %493 = vmatpush1.bf16.xpose.msra.mxu0 0
      %494 = vmatprep.subr.bf16.mxu0 0
      %495 = vmatpush1.bf16.xpose.msra.mxu0 0
      %496 = vmatprep.subr.bf16.mxu0 0
      %497 = vmatpush1.bf16.xpose.msra.mxu0 0
      %498 = vmatprep.subr.bf16.mxu0 0
      %499 = vmatpush1.bf16.xpose.msra.mxu0 0
      %500 = vmatprep.subr.bf16.mxu0 0
      %501 = vmatpush1.bf16.xpose.msra.mxu0 0
      %502 = vmatprep.subr.bf16.mxu0 0
      %503 = vmatpush1.bf16.xpose.msra.mxu0 0
      %504 = vmatprep.mubr.bf16.mxu0 0
      %505 = vmatmul.mubr.bf16.gmra.mrb[0].mxu0 %v467
      %v506 = vpop.f32.mrb[0].mxu0
      %v507 = vadd.f32 0.0, %v506
      %v508 = vpop.f32.mrb[0].mxu0
      %v509 = vpop.f32.mrb[0].mxu0
      %v510 = vpop.f32.mrb[0].mxu0
      %511 = vdwg.mxu0
      %v512 = vmul.f32 %v507, 0.35355338
      %v513 = vadd.f32 %v512, %v324
      %s514 = scalar_lea.vmem [#allocation2], 8
      %v515 = vld [vmem:[%s514] sm:$0xff]
      %v516 = vsel %vm325, %v513, -inf
      %517 = vmax.xlane.f32.xlu0 %v516
      %v518 = vpop.xlane.xlu0 %517
      %v519 = vmax.f32 %v515, %v518
      %v520 = vsub.f32 %v515, %v519
      %v521 = vmul.f32 %v520, 1.442695
      %v522 = vpow.pop %v521
      %524 = vset.pattern.permute.xlu0 0
      %525 = vperm.xlu0 %524, %v519
      %v526 = vpop.permute.xlu0 %525
      %v528 = vsub.f32 %v513, %v526
      %v529 = vmul.f32 %v528, 1.442695
      %v530 = vpow.pop %v529
      %s531 = scalar_lea.vmem [#allocation3], 8
      %v532 = vld [vmem:[%s531] sm:$0xff]
      %v533 = vmul.f32 %v522, %v532
      %v534 = vsel %vm325, %v530, 0.0
      %535 = vadd.xlane.f32.xlu0 %v534
      %v536 = vpop.xlane.xlu0 %535
      %v537 = vadd.f32 %v533, %v536
      %538 = vst.msk [vmem:[%s531] sm:$0xff] %vm396, %v537
      %s539 = scalar_lea.vmem [#allocation4], 8
      %v540 = vld [vmem:[%s539] sm:$0xff]
      %542 = vset.pattern.permute.xlu0 0
      %543 = vperm.xlu0 %542, %v522
      %v544 = vpop.permute.xlu0 %543
      %v546 = vmul.f32 %v544, %v540
      %v547 = vpack.c.bf16 %v530, %v530
      %v549 = vunpack.c.l.b16 %v307
      %v550 = vpack.c.b16 %v549, %v549
      %551 = vrot.lane.b32.xlu0 %v550, 120
      %v552 = vpop.permute.xlu0 %551
      %v554 = vsel %vm325, %v547, 0
      %v557 = vsel %vm409, %v552, 0
      %559 = vmatprep.subr.bf16.mxu0 0
      %560 = vmatpush1.bf16.msra.mxu0 %v557
      %561 = vmatprep.subr.bf16.mxu0 0
      %562 = vmatpush1.bf16.msra.mxu0 0
      %563 = vmatprep.subr.bf16.mxu0 0
      %564 = vmatpush1.bf16.msra.mxu0 0
      %565 = vmatprep.subr.bf16.mxu0 0
      %566 = vmatpush1.bf16.msra.mxu0 0
      %567 = vmatprep.subr.bf16.mxu0 0
      %568 = vmatpush1.bf16.msra.mxu0 0
      %569 = vmatprep.subr.bf16.mxu0 0
      %570 = vmatpush1.bf16.msra.mxu0 0
      %571 = vmatprep.subr.bf16.mxu0 0
      %572 = vmatpush1.bf16.msra.mxu0 0
      %573 = vmatprep.subr.bf16.mxu0 0
      %574 = vmatpush1.bf16.msra.mxu0 0
      %575 = vmatprep.subr.bf16.mxu0 0
      %576 = vmatpush1.bf16.msra.mxu0 0
      %577 = vmatprep.subr.bf16.mxu0 0
      %578 = vmatpush1.bf16.msra.mxu0 0
      %579 = vmatprep.subr.bf16.mxu0 0
      %580 = vmatpush1.bf16.msra.mxu0 0
      %581 = vmatprep.subr.bf16.mxu0 0
      %582 = vmatpush1.bf16.msra.mxu0 0
      %583 = vmatprep.subr.bf16.mxu0 0
      %584 = vmatpush1.bf16.msra.mxu0 0
      %585 = vmatprep.subr.bf16.mxu0 0
      %586 = vmatpush1.bf16.msra.mxu0 0
      %587 = vmatprep.subr.bf16.mxu0 0
      %588 = vmatpush1.bf16.msra.mxu0 0
      %589 = vmatprep.subr.bf16.mxu0 0
      %590 = vmatpush1.bf16.msra.mxu0 0
      %591 = vmatprep.mubr.bf16.mxu0 0
      %592 = vmatmul.mubr.bf16.gmra.mrb[0].mxu0 %v554
      %v593 = vpop.f32.mrb[0].mxu0
      %v594 = vadd.f32 0.0, %v593
      %v595 = vpop.f32.mrb[0].mxu0
      %v596 = vpop.f32.mrb[0].mxu0
      %v597 = vpop.f32.mrb[0].mxu0
      %598 = vdwg.mxu0
      %v599 = vadd.f32 %v546, %v594
      %600 = vst.msk [vmem:[%s539] sm:$0xff] %vm325, %v599
      %601 = vst.msk [vmem:[%s514] sm:$0xff] %vm396, %v519
      %602 = vrot.lane.b32.xlu0 %v458, 112
      %v603 = vpop.permute.xlu0 %602
      %604 = vrot.lane.b32.xlu0 %v463, 112
      %v605 = vpop.permute.xlu0 %604
      %v607 = vsel %vm325, %v603, 0
      %v610 = vsel %vm325, %v605, 0
      %612 = vmatprep.subr.bf16.mxu0 0
      %613 = vmatpush1.bf16.xpose.msra.mxu0 %v610
      %614 = vmatprep.subr.bf16.mxu0 0
      %615 = vmatpush1.bf16.xpose.msra.mxu0 0
      %616 = vmatprep.subr.bf16.mxu0 0
      %617 = vmatpush1.bf16.xpose.msra.mxu0 0
      %618 = vmatprep.subr.bf16.mxu0 0
      %619 = vmatpush1.bf16.xpose.msra.mxu0 0
      %620 = vmatprep.subr.bf16.mxu0 0
      %621 = vmatpush1.bf16.xpose.msra.mxu0 0
      %622 = vmatprep.subr.bf16.mxu0 0
      %623 = vmatpush1.bf16.xpose.msra.mxu0 0
      %624 = vmatprep.subr.bf16.mxu0 0
      %625 = vmatpush1.bf16.xpose.msra.mxu0 0
      %626 = vmatprep.subr.bf16.mxu0 0
      %627 = vmatpush1.bf16.xpose.msra.mxu0 0
      %628 = vmatprep.subr.bf16.mxu0 0
      %629 = vmatpush1.bf16.xpose.msra.mxu0 0
      %630 = vmatprep.subr.bf16.mxu0 0
      %631 = vmatpush1.bf16.xpose.msra.mxu0 0
      %632 = vmatprep.subr.bf16.mxu0 0
      %633 = vmatpush1.bf16.xpose.msra.mxu0 0
      %634 = vmatprep.subr.bf16.mxu0 0
      %635 = vmatpush1.bf16.xpose.msra.mxu0 0
      %636 = vmatprep.subr.bf16.mxu0 0
      %637 = vmatpush1.bf16.xpose.msra.mxu0 0
      %638 = vmatprep.subr.bf16.mxu0 0
      %639 = vmatpush1.bf16.xpose.msra.mxu0 0
      %640 = vmatprep.subr.bf16.mxu0 0
      %641 = vmatpush1.bf16.xpose.msra.mxu0 0
      %642 = vmatprep.subr.bf16.mxu0 0
      %643 = vmatpush1.bf16.xpose.msra.mxu0 0
      %644 = vmatprep.mubr.bf16.mxu0 0
      %645 = vmatmul.mubr.bf16.gmra.mrb[0].mxu0 %v607
      %v646 = vpop.f32.mrb[0].mxu0
      %v647 = vadd.f32 0.0, %v646
      %v648 = vpop.f32.mrb[0].mxu0
      %v649 = vpop.f32.mrb[0].mxu0
      %v650 = vpop.f32.mrb[0].mxu0
      %651 = vdwg.mxu0
      %v652 = vmul.f32 %v647, 0.35355338
      %v653 = vadd.f32 %v652, %v324
      %s654 = scalar_lea.vmem [#allocation2], 16
      %v655 = vld [vmem:[%s654] sm:$0xff]
      %v656 = vsel %vm325, %v653, -inf
      %657 = vmax.xlane.f32.xlu0 %v656
      %v658 = vpop.xlane.xlu0 %657
      %v659 = vmax.f32 %v655, %v658
      %v660 = vsub.f32 %v655, %v659
      %v661 = vmul.f32 %v660, 1.442695
      %v662 = vpow.pop %v661
      %664 = vset.pattern.permute.xlu0 0
      %665 = vperm.xlu0 %664, %v659
      %v666 = vpop.permute.xlu0 %665
      %v668 = vsub.f32 %v653, %v666
      %v669 = vmul.f32 %v668, 1.442695
      %v670 = vpow.pop %v669
      %s671 = scalar_lea.vmem [#allocation3], 16
      %v672 = vld [vmem:[%s671] sm:$0xff]
      %v673 = vmul.f32 %v662, %v672
      %v674 = vsel %vm325, %v670, 0.0
      %675 = vadd.xlane.f32.xlu0 %v674
      %v676 = vpop.xlane.xlu0 %675
      %v677 = vadd.f32 %v673, %v676
      %678 = vst.msk [vmem:[%s671] sm:$0xff] %vm396, %v677
      %s679 = scalar_lea.vmem [#allocation4], 16
      %v680 = vld [vmem:[%s679] sm:$0xff]
      %682 = vset.pattern.permute.xlu0 0
      %683 = vperm.xlu0 %682, %v662
      %v684 = vpop.permute.xlu0 %683
      %v686 = vmul.f32 %v684, %v680
      %v687 = vpack.c.bf16 %v670, %v670
      %688 = vrot.lane.b32.xlu0 %v550, 112
      %v689 = vpop.permute.xlu0 %688
      %v691 = vsel %vm325, %v687, 0
      %v694 = vsel %vm409, %v689, 0
      %696 = vmatprep.subr.bf16.mxu0 0
      %697 = vmatpush1.bf16.msra.mxu0 %v694
      %698 = vmatprep.subr.bf16.mxu0 0
      %699 = vmatpush1.bf16.msra.mxu0 0
      %700 = vmatprep.subr.bf16.mxu0 0
      %701 = vmatpush1.bf16.msra.mxu0 0
      %702 = vmatprep.subr.bf16.mxu0 0
      %703 = vmatpush1.bf16.msra.mxu0 0
      %704 = vmatprep.subr.bf16.mxu0 0
      %705 = vmatpush1.bf16.msra.mxu0 0
      %706 = vmatprep.subr.bf16.mxu0 0
      %707 = vmatpush1.bf16.msra.mxu0 0
      %708 = vmatprep.subr.bf16.mxu0 0
      %709 = vmatpush1.bf16.msra.mxu0 0
      %710 = vmatprep.subr.bf16.mxu0 0
      %711 = vmatpush1.bf16.msra.mxu0 0
      %712 = vmatprep.subr.bf16.mxu0 0
      %713 = vmatpush1.bf16.msra.mxu0 0
      %714 = vmatprep.subr.bf16.mxu0 0
      %715 = vmatpush1.bf16.msra.mxu0 0
      %716 = vmatprep.subr.bf16.mxu0 0
      %717 = vmatpush1.bf16.msra.mxu0 0
      %718 = vmatprep.subr.bf16.mxu0 0
      %719 = vmatpush1.bf16.msra.mxu0 0
      %720 = vmatprep.subr.bf16.mxu0 0
      %721 = vmatpush1.bf16.msra.mxu0 0
      %722 = vmatprep.subr.bf16.mxu0 0
      %723 = vmatpush1.bf16.msra.mxu0 0
      %724 = vmatprep.subr.bf16.mxu0 0
      %725 = vmatpush1.bf16.msra.mxu0 0
      %726 = vmatprep.subr.bf16.mxu0 0
      %727 = vmatpush1.bf16.msra.mxu0 0
      %728 = vmatprep.mubr.bf16.mxu0 0
      %729 = vmatmul.mubr.bf16.gmra.mrb[0].mxu0 %v691
      %v730 = vpop.f32.mrb[0].mxu0
      %v731 = vadd.f32 0.0, %v730
      %v732 = vpop.f32.mrb[0].mxu0
      %v733 = vpop.f32.mrb[0].mxu0
      %v734 = vpop.f32.mrb[0].mxu0
      %735 = vdwg.mxu0
      %v736 = vadd.f32 %v686, %v731
      %737 = vst.msk [vmem:[%s679] sm:$0xff] %vm325, %v736
      %738 = vst.msk [vmem:[%s654] sm:$0xff] %vm396, %v659
      %739 = vrot.lane.b32.xlu0 %v458, 104
      %v740 = vpop.permute.xlu0 %739
      %741 = vrot.lane.b32.xlu0 %v463, 104
      %v742 = vpop.permute.xlu0 %741
      %v744 = vsel %vm325, %v740, 0
      %v747 = vsel %vm325, %v742, 0
      %749 = vmatprep.subr.bf16.mxu0 0
      %750 = vmatpush1.bf16.xpose.msra.mxu0 %v747
      %751 = vmatprep.subr.bf16.mxu0 0
      %752 = vmatpush1.bf16.xpose.msra.mxu0 0
      %753 = vmatprep.subr.bf16.mxu0 0
      %754 = vmatpush1.bf16.xpose.msra.mxu0 0
      %755 = vmatprep.subr.bf16.mxu0 0
      %756 = vmatpush1.bf16.xpose.msra.mxu0 0
      %757 = vmatprep.subr.bf16.mxu0 0
      %758 = vmatpush1.bf16.xpose.msra.mxu0 0
      %759 = vmatprep.subr.bf16.mxu0 0
      %760 = vmatpush1.bf16.xpose.msra.mxu0 0
      %761 = vmatprep.subr.bf16.mxu0 0
      %762 = vmatpush1.bf16.xpose.msra.mxu0 0
      %763 = vmatprep.subr.bf16.mxu0 0
      %764 = vmatpush1.bf16.xpose.msra.mxu0 0
      %765 = vmatprep.subr.bf16.mxu0 0
      %766 = vmatpush1.bf16.xpose.msra.mxu0 0
      %767 = vmatprep.subr.bf16.mxu0 0
      %768 = vmatpush1.bf16.xpose.msra.mxu0 0
      %769 = vmatprep.subr.bf16.mxu0 0
      %770 = vmatpush1.bf16.xpose.msra.mxu0 0
      %771 = vmatprep.subr.bf16.mxu0 0
      %772 = vmatpush1.bf16.xpose.msra.mxu0 0
      %773 = vmatprep.subr.bf16.mxu0 0
      %774 = vmatpush1.bf16.xpose.msra.mxu0 0
      %775 = vmatprep.subr.bf16.mxu0 0
      %776 = vmatpush1.bf16.xpose.msra.mxu0 0
      %777 = vmatprep.subr.bf16.mxu0 0
      %778 = vmatpush1.bf16.xpose.msra.mxu0 0
      %779 = vmatprep.subr.bf16.mxu0 0
      %780 = vmatpush1.bf16.xpose.msra.mxu0 0
      %781 = vmatprep.mubr.bf16.mxu0 0
      %782 = vmatmul.mubr.bf16.gmra.mrb[0].mxu0 %v744
      %v783 = vpop.f32.mrb[0].mxu0
      %v784 = vadd.f32 0.0, %v783
      %v785 = vpop.f32.mrb[0].mxu0
      %v786 = vpop.f32.mrb[0].mxu0
      %v787 = vpop.f32.mrb[0].mxu0
      %788 = vdwg.mxu0
      %v789 = vmul.f32 %v784, 0.35355338
      %v790 = vadd.f32 %v789, %v324
      %s791 = scalar_lea.vmem [#allocation2], 24
      %v792 = vld [vmem:[%s791] sm:$0xff]
      %v793 = vsel %vm325, %v790, -inf
      %794 = vmax.xlane.f32.xlu0 %v793
      %v795 = vpop.xlane.xlu0 %794
      %v796 = vmax.f32 %v792, %v795
      %v797 = vsub.f32 %v792, %v796
      %v798 = vmul.f32 %v797, 1.442695
      %v799 = vpow.pop %v798
      %801 = vset.pattern.permute.xlu0 0
      %802 = vperm.xlu0 %801, %v796
      %v803 = vpop.permute.xlu0 %802
      %v805 = vsub.f32 %v790, %v803
      %v806 = vmul.f32 %v805, 1.442695
      %v807 = vpow.pop %v806
      %s808 = scalar_lea.vmem [#allocation3], 24
      %v809 = vld [vmem:[%s808] sm:$0xff]
      %v810 = vmul.f32 %v799, %v809
      %v811 = vsel %vm325, %v807, 0.0
      %812 = vadd.xlane.f32.xlu0 %v811
      %v813 = vpop.xlane.xlu0 %812
      %v814 = vadd.f32 %v810, %v813
      %815 = vst.msk [vmem:[%s808] sm:$0xff] %vm396, %v814
      %s816 = scalar_lea.vmem [#allocation4], 24
      %v817 = vld [vmem:[%s816] sm:$0xff]
      %819 = vset.pattern.permute.xlu0 0
      %820 = vperm.xlu0 %819, %v799
      %v821 = vpop.permute.xlu0 %820
      %v823 = vmul.f32 %v821, %v817
      %v824 = vpack.c.bf16 %v807, %v807
      %825 = vrot.lane.b32.xlu0 %v550, 104
      %v826 = vpop.permute.xlu0 %825
      %v828 = vsel %vm325, %v824, 0
      %v831 = vsel %vm409, %v826, 0
      %833 = vmatprep.subr.bf16.mxu0 0
      %834 = vmatpush1.bf16.msra.mxu0 %v831
      %835 = vmatprep.subr.bf16.mxu0 0
      %836 = vmatpush1.bf16.msra.mxu0 0
      %837 = vmatprep.subr.bf16.mxu0 0
      %838 = vmatpush1.bf16.msra.mxu0 0
      %839 = vmatprep.subr.bf16.mxu0 0
      %840 = vmatpush1.bf16.msra.mxu0 0
      %841 = vmatprep.subr.bf16.mxu0 0
      %842 = vmatpush1.bf16.msra.mxu0 0
      %843 = vmatprep.subr.bf16.mxu0 0
      %844 = vmatpush1.bf16.msra.mxu0 0
      %845 = vmatprep.subr.bf16.mxu0 0
      %846 = vmatpush1.bf16.msra.mxu0 0
      %847 = vmatprep.subr.bf16.mxu0 0
      %848 = vmatpush1.bf16.msra.mxu0 0
      %849 = vmatprep.subr.bf16.mxu0 0
      %850 = vmatpush1.bf16.msra.mxu0 0
      %851 = vmatprep.subr.bf16.mxu0 0
      %852 = vmatpush1.bf16.msra.mxu0 0
      %853 = vmatprep.subr.bf16.mxu0 0
      %854 = vmatpush1.bf16.msra.mxu0 0
      %855 = vmatprep.subr.bf16.mxu0 0
      %856 = vmatpush1.bf16.msra.mxu0 0
      %857 = vmatprep.subr.bf16.mxu0 0
      %858 = vmatpush1.bf16.msra.mxu0 0
      %859 = vmatprep.subr.bf16.mxu0 0
      %860 = vmatpush1.bf16.msra.mxu0 0
      %861 = vmatprep.subr.bf16.mxu0 0
      %862 = vmatpush1.bf16.msra.mxu0 0
      %863 = vmatprep.subr.bf16.mxu0 0
      %864 = vmatpush1.bf16.msra.mxu0 0
      %865 = vmatprep.mubr.bf16.mxu0 0
      %866 = vmatmul.mubr.bf16.gmra.mrb[0].mxu0 %v828
      %v867 = vpop.f32.mrb[0].mxu0
      %v868 = vadd.f32 0.0, %v867
      %v869 = vpop.f32.mrb[0].mxu0
      %v870 = vpop.f32.mrb[0].mxu0
      %v871 = vpop.f32.mrb[0].mxu0
      %872 = vdwg.mxu0
      %v873 = vadd.f32 %v823, %v868
      %874 = vst.msk [vmem:[%s816] sm:$0xff] %vm325, %v873
      %875 = vst.msk [vmem:[%s791] sm:$0xff] %vm396, %v796
      // Predicated region
      $region41: #{transformer_forward.48} parent=35 // pred_check
        %p876 = pneg %p287
      $region42: #{transformer_forward.48} parent=35 // pred_check_branch
        %878 = sbr.rel (%p876) target = $region44
      $region43: #{transformer_forward.48} parent=35 // pred_region
        %v879 = vld [vmem:[#allocation4] sm:$0xff]
        %v880 = vld [vmem:[#allocation3] sm:$0xff]
        %v881 = vrcp.pop %v880
        %883 = vset.pattern.permute.xlu0 0
        %884 = vperm.xlu0 %883, %v881
        %v885 = vpop.permute.xlu0 %884
        %v887 = vmul.f32 %v879, %v885
        %v888 = vld [vmem:[%s539] sm:$0xff]
        %v889 = vld [vmem:[%s531] sm:$0xff]
        %v890 = vrcp.pop %v889
        %892 = vset.pattern.permute.xlu0 0
        %893 = vperm.xlu0 %892, %v890
        %v894 = vpop.permute.xlu0 %893
        %v896 = vmul.f32 %v888, %v894
        %v897 = vld [vmem:[%s679] sm:$0xff]
        %v898 = vld [vmem:[%s671] sm:$0xff]
        %v899 = vrcp.pop %v898
        %901 = vset.pattern.permute.xlu0 0
        %902 = vperm.xlu0 %901, %v899
        %v903 = vpop.permute.xlu0 %902
        %v905 = vmul.f32 %v897, %v903
        %v906 = vld [vmem:[%s816] sm:$0xff]
        %v907 = vld [vmem:[%s808] sm:$0xff]
        %v908 = vrcp.pop %v907
        %910 = vset.pattern.permute.xlu0 0
        %911 = vperm.xlu0 %910, %v908
        %v912 = vpop.permute.xlu0 %911
        %v914 = vmul.f32 %v906, %v912
        %916 = vrot.lane.b32.xlu0 %v896, 8
        %v917 = vpop.permute.xlu0 %916
        %920 = vrot.lane.b32.xlu0 %v905, 16
        %v921 = vpop.permute.xlu0 %920
        %924 = vrot.lane.b32.xlu0 %v914, 24
        %v925 = vpop.permute.xlu0 %924
        %v927 = vsel %vm325, %v887, %v917
        %vm928 = vcmask 130048
        %v929 = vsel %vm928, %v927, %v921
        %vm930 = vcmask 195584
        %v931 = vsel %vm930, %v929, %v925
        %v932 = vpack.c.bf16 %v931, %v931
        %vm933 = vcmask 257024
        %934 = vst.msk [vmem:[%s285] sm:$0xf] %vm933, %v932
      $region44: #{transformer_forward.48} parent=35 // pred_fallthru
        _
      %p935 = scmp.lt.s32.totalorder %s19, 1
      %s936 = scalar_select %p935, %s19, 1
      %s937 = smul.addr %s936, 4
      %s938 = scalar_lea.vmem %s4, %s937
      // Predicated region
      $region45: #{transformer_forward.48} parent=35 // pred_check
        %p939 = pneg %p155
      $region46: #{transformer_forward.48} parent=35 // pred_check_branch
        %941 = sbr.rel (%p939) target = $region48
      $region47: #{transformer_forward.48} parent=35 // pred_region
        _
      $region48: #{transformer_forward.48} parent=35 // pred_fallthru
        _
    $region36: #{transformer_forward.48} parent=5 // pred_fallthru
      _
    %p942 = scmp.le.s32.totalorder 2, %s10
    // Predicated region
    $region49: #{transformer_forward.48} parent=5 // pred_check
      %p943 = pneg %p942
    $region50: #{transformer_forward.48} parent=5 // pred_check_branch
      %945 = sbr.rel (%p943) target = $region52
    $region51: #{transformer_forward.48} parent=5 // pred_region
      %s946 = ssub.s32 %s10, 2
      // Predicated region
      $region53: #{transformer_forward.48} parent=51 // pred_check
        %p947 = pneg %p161
      $region54: #{transformer_forward.48} parent=51 // pred_check_branch
        %949 = sbr.rel (%p947) target = $region56
      $region55: #{transformer_forward.48} parent=51 // pred_region
        %p950 = scmp.lt.s32.totalorder %s21, 1
        %s951 = scalar_select %p950, %s21, 1
        %s952 = smul.addr %s951, 4
        %s953 = scalar_lea.vmem %s4, %s952
      $region56: #{transformer_forward.48} parent=51 // pred_fallthru
        _
    $region52: #{transformer_forward.48} parent=5 // pred_fallthru
      _
  $region6: #{transformer_forward.48} parent=0 // loop_footer
    %s14 = sadd.s32 1, %s10
  $region7: #{transformer_forward.48} parent=0 // loop_footer_branch
    %9 = sbr.rel target = $region3
  $region8: #{transformer_forward.48} parent=0 // loop_exit
    _

// kernel: transformer_forward.69
$region0: #{transformer_forward.69}
  #allocation0 [shape = 'u32[]', space=smem, size = 0x4, offset = 0x4, fixed_abs, tag = 'smem constant byte address 0x4 - core index']
  #allocation1 [shape = 'u32[144,128]{1,0:T(1,128)}', space=vmem, size = 0x12000, scoped, tag = 'internal scratch']
  #allocation2 [shape = 'f32[16,16]{1,0:T(8,128)}', space=vmem, size = 0x2000, scoped, tag = 'scratch operand']
  %s0 = inlined_call_operand.vmem [shape: bf16[16,32], index: 0, kind: input, shape index: {}]
  %s1 = inlined_call_operand.vmem [shape: bf16[32,16], index: 1, kind: input, shape index: {}]
  %s2 = inlined_call_operand.vmem [shape: f32[1,16], index: 2, kind: input, shape index: {}]
  %s3 = inlined_call_operand.hbm [shape: f32[16,16], index: 3, kind: output, shape index: {}]
  %s4 = sld [smem:[#allocation0]]
  $region30: #{transformer_forward.69} parent=0
    _
  %s6 = ssub.s32 1, %s4
  %s7 = scalar_select 0, %s6, %s4
  $region1: #{transformer_forward.69} parent=0
    #allocation3 [shape = 'u8[8192]{0}', space=vmem, size = 0x2000, scoped, tag = 'output window, operand 0, single buffered']
    #allocation4 [shape = 's32[1]{0}', space=sflag, size = 0x4, scoped, tag = 'scoped memory for transformer_forward.69']
    %8 = vsyncpa [#allocation4], 0
    // Predicated region
    $region2: #{transformer_forward.69} parent=1 // pred_check
      _
    $region3: #{transformer_forward.69} parent=1 // pred_check_branch
      %10 = sbr.rel (0) target = $region5
    $region4: #{transformer_forward.69} parent=1 // pred_region
      _
    $region5: #{transformer_forward.69} parent=1 // pred_fallthru
      _
    // Predicated region
    $region6: #{transformer_forward.69} parent=1 // pred_check
      _
    $region7: #{transformer_forward.69} parent=1 // pred_check_branch
      %12 = sbr.rel (0) target = $region9
    $region8: #{transformer_forward.69} parent=1 // pred_region
      _
    $region9: #{transformer_forward.69} parent=1 // pred_fallthru
      _
    // Predicated region
    $region10: #{transformer_forward.69} parent=1 // pred_check
      _
    $region11: #{transformer_forward.69} parent=1 // pred_check_branch
      %14 = sbr.rel (0) target = $region13
    $region12: #{transformer_forward.69} parent=1 // pred_region
      _
    $region13: #{transformer_forward.69} parent=1 // pred_fallthru
      _
    %p16 = scmp.eq.s32.totalorder 0, 0
    // Predicated region
    $region14: #{transformer_forward.69} parent=1 // pred_check
      %p17 = pneg %p16
    $region15: #{transformer_forward.69} parent=1 // pred_check_branch
      %19 = sbr.rel (%p17) target = $region17
    $region16: #{transformer_forward.69} parent=1 // pred_region
      %vm20 = vcmask 130048
      %21 = vst.msk [vmem:[#allocation2] sm:$0xff] %vm20, 0.0
      %22 = vst.msk [vmem:[#allocation2 + $0x8] sm:$0xff] %vm20, 0.0
    $region17: #{transformer_forward.69} parent=1 // pred_fallthru
      _
    %v23 = vld [vmem:[#allocation2] sm:$0xff]
    %v24 = vld [vmem:[#allocation2 + $0x8] sm:$0xff]
    %v25 = vld [vmem:[%s0] sm:$0xf]
    %v26 = vld [vmem:[%s0 + $0x4] sm:$0xf]
    %v27 = vld [vmem:[%s1] sm:$0xf]
    %v28 = vld [vmem:[%s1 + $0x4] sm:$0xf]
    %v29 = vld [vmem:[%s1 + $0x8] sm:$0xf]
    %v30 = vld [vmem:[%s1 + $0xc] sm:$0xf]
    %v33 = vunpack.c.l.b16 %v25
    %v34 = vunpack.c.l.b16 %v26
    %v35 = vpack.c.b16 %v34, %v33
    %v40 = vunpack.c.l.b16 %v27
    %v41 = vunpack.c.l.b16 %v28
    %v42 = vunpack.c.l.b16 %v29
    %v43 = vunpack.c.l.b16 %v30
    %v44 = vpack.c.b16 %v41, %v40
    %v45 = vpack.c.b16 %v43, %v42
    %vm48 = vcmask 261120
    %v50 = vsel %vm48, %v35, 0
    %52 = vmatprep.subr.bf16.mxu0 0
    %53 = vmatpush1.bf16.msra.mxu0 %v44
    %54 = vmatprep.subr.bf16.mxu0 0
    %55 = vmatpush1.bf16.msra.mxu0 %v45
    %56 = vmatprep.subr.bf16.mxu0 0
    %57 = vmatpush1.bf16.msra.mxu0 0
    %58 = vmatprep.subr.bf16.mxu0 0
    %59 = vmatpush1.bf16.msra.mxu0 0
    %60 = vmatprep.subr.bf16.mxu0 0
    %61 = vmatpush1.bf16.msra.mxu0 0
    %62 = vmatprep.subr.bf16.mxu0 0
    %63 = vmatpush1.bf16.msra.mxu0 0
    %64 = vmatprep.subr.bf16.mxu0 0
    %65 = vmatpush1.bf16.msra.mxu0 0
    %66 = vmatprep.subr.bf16.mxu0 0
    %67 = vmatpush1.bf16.msra.mxu0 0
    %68 = vmatprep.subr.bf16.mxu0 0
    %69 = vmatpush1.bf16.msra.mxu0 0
    %70 = vmatprep.subr.bf16.mxu0 0
    %71 = vmatpush1.bf16.msra.mxu0 0
    %72 = vmatprep.subr.bf16.mxu0 0
    %73 = vmatpush1.bf16.msra.mxu0 0
    %74 = vmatprep.subr.bf16.mxu0 0
    %75 = vmatpush1.bf16.msra.mxu0 0
    %76 = vmatprep.subr.bf16.mxu0 0
    %77 = vmatpush1.bf16.msra.mxu0 0
    %78 = vmatprep.subr.bf16.mxu0 0
    %79 = vmatpush1.bf16.msra.mxu0 0
    %80 = vmatprep.subr.bf16.mxu0 0
    %81 = vmatpush1.bf16.msra.mxu0 0
    %82 = vmatprep.subr.bf16.mxu0 0
    %83 = vmatpush1.bf16.msra.mxu0 0
    %84 = vmatprep.mubr.bf16.mxu0 0
    %85 = vmatmul.mubr.bf16.gmra.mrb[0].mxu0 %v50
    %v86 = vpop.f32.mrb[0].mxu0
    %v87 = vadd.f32 0.0, %v86
    %v88 = vpop.f32.mrb[0].mxu0
    %v89 = vpop.f32.mrb[0].mxu0
    %v90 = vadd.f32 0.0, %v89
    %v91 = vpop.f32.mrb[0].mxu0
    %92 = vdwg.mxu0
    %v93 = vadd.f32 %v23, %v87
    %v94 = vadd.f32 %v24, %v90
    %vm95 = vcmask 130048
    %96 = vst.msk [vmem:[#allocation2] sm:$0xff] %vm95, %v93
    %97 = vst.msk [vmem:[#allocation2 + $0x8] sm:$0xff] %vm95, %v94
    // Predicated region
    $region18: #{transformer_forward.69} parent=1 // pred_check
      %p98 = pneg %p16
    $region19: #{transformer_forward.69} parent=1 // pred_check_branch
      %100 = sbr.rel (%p98) target = $region21
    $region20: #{transformer_forward.69} parent=1 // pred_region
      %v101 = vld [vmem:[#allocation2] sm:$0xff]
      %v102 = vld [vmem:[#allocation2 + $0x8] sm:$0xff]
      %v103 = vld [vmem:[%s2] sm:$0x1]
      %v105 = vlaneseq
      %v106 = vshrl.u32 %v105, 7
      %v107 = vsub.s32 0, %v106
      %v108 = vrot.slane %v103, %v107
      %v110 = vadd.f32 %v101, %v108
      %v111 = vadd.f32 %v102, %v108
      %112 = vst.msk [vmem:[#allocation3] sm:$0xff] %vm95, %v110
      %113 = vst.msk [vmem:[#allocation3 + $0x8] sm:$0xff] %vm95, %v111
    $region21: #{transformer_forward.69} parent=1 // pred_fallthru
      _
    // Predicated region
    $region22: #{transformer_forward.69} parent=1 // pred_check
      _
    $region23: #{transformer_forward.69} parent=1 // pred_check_branch
      %115 = sbr.rel (0) target = $region25
    $region24: #{transformer_forward.69} parent=1 // pred_region
      %s117 = ssub.s32 256, 256
      %118 = vsyncadd [#allocation4], %s117
      %s119 = sshll.u32 [#allocation3], 4
      %s120 = int_to_ptr.vmem [resolvable:$true] %s119
      %125 = dma.vmem_to_hbm [thread:$0]  %s120, 256, %s3, [#allocation4], 128, 128, 8
    $region25: #{transformer_forward.69} parent=1 // pred_fallthru
      _
    // Predicated region
    $region26: #{transformer_forward.69} parent=1 // pred_check
      _
    $region27: #{transformer_forward.69} parent=1 // pred_check_branch
      %127 = sbr.rel (0) target = $region29
    $region28: #{transformer_forward.69} parent=1 // pred_region
      %128 = dma.done [#allocation4], 256
    $region29: #{transformer_forward.69} parent=1 // pred_fallthru
      _
    %129 = vsyncpa [#allocation4], 1

</llo_original>
